<compile_context>
chip_gen: v7x
topology: tpu7x:2x2x1
jax: 0.10.0
libtpu: 0.0.40
codegen_flags: <defaults>
</compile_context>

<pallas_src>
import jax
import jax.numpy as jnp
from jax.experimental import pallas as pl
from jax.experimental.pallas import tpu as pltpu

EPS = 1e-5


def fused_mul_conv_bn_kernel(x_ref, s_ref, w_ref, g_ref, b_ref, o_ref):
    # x_ref: [Cin, M]    bf16   (M = H*W spatial positions, N == 1)
    # s_ref: [Cin, 1]    bf16   per-channel scale (the broadcast x300)
    # w_ref: [Cout, Cin] bf16   1x1 conv weight
    # g_ref, b_ref: [Cout, 1] f32 BN affine params
    # o_ref: [Cout, M]   f32
    xs = x_ref[...] * s_ref[...]                       # broadcast mul (VPU), bf16
    # 1x1 conv == matmul on the MXU: [Cout,Cin] @ [Cin,M] -> [Cout,M], f32 acc.
    y = jnp.dot(w_ref[...], xs, preferred_element_type=jnp.float32)

    # BatchNorm2d (training mode): per-channel batch stats over the M positions.
    m = y.shape[1]
    inv_m = 1.0 / m
    mean = jnp.sum(y, axis=1, keepdims=True) * inv_m                # [Cout,1]
    diff = y - mean
    var = jnp.sum(diff * diff, axis=1, keepdims=True) * inv_m       # biased var
    inv_std = jax.lax.rsqrt(var + EPS)                              # EUP

    # Fused affine:  gamma*(y-mean)*inv_std + beta  ==  y*a + b
    a = g_ref[...] * inv_std
    b = b_ref[...] - mean * a
    o_ref[...] = (y * a + b).astype(o_ref.dtype)


@jax.jit
def fused_forward(x295, x300, conv_w, gamma, beta):
    """x295: [1,Cin,H,W], x300: [1,Cin,1,1], conv_w: [Cout,Cin,1,1]."""
    N, Cin, H, W = x295.shape
    assert N == 1, "layout exploits N=1 (pure reshapes in/out, no HBM transposes)"
    Cout = conv_w.shape[0]
    M = H * W

    # All pure reshapes (no HBM transposes). Matmul operands in bf16, BN params f32.
    x2d = x295.reshape(Cin, M).astype(jnp.bfloat16)
    s2d = x300.reshape(Cin, 1).astype(jnp.bfloat16)
    w2d = conv_w.reshape(Cout, Cin).astype(jnp.bfloat16)
    g2d = gamma.reshape(Cout, 1).astype(jnp.float32)
    b2d = beta.reshape(Cout, 1).astype(jnp.float32)

    bytes_in = (x2d.size + s2d.size + w2d.size) * 2 + (g2d.size + b2d.size) * 4
    bytes_out = Cout * M * 4

    out2d = pl.pallas_call(
        fused_mul_conv_bn_kernel,
        out_shape=jax.ShapeDtypeStruct((Cout, M), jnp.float32),
        grid_spec=pltpu.PrefetchScalarGridSpec(
            num_scalar_prefetch=0,
            grid=(1,),
            in_specs=[
                pl.BlockSpec((Cin, M), lambda i: (0, 0)),
                pl.BlockSpec((Cin, 1), lambda i: (0, 0)),
                pl.BlockSpec((Cout, Cin), lambda i: (0, 0)),
                pl.BlockSpec((Cout, 1), lambda i: (0, 0)),
                pl.BlockSpec((Cout, 1), lambda i: (0, 0)),
            ],
            out_specs=pl.BlockSpec((Cout, M), lambda i: (0, 0)),
        ),
        compiler_params=pltpu.CompilerParams(
            dimension_semantics=("arbitrary",)),
        cost_estimate=pl.CostEstimate(
            flops=2 * Cout * Cin * M,
            transcendentals=Cout,
            bytes_accessed=bytes_in + bytes_out),
    )(x2d, s2d, w2d, g2d, b2d)

    # [Cout, M] -> [1, Cout, H, W] is a free reshape (no transpose).
    return out2d.reshape(N, Cout, H, W)


if __name__ == "__main__":
    key = jax.random.PRNGKey(0)
    k1, k2, k3, k4, k5 = jax.random.split(key, 5)

    N, Cin, Cout, H, W = 1, 1152, 192, 7, 7

    x295 = jax.random.normal(k1, (N, Cin, H, W), dtype=jnp.float32)
    x300 = jax.random.normal(k2, (N, Cin, 1, 1), dtype=jnp.float32)

    # Conv2d weight (kaiming-ish scale for a 1x1 kernel); non-trivial BN affine.
    conv_w = jax.random.normal(k3, (Cout, Cin, 1, 1), dtype=jnp.float32) * (
        1.0 / jnp.sqrt(Cin))
    gamma = 1.0 + 0.1 * jax.random.normal(k4, (Cout,), dtype=jnp.float32)
    beta = 0.1 * jax.random.normal(k5, (Cout,), dtype=jnp.float32)

    out = fused_forward(x295, x300, conv_w, gamma, beta)
    jax.block_until_ready(out)

    # Pure-JAX reference with the SAME bf16 operand quantization + f32 accumulation,
    # so the comparison stays tight while matching the kernel's numerics.
    xs_bf = x295.astype(jnp.bfloat16) * x300.astype(jnp.bfloat16)
    conv_ref = jax.lax.conv_general_dilated(
        xs_bf, conv_w.astype(jnp.bfloat16),
        window_strides=(1, 1), padding="VALID",
        dimension_numbers=("NCHW", "OIHW", "NCHW"),
        preferred_element_type=jnp.float32)
    mean = jnp.mean(conv_ref, axis=(0, 2, 3), keepdims=True)
    var = jnp.var(conv_ref, axis=(0, 2, 3), keepdims=True)   # biased, matches training BN
    ref_bn = (conv_ref - mean) * jax.lax.rsqrt(var + EPS) * gamma.reshape(
        1, Cout, 1, 1) + beta.reshape(1, Cout, 1, 1)

    assert out.shape == (N, Cout, H, W)
    assert jnp.allclose(out, ref_bn, atol=5e-3, rtol=5e-3), (
        float(jnp.max(jnp.abs(out - ref_bn))))

    print("KERNEL_OK")
</pallas_src>

<mosaic_0001>
module attributes {stable_mosaic.version = 11 : i64} {
  func.func @fused_mul_conv_bn_kernel(%arg0: i32, %arg1: memref<1152x49xbf16, #tpu.memory_space<vmem>>, %arg2: memref<1152x1xbf16, #tpu.memory_space<vmem>>, %arg3: memref<192x1152xbf16, #tpu.memory_space<vmem>>, %arg4: memref<192x1xf32, #tpu.memory_space<vmem>>, %arg5: memref<192x1xf32, #tpu.memory_space<vmem>>, %arg6: memref<192x49xf32, #tpu.memory_space<vmem>>) attributes {dimension_semantics = [#tpu.dimension_semantics<arbitrary>], iteration_bounds = array<i64: 1>, scalar_prefetch = 0 : i64, scratch_operands = 0 : i64, tpu.core_type = #tpu.core_type<tc>, window_params = [{pipeline_mode = #tpu.pipeline_mode<synchronous>, transform_indices = @transform_0, window_bounds = array<i64: 1152, 49>}, {pipeline_mode = #tpu.pipeline_mode<synchronous>, transform_indices = @transform_1, window_bounds = array<i64: 1152, 1>}, {pipeline_mode = #tpu.pipeline_mode<synchronous>, transform_indices = @transform_2, window_bounds = array<i64: 192, 1152>}, {pipeline_mode = #tpu.pipeline_mode<synchronous>, transform_indices = @transform_3, window_bounds = array<i64: 192, 1>}, {pipeline_mode = #tpu.pipeline_mode<synchronous>, transform_indices = @transform_4, window_bounds = array<i64: 192, 1>}, {pipeline_mode = #tpu.pipeline_mode<synchronous>, transform_indices = @transform_5, window_bounds = array<i64: 192, 49>}]} {
    %c0 = arith.constant 0 : index
    %c0_0 = arith.constant 0 : index
    %0 = vector.load %arg1[%c0, %c0_0] : memref<1152x49xbf16, #tpu.memory_space<vmem>>, vector<1152x49xbf16>
    %c0_1 = arith.constant 0 : index
    %c0_2 = arith.constant 0 : index
    %1 = vector.load %arg2[%c0_1, %c0_2] : memref<1152x1xbf16, #tpu.memory_space<vmem>>, vector<1152x1xbf16>
    %2 = vector.broadcast %1 : vector<1152x1xbf16> to vector<1152x49xbf16>
    %3 = arith.mulf %0, %2 : vector<1152x49xbf16>
    %c0_3 = arith.constant 0 : index
    %c0_4 = arith.constant 0 : index
    %4 = vector.load %arg3[%c0_3, %c0_4] : memref<192x1152xbf16, #tpu.memory_space<vmem>>, vector<192x1152xbf16>
    %cst = arith.constant dense<0.000000e+00> : vector<192x49xf32>
    %5 = tpu.matmul %4, %3, %cst {dimension_numbers = #tpu.dot_dimension_numbers<[1], [0], [0], [1], [0, 0, 1, 1], [], []>} : vector<192x1152xbf16>, vector<1152x49xbf16>, vector<192x49xf32> -> vector<192x49xf32>
    %cst_5 = arith.constant dense<0.000000e+00> : vector<192xf32>
    %6 = vector.multi_reduction <add>, %5, %cst_5 [1] : vector<192x49xf32> to vector<192xf32>
    %7 = vector.shape_cast %6 : vector<192xf32> to vector<192x1xf32>
    %cst_6 = arith.constant 0.0204081628 : f32
    %8 = vector.broadcast %cst_6 : f32 to vector<192x1xf32>
    %9 = arith.mulf %7, %8 : vector<192x1xf32>
    %10 = vector.broadcast %9 : vector<192x1xf32> to vector<192x49xf32>
    %11 = arith.subf %5, %10 : vector<192x49xf32>
    %12 = arith.mulf %11, %11 : vector<192x49xf32>
    %cst_7 = arith.constant dense<0.000000e+00> : vector<192xf32>
    %13 = vector.multi_reduction <add>, %12, %cst_7 [1] : vector<192x49xf32> to vector<192xf32>
    %14 = vector.shape_cast %13 : vector<192xf32> to vector<192x1xf32>
    %cst_8 = arith.constant 0.0204081628 : f32
    %15 = vector.broadcast %cst_8 : f32 to vector<192x1xf32>
    %16 = arith.mulf %14, %15 : vector<192x1xf32>
    %cst_9 = arith.constant 9.99999974E-6 : f32
    %17 = vector.broadcast %cst_9 : f32 to vector<192x1xf32>
    %18 = arith.addf %16, %17 : vector<192x1xf32>
    %19 = math.rsqrt %18 : vector<192x1xf32>
    %c0_10 = arith.constant 0 : index
    %c0_11 = arith.constant 0 : index
    %20 = vector.load %arg4[%c0_10, %c0_11] : memref<192x1xf32, #tpu.memory_space<vmem>>, vector<192x1xf32>
    %21 = arith.mulf %20, %19 : vector<192x1xf32>
    %c0_12 = arith.constant 0 : index
    %c0_13 = arith.constant 0 : index
    %22 = vector.load %arg5[%c0_12, %c0_13] : memref<192x1xf32, #tpu.memory_space<vmem>>, vector<192x1xf32>
    %23 = arith.mulf %9, %21 : vector<192x1xf32>
    %24 = arith.subf %22, %23 : vector<192x1xf32>
    %25 = vector.broadcast %21 : vector<192x1xf32> to vector<192x49xf32>
    %26 = arith.mulf %5, %25 : vector<192x49xf32>
    %27 = vector.broadcast %24 : vector<192x1xf32> to vector<192x49xf32>
    %28 = arith.addf %26, %27 : vector<192x49xf32>
    %c0_14 = arith.constant 0 : index
    %c0_15 = arith.constant 0 : index
    %29 = vector.load %arg6[%c0_14, %c0_15] : memref<192x49xf32, #tpu.memory_space<vmem>>, vector<192x49xf32>
    tpu.vector_store %arg6[%c0_14, %c0_15], %28 {strides = array<i32>} : memref<192x49xf32, #tpu.memory_space<vmem>>, vector<192x49xf32>,
    return
  }
  func.func @transform_0(%arg0: i32) -> (i32, i32) {
    %c0_i32 = arith.constant 0 : i32
    %c0_i32_0 = arith.constant 0 : i32
    %c0_i32_1 = arith.constant 0 : i32
    return %c0_i32, %c0_i32_0 : i32, i32
  }
  func.func @transform_1(%arg0: i32) -> (i32, i32) {
    %c0_i32 = arith.constant 0 : i32
    %c0_i32_0 = arith.constant 0 : i32
    %c0_i32_1 = arith.constant 0 : i32
    return %c0_i32, %c0_i32_0 : i32, i32
  }
  func.func @transform_2(%arg0: i32) -> (i32, i32) {
    %c0_i32 = arith.constant 0 : i32
    %c0_i32_0 = arith.constant 0 : i32
    %c0_i32_1 = arith.constant 0 : i32
    return %c0_i32, %c0_i32_0 : i32, i32
  }
  func.func @transform_3(%arg0: i32) -> (i32, i32) {
    %c0_i32 = arith.constant 0 : i32
    %c0_i32_0 = arith.constant 0 : i32
    %c0_i32_1 = arith.constant 0 : i32
    return %c0_i32, %c0_i32_0 : i32, i32
  }
  func.func @transform_4(%arg0: i32) -> (i32, i32) {
    %c0_i32 = arith.constant 0 : i32
    %c0_i32_0 = arith.constant 0 : i32
    %c0_i32_1 = arith.constant 0 : i32
    return %c0_i32, %c0_i32_0 : i32, i32
  }
  func.func @transform_5(%arg0: i32) -> (i32, i32) {
    %c0_i32 = arith.constant 0 : i32
    %c0_i32_0 = arith.constant 0 : i32
    %c0_i32_1 = arith.constant 0 : i32
    return %c0_i32, %c0_i32_0 : i32, i32
  }
}

</mosaic_0001>

<llo_original>
// kernel: fused_forward.1
$region0: #{fused_forward.1}
  #allocation0 [shape = 'u32[]', space=smem, size = 0x4, offset = 0x4, fixed_abs, tag = 'smem constant byte address 0x4 - core index']
  #allocation1 [shape = 'u32[144,128]{1,0:T(1,128)}', space=vmem, size = 0x12000, scoped, tag = 'internal scratch']
  %s0 = inlined_call_operand.vmem [shape: bf16[1152,49], index: 0, kind: input, shape index: {}]
  %s1 = inlined_call_operand.vmem [shape: bf16[1152,1], index: 1, kind: input, shape index: {}]
  %s2 = inlined_call_operand.vmem [shape: bf16[192,1152], index: 2, kind: input, shape index: {}]
  %s3 = inlined_call_operand.vmem [shape: f32[192,1], index: 3, kind: input, shape index: {}]
  %s4 = inlined_call_operand.vmem [shape: f32[192,1], index: 4, kind: input, shape index: {}]
  %s5 = inlined_call_operand.vmem [shape: f32[192,49], index: 5, kind: output, shape index: {}]
  %s6 = sld [smem:[#allocation0]]
  $region30: #{fused_forward.1} parent=0
    _
  %s8 = ssub.s32 1, %s6
  %s9 = scalar_select 0, %s8, %s6
  // Predicated region
  $region2: #{fused_forward.1} parent=0 // pred_check
    _
  $region3: #{fused_forward.1} parent=0 // pred_check_branch
    %11 = sbr.rel (0) target = $region5
  $region4: #{fused_forward.1} parent=0 // pred_region
    _
  $region5: #{fused_forward.1} parent=0 // pred_fallthru
    _
  // Predicated region
  $region6: #{fused_forward.1} parent=0 // pred_check
    _
  $region7: #{fused_forward.1} parent=0 // pred_check_branch
    %13 = sbr.rel (0) target = $region9
  $region8: #{fused_forward.1} parent=0 // pred_region
    _
  $region9: #{fused_forward.1} parent=0 // pred_fallthru
    _
  // Predicated region
  $region10: #{fused_forward.1} parent=0 // pred_check
    _
  $region11: #{fused_forward.1} parent=0 // pred_check_branch
    %15 = sbr.rel (0) target = $region13
  $region12: #{fused_forward.1} parent=0 // pred_region
    _
  $region13: #{fused_forward.1} parent=0 // pred_fallthru
    _
  // Predicated region
  $region14: #{fused_forward.1} parent=0 // pred_check
    _
  $region15: #{fused_forward.1} parent=0 // pred_check_branch
    %17 = sbr.rel (0) target = $region17
  $region16: #{fused_forward.1} parent=0 // pred_region
    _
  $region17: #{fused_forward.1} parent=0 // pred_fallthru
    _
  // Predicated region
  $region18: #{fused_forward.1} parent=0 // pred_check
    _
  $region19: #{fused_forward.1} parent=0 // pred_check_branch
    %19 = sbr.rel (0) target = $region21
  $region20: #{fused_forward.1} parent=0 // pred_region
    _
  $region21: #{fused_forward.1} parent=0 // pred_fallthru
    _
  %v21 = vld [vmem:[%s0] sm:$0xf]
  %v22 = vld [vmem:[%s0 + $0x4] sm:$0xf]
  %v23 = vld [vmem:[%s0 + $0x8] sm:$0xf]
  %v24 = vld [vmem:[%s0 + $0xc] sm:$0xf]
  %v25 = vld [vmem:[%s0 + $0x10] sm:$0xf]
  %v26 = vld [vmem:[%s0 + $0x14] sm:$0xf]
  %v27 = vld [vmem:[%s0 + $0x18] sm:$0xf]
  %v28 = vld [vmem:[%s0 + $0x1c] sm:$0xf]
  %v29 = vld [vmem:[%s0 + $0x20] sm:$0xf]
  %v30 = vld [vmem:[%s0 + $0x24] sm:$0xf]
  %v31 = vld [vmem:[%s0 + $0x28] sm:$0xf]
  %v32 = vld [vmem:[%s0 + $0x2c] sm:$0xf]
  %v33 = vld [vmem:[%s0 + $0x30] sm:$0xf]
  %v34 = vld [vmem:[%s0 + $0x34] sm:$0xf]
  %v35 = vld [vmem:[%s0 + $0x38] sm:$0xf]
  %v36 = vld [vmem:[%s0 + $0x3c] sm:$0xf]
  %v37 = vld [vmem:[%s0 + $0x40] sm:$0xf]
  %v38 = vld [vmem:[%s0 + $0x44] sm:$0xf]
  %v39 = vld [vmem:[%s0 + $0x48] sm:$0xf]
  %v40 = vld [vmem:[%s0 + $0x4c] sm:$0xf]
  %v41 = vld [vmem:[%s0 + $0x50] sm:$0xf]
  %v42 = vld [vmem:[%s0 + $0x54] sm:$0xf]
  %v43 = vld [vmem:[%s0 + $0x58] sm:$0xf]
  %v44 = vld [vmem:[%s0 + $0x5c] sm:$0xf]
  %v45 = vld [vmem:[%s0 + $0x60] sm:$0xf]
  %v46 = vld [vmem:[%s0 + $0x64] sm:$0xf]
  %v47 = vld [vmem:[%s0 + $0x68] sm:$0xf]
  %v48 = vld [vmem:[%s0 + $0x6c] sm:$0xf]
  %v49 = vld [vmem:[%s0 + $0x70] sm:$0xf]
  %v50 = vld [vmem:[%s0 + $0x74] sm:$0xf]
  %v51 = vld [vmem:[%s0 + $0x78] sm:$0xf]
  %v52 = vld [vmem:[%s0 + $0x7c] sm:$0xf]
  %v53 = vld [vmem:[%s0 + $0x80] sm:$0xf]
  %v54 = vld [vmem:[%s0 + $0x84] sm:$0xf]
  %v55 = vld [vmem:[%s0 + $0x88] sm:$0xf]
  %v56 = vld [vmem:[%s0 + $0x8c] sm:$0xf]
  %v57 = vld [vmem:[%s0 + $0x90] sm:$0xf]
  %v58 = vld [vmem:[%s0 + $0x94] sm:$0xf]
  %v59 = vld [vmem:[%s0 + $0x98] sm:$0xf]
  %v60 = vld [vmem:[%s0 + $0x9c] sm:$0xf]
  %v61 = vld [vmem:[%s0 + $0xa0] sm:$0xf]
  %v62 = vld [vmem:[%s0 + $0xa4] sm:$0xf]
  %v63 = vld [vmem:[%s0 + $0xa8] sm:$0xf]
  %v64 = vld [vmem:[%s0 + $0xac] sm:$0xf]
  %v65 = vld [vmem:[%s0 + $0xb0] sm:$0xf]
  %v66 = vld [vmem:[%s0 + $0xb4] sm:$0xf]
  %v67 = vld [vmem:[%s0 + $0xb8] sm:$0xf]
  %v68 = vld [vmem:[%s0 + $0xbc] sm:$0xf]
  %v69 = vld [vmem:[%s0 + $0xc0] sm:$0xf]
  %v70 = vld [vmem:[%s0 + $0xc4] sm:$0xf]
  %v71 = vld [vmem:[%s0 + $0xc8] sm:$0xf]
  %v72 = vld [vmem:[%s0 + $0xcc] sm:$0xf]
  %v73 = vld [vmem:[%s0 + $0xd0] sm:$0xf]
  %v74 = vld [vmem:[%s0 + $0xd4] sm:$0xf]
  %v75 = vld [vmem:[%s0 + $0xd8] sm:$0xf]
  %v76 = vld [vmem:[%s0 + $0xdc] sm:$0xf]
  %v77 = vld [vmem:[%s0 + $0xe0] sm:$0xf]
  %v78 = vld [vmem:[%s0 + $0xe4] sm:$0xf]
  %v79 = vld [vmem:[%s0 + $0xe8] sm:$0xf]
  %v80 = vld [vmem:[%s0 + $0xec] sm:$0xf]
  %v81 = vld [vmem:[%s0 + $0xf0] sm:$0xf]
  %v82 = vld [vmem:[%s0 + $0xf4] sm:$0xf]
  %v83 = vld [vmem:[%s0 + $0xf8] sm:$0xf]
  %v84 = vld [vmem:[%s0 + $0xfc] sm:$0xf]
  %v85 = vld [vmem:[%s0 + $0x100] sm:$0xf]
  %v86 = vld [vmem:[%s0 + $0x104] sm:$0xf]
  %v87 = vld [vmem:[%s0 + $0x108] sm:$0xf]
  %v88 = vld [vmem:[%s0 + $0x10c] sm:$0xf]
  %v89 = vld [vmem:[%s0 + $0x110] sm:$0xf]
  %v90 = vld [vmem:[%s0 + $0x114] sm:$0xf]
  %v91 = vld [vmem:[%s0 + $0x118] sm:$0xf]
  %v92 = vld [vmem:[%s0 + $0x11c] sm:$0xf]
  %v93 = vld [vmem:[%s0 + $0x120] sm:$0xf]
  %v94 = vld [vmem:[%s0 + $0x124] sm:$0xf]
  %v95 = vld [vmem:[%s0 + $0x128] sm:$0xf]
  %v96 = vld [vmem:[%s0 + $0x12c] sm:$0xf]
  %v97 = vld [vmem:[%s0 + $0x130] sm:$0xf]
  %v98 = vld [vmem:[%s0 + $0x134] sm:$0xf]
  %v99 = vld [vmem:[%s0 + $0x138] sm:$0xf]
  %v100 = vld [vmem:[%s0 + $0x13c] sm:$0xf]
  %v101 = vld [vmem:[%s0 + $0x140] sm:$0xf]
  %v102 = vld [vmem:[%s0 + $0x144] sm:$0xf]
  %v103 = vld [vmem:[%s0 + $0x148] sm:$0xf]
  %v104 = vld [vmem:[%s0 + $0x14c] sm:$0xf]
  %v105 = vld [vmem:[%s0 + $0x150] sm:$0xf]
  %v106 = vld [vmem:[%s0 + $0x154] sm:$0xf]
  %v107 = vld [vmem:[%s0 + $0x158] sm:$0xf]
  %v108 = vld [vmem:[%s0 + $0x15c] sm:$0xf]
  %v109 = vld [vmem:[%s0 + $0x160] sm:$0xf]
  %v110 = vld [vmem:[%s0 + $0x164] sm:$0xf]
  %v111 = vld [vmem:[%s0 + $0x168] sm:$0xf]
  %v112 = vld [vmem:[%s0 + $0x16c] sm:$0xf]
  %v113 = vld [vmem:[%s0 + $0x170] sm:$0xf]
  %v114 = vld [vmem:[%s0 + $0x174] sm:$0xf]
  %v115 = vld [vmem:[%s0 + $0x178] sm:$0xf]
  %v116 = vld [vmem:[%s0 + $0x17c] sm:$0xf]
  %v117 = vld [vmem:[%s0 + $0x180] sm:$0xf]
  %v118 = vld [vmem:[%s0 + $0x184] sm:$0xf]
  %v119 = vld [vmem:[%s0 + $0x188] sm:$0xf]
  %v120 = vld [vmem:[%s0 + $0x18c] sm:$0xf]
  %v121 = vld [vmem:[%s0 + $0x190] sm:$0xf]
  %v122 = vld [vmem:[%s0 + $0x194] sm:$0xf]
  %v123 = vld [vmem:[%s0 + $0x198] sm:$0xf]
  %v124 = vld [vmem:[%s0 + $0x19c] sm:$0xf]
  %v125 = vld [vmem:[%s0 + $0x1a0] sm:$0xf]
  %v126 = vld [vmem:[%s0 + $0x1a4] sm:$0xf]
  %v127 = vld [vmem:[%s0 + $0x1a8] sm:$0xf]
  %v128 = vld [vmem:[%s0 + $0x1ac] sm:$0xf]
  %v129 = vld [vmem:[%s0 + $0x1b0] sm:$0xf]
  %v130 = vld [vmem:[%s0 + $0x1b4] sm:$0xf]
  %v131 = vld [vmem:[%s0 + $0x1b8] sm:$0xf]
  %v132 = vld [vmem:[%s0 + $0x1bc] sm:$0xf]
  %v133 = vld [vmem:[%s0 + $0x1c0] sm:$0xf]
  %v134 = vld [vmem:[%s0 + $0x1c4] sm:$0xf]
  %v135 = vld [vmem:[%s0 + $0x1c8] sm:$0xf]
  %v136 = vld [vmem:[%s0 + $0x1cc] sm:$0xf]
  %v137 = vld [vmem:[%s0 + $0x1d0] sm:$0xf]
  %v138 = vld [vmem:[%s0 + $0x1d4] sm:$0xf]
  %v139 = vld [vmem:[%s0 + $0x1d8] sm:$0xf]
  %v140 = vld [vmem:[%s0 + $0x1dc] sm:$0xf]
  %v141 = vld [vmem:[%s0 + $0x1e0] sm:$0xf]
  %v142 = vld [vmem:[%s0 + $0x1e4] sm:$0xf]
  %v143 = vld [vmem:[%s0 + $0x1e8] sm:$0xf]
  %v144 = vld [vmem:[%s0 + $0x1ec] sm:$0xf]
  %v145 = vld [vmem:[%s0 + $0x1f0] sm:$0xf]
  %v146 = vld [vmem:[%s0 + $0x1f4] sm:$0xf]
  %v147 = vld [vmem:[%s0 + $0x1f8] sm:$0xf]
  %v148 = vld [vmem:[%s0 + $0x1fc] sm:$0xf]
  %v149 = vld [vmem:[%s0 + $0x200] sm:$0xf]
  %v150 = vld [vmem:[%s0 + $0x204] sm:$0xf]
  %v151 = vld [vmem:[%s0 + $0x208] sm:$0xf]
  %v152 = vld [vmem:[%s0 + $0x20c] sm:$0xf]
  %v153 = vld [vmem:[%s0 + $0x210] sm:$0xf]
  %v154 = vld [vmem:[%s0 + $0x214] sm:$0xf]
  %v155 = vld [vmem:[%s0 + $0x218] sm:$0xf]
  %v156 = vld [vmem:[%s0 + $0x21c] sm:$0xf]
  %v157 = vld [vmem:[%s0 + $0x220] sm:$0xf]
  %v158 = vld [vmem:[%s0 + $0x224] sm:$0xf]
  %v159 = vld [vmem:[%s0 + $0x228] sm:$0xf]
  %v160 = vld [vmem:[%s0 + $0x22c] sm:$0xf]
  %v161 = vld [vmem:[%s0 + $0x230] sm:$0xf]
  %v162 = vld [vmem:[%s0 + $0x234] sm:$0xf]
  %v163 = vld [vmem:[%s0 + $0x238] sm:$0xf]
  %v164 = vld [vmem:[%s0 + $0x23c] sm:$0xf]
  %v165 = vld [vmem:[%s1] sm:$0xf]
  %v166 = vld [vmem:[%s1 + $0x4] sm:$0xf]
  %v167 = vld [vmem:[%s1 + $0x8] sm:$0xf]
  %v168 = vld [vmem:[%s1 + $0xc] sm:$0xf]
  %v169 = vld [vmem:[%s1 + $0x10] sm:$0xf]
  %v170 = vld [vmem:[%s1 + $0x14] sm:$0xf]
  %v171 = vld [vmem:[%s1 + $0x18] sm:$0xf]
  %v172 = vld [vmem:[%s1 + $0x1c] sm:$0xf]
  %v173 = vld [vmem:[%s1 + $0x20] sm:$0xf]
  %v174 = vld [vmem:[%s1 + $0x24] sm:$0xf]
  %v175 = vld [vmem:[%s1 + $0x28] sm:$0xf]
  %v176 = vld [vmem:[%s1 + $0x2c] sm:$0xf]
  %v177 = vld [vmem:[%s1 + $0x30] sm:$0xf]
  %v178 = vld [vmem:[%s1 + $0x34] sm:$0xf]
  %v179 = vld [vmem:[%s1 + $0x38] sm:$0xf]
  %v180 = vld [vmem:[%s1 + $0x3c] sm:$0xf]
  %v181 = vld [vmem:[%s1 + $0x40] sm:$0xf]
  %v182 = vld [vmem:[%s1 + $0x44] sm:$0xf]
  %v183 = vld [vmem:[%s1 + $0x48] sm:$0xf]
  %v184 = vld [vmem:[%s1 + $0x4c] sm:$0xf]
  %v185 = vld [vmem:[%s1 + $0x50] sm:$0xf]
  %v186 = vld [vmem:[%s1 + $0x54] sm:$0xf]
  %v187 = vld [vmem:[%s1 + $0x58] sm:$0xf]
  %v188 = vld [vmem:[%s1 + $0x5c] sm:$0xf]
  %v189 = vld [vmem:[%s1 + $0x60] sm:$0xf]
  %v190 = vld [vmem:[%s1 + $0x64] sm:$0xf]
  %v191 = vld [vmem:[%s1 + $0x68] sm:$0xf]
  %v192 = vld [vmem:[%s1 + $0x6c] sm:$0xf]
  %v193 = vld [vmem:[%s1 + $0x70] sm:$0xf]
  %v194 = vld [vmem:[%s1 + $0x74] sm:$0xf]
  %v195 = vld [vmem:[%s1 + $0x78] sm:$0xf]
  %v196 = vld [vmem:[%s1 + $0x7c] sm:$0xf]
  %v197 = vld [vmem:[%s1 + $0x80] sm:$0xf]
  %v198 = vld [vmem:[%s1 + $0x84] sm:$0xf]
  %v199 = vld [vmem:[%s1 + $0x88] sm:$0xf]
  %v200 = vld [vmem:[%s1 + $0x8c] sm:$0xf]
  %v201 = vld [vmem:[%s1 + $0x90] sm:$0xf]
  %v202 = vld [vmem:[%s1 + $0x94] sm:$0xf]
  %v203 = vld [vmem:[%s1 + $0x98] sm:$0xf]
  %v204 = vld [vmem:[%s1 + $0x9c] sm:$0xf]
  %v205 = vld [vmem:[%s1 + $0xa0] sm:$0xf]
  %v206 = vld [vmem:[%s1 + $0xa4] sm:$0xf]
  %v207 = vld [vmem:[%s1 + $0xa8] sm:$0xf]
  %v208 = vld [vmem:[%s1 + $0xac] sm:$0xf]
  %v209 = vld [vmem:[%s1 + $0xb0] sm:$0xf]
  %v210 = vld [vmem:[%s1 + $0xb4] sm:$0xf]
  %v211 = vld [vmem:[%s1 + $0xb8] sm:$0xf]
  %v212 = vld [vmem:[%s1 + $0xbc] sm:$0xf]
  %v213 = vld [vmem:[%s1 + $0xc0] sm:$0xf]
  %v214 = vld [vmem:[%s1 + $0xc4] sm:$0xf]
  %v215 = vld [vmem:[%s1 + $0xc8] sm:$0xf]
  %v216 = vld [vmem:[%s1 + $0xcc] sm:$0xf]
  %v217 = vld [vmem:[%s1 + $0xd0] sm:$0xf]
  %v218 = vld [vmem:[%s1 + $0xd4] sm:$0xf]
  %v219 = vld [vmem:[%s1 + $0xd8] sm:$0xf]
  %v220 = vld [vmem:[%s1 + $0xdc] sm:$0xf]
  %v221 = vld [vmem:[%s1 + $0xe0] sm:$0xf]
  %v222 = vld [vmem:[%s1 + $0xe4] sm:$0xf]
  %v223 = vld [vmem:[%s1 + $0xe8] sm:$0xf]
  %v224 = vld [vmem:[%s1 + $0xec] sm:$0xf]
  %v225 = vld [vmem:[%s1 + $0xf0] sm:$0xf]
  %v226 = vld [vmem:[%s1 + $0xf4] sm:$0xf]
  %v227 = vld [vmem:[%s1 + $0xf8] sm:$0xf]
  %v228 = vld [vmem:[%s1 + $0xfc] sm:$0xf]
  %v229 = vld [vmem:[%s1 + $0x100] sm:$0xf]
  %v230 = vld [vmem:[%s1 + $0x104] sm:$0xf]
  %v231 = vld [vmem:[%s1 + $0x108] sm:$0xf]
  %v232 = vld [vmem:[%s1 + $0x10c] sm:$0xf]
  %v233 = vld [vmem:[%s1 + $0x110] sm:$0xf]
  %v234 = vld [vmem:[%s1 + $0x114] sm:$0xf]
  %v235 = vld [vmem:[%s1 + $0x118] sm:$0xf]
  %v236 = vld [vmem:[%s1 + $0x11c] sm:$0xf]
  %v237 = vld [vmem:[%s1 + $0x120] sm:$0xf]
  %v238 = vld [vmem:[%s1 + $0x124] sm:$0xf]
  %v239 = vld [vmem:[%s1 + $0x128] sm:$0xf]
  %v240 = vld [vmem:[%s1 + $0x12c] sm:$0xf]
  %v241 = vld [vmem:[%s1 + $0x130] sm:$0xf]
  %v242 = vld [vmem:[%s1 + $0x134] sm:$0xf]
  %v243 = vld [vmem:[%s1 + $0x138] sm:$0xf]
  %v244 = vld [vmem:[%s1 + $0x13c] sm:$0xf]
  %v245 = vld [vmem:[%s1 + $0x140] sm:$0xf]
  %v246 = vld [vmem:[%s1 + $0x144] sm:$0xf]
  %v247 = vld [vmem:[%s1 + $0x148] sm:$0xf]
  %v248 = vld [vmem:[%s1 + $0x14c] sm:$0xf]
  %v249 = vld [vmem:[%s1 + $0x150] sm:$0xf]
  %v250 = vld [vmem:[%s1 + $0x154] sm:$0xf]
  %v251 = vld [vmem:[%s1 + $0x158] sm:$0xf]
  %v252 = vld [vmem:[%s1 + $0x15c] sm:$0xf]
  %v253 = vld [vmem:[%s1 + $0x160] sm:$0xf]
  %v254 = vld [vmem:[%s1 + $0x164] sm:$0xf]
  %v255 = vld [vmem:[%s1 + $0x168] sm:$0xf]
  %v256 = vld [vmem:[%s1 + $0x16c] sm:$0xf]
  %v257 = vld [vmem:[%s1 + $0x170] sm:$0xf]
  %v258 = vld [vmem:[%s1 + $0x174] sm:$0xf]
  %v259 = vld [vmem:[%s1 + $0x178] sm:$0xf]
  %v260 = vld [vmem:[%s1 + $0x17c] sm:$0xf]
  %v261 = vld [vmem:[%s1 + $0x180] sm:$0xf]
  %v262 = vld [vmem:[%s1 + $0x184] sm:$0xf]
  %v263 = vld [vmem:[%s1 + $0x188] sm:$0xf]
  %v264 = vld [vmem:[%s1 + $0x18c] sm:$0xf]
  %v265 = vld [vmem:[%s1 + $0x190] sm:$0xf]
  %v266 = vld [vmem:[%s1 + $0x194] sm:$0xf]
  %v267 = vld [vmem:[%s1 + $0x198] sm:$0xf]
  %v268 = vld [vmem:[%s1 + $0x19c] sm:$0xf]
  %v269 = vld [vmem:[%s1 + $0x1a0] sm:$0xf]
  %v270 = vld [vmem:[%s1 + $0x1a4] sm:$0xf]
  %v271 = vld [vmem:[%s1 + $0x1a8] sm:$0xf]
  %v272 = vld [vmem:[%s1 + $0x1ac] sm:$0xf]
  %v273 = vld [vmem:[%s1 + $0x1b0] sm:$0xf]
  %v274 = vld [vmem:[%s1 + $0x1b4] sm:$0xf]
  %v275 = vld [vmem:[%s1 + $0x1b8] sm:$0xf]
  %v276 = vld [vmem:[%s1 + $0x1bc] sm:$0xf]
  %v277 = vld [vmem:[%s1 + $0x1c0] sm:$0xf]
  %v278 = vld [vmem:[%s1 + $0x1c4] sm:$0xf]
  %v279 = vld [vmem:[%s1 + $0x1c8] sm:$0xf]
  %v280 = vld [vmem:[%s1 + $0x1cc] sm:$0xf]
  %v281 = vld [vmem:[%s1 + $0x1d0] sm:$0xf]
  %v282 = vld [vmem:[%s1 + $0x1d4] sm:$0xf]
  %v283 = vld [vmem:[%s1 + $0x1d8] sm:$0xf]
  %v284 = vld [vmem:[%s1 + $0x1dc] sm:$0xf]
  %v285 = vld [vmem:[%s1 + $0x1e0] sm:$0xf]
  %v286 = vld [vmem:[%s1 + $0x1e4] sm:$0xf]
  %v287 = vld [vmem:[%s1 + $0x1e8] sm:$0xf]
  %v288 = vld [vmem:[%s1 + $0x1ec] sm:$0xf]
  %v289 = vld [vmem:[%s1 + $0x1f0] sm:$0xf]
  %v290 = vld [vmem:[%s1 + $0x1f4] sm:$0xf]
  %v291 = vld [vmem:[%s1 + $0x1f8] sm:$0xf]
  %v292 = vld [vmem:[%s1 + $0x1fc] sm:$0xf]
  %v293 = vld [vmem:[%s1 + $0x200] sm:$0xf]
  %v294 = vld [vmem:[%s1 + $0x204] sm:$0xf]
  %v295 = vld [vmem:[%s1 + $0x208] sm:$0xf]
  %v296 = vld [vmem:[%s1 + $0x20c] sm:$0xf]
  %v297 = vld [vmem:[%s1 + $0x210] sm:$0xf]
  %v298 = vld [vmem:[%s1 + $0x214] sm:$0xf]
  %v299 = vld [vmem:[%s1 + $0x218] sm:$0xf]
  %v300 = vld [vmem:[%s1 + $0x21c] sm:$0xf]
  %v301 = vld [vmem:[%s1 + $0x220] sm:$0xf]
  %v302 = vld [vmem:[%s1 + $0x224] sm:$0xf]
  %v303 = vld [vmem:[%s1 + $0x228] sm:$0xf]
  %v304 = vld [vmem:[%s1 + $0x22c] sm:$0xf]
  %v305 = vld [vmem:[%s1 + $0x230] sm:$0xf]
  %v306 = vld [vmem:[%s1 + $0x234] sm:$0xf]
  %v307 = vld [vmem:[%s1 + $0x238] sm:$0xf]
  %v308 = vld [vmem:[%s1 + $0x23c] sm:$0xf]
  %310 = vset.pattern.permute.xlu0 0
  %311 = vperm.xlu0 %310, %v165
  %v312 = vpop.permute.xlu0 %311
  %v315 = vunpack.c.l.s4 839922192
  %v316 = vunpack.c.0.s8 %v315
  %v317 = vlaneseq
  %v318 = vshrl.u32 %v317, 7
  %v319 = vsub.s32 %v316, %v318
  %v320 = vrot.slane %v312, %v319
  %322 = vset.pattern.permute.xlu0 0
  %323 = vperm.xlu0 %322, %v166
  %v324 = vpop.permute.xlu0 %323
  %v327 = vunpack.c.l.s4 839922192
  %v328 = vunpack.c.0.s8 %v327
  %v329 = vlaneseq
  %v330 = vshrl.u32 %v329, 7
  %v331 = vsub.s32 %v328, %v330
  %v332 = vrot.slane %v324, %v331
  %334 = vset.pattern.permute.xlu0 0
  %335 = vperm.xlu0 %334, %v167
  %v336 = vpop.permute.xlu0 %335
  %v339 = vunpack.c.l.s4 839922192
  %v340 = vunpack.c.0.s8 %v339
  %v341 = vlaneseq
  %v342 = vshrl.u32 %v341, 7
  %v343 = vsub.s32 %v340, %v342
  %v344 = vrot.slane %v336, %v343
  %346 = vset.pattern.permute.xlu0 0
  %347 = vperm.xlu0 %346, %v168
  %v348 = vpop.permute.xlu0 %347
  %v351 = vunpack.c.l.s4 839922192
  %v352 = vunpack.c.0.s8 %v351
  %v353 = vlaneseq
  %v354 = vshrl.u32 %v353, 7
  %v355 = vsub.s32 %v352, %v354
  %v356 = vrot.slane %v348, %v355
  %358 = vset.pattern.permute.xlu0 0
  %359 = vperm.xlu0 %358, %v169
  %v360 = vpop.permute.xlu0 %359
  %v363 = vunpack.c.l.s4 839922192
  %v364 = vunpack.c.0.s8 %v363
  %v365 = vlaneseq
  %v366 = vshrl.u32 %v365, 7
  %v367 = vsub.s32 %v364, %v366
  %v368 = vrot.slane %v360, %v367
  %370 = vset.pattern.permute.xlu0 0
  %371 = vperm.xlu0 %370, %v170
  %v372 = vpop.permute.xlu0 %371
  %v375 = vunpack.c.l.s4 839922192
  %v376 = vunpack.c.0.s8 %v375
  %v377 = vlaneseq
  %v378 = vshrl.u32 %v377, 7
  %v379 = vsub.s32 %v376, %v378
  %v380 = vrot.slane %v372, %v379
  %382 = vset.pattern.permute.xlu0 0
  %383 = vperm.xlu0 %382, %v171
  %v384 = vpop.permute.xlu0 %383
  %v387 = vunpack.c.l.s4 839922192
  %v388 = vunpack.c.0.s8 %v387
  %v389 = vlaneseq
  %v390 = vshrl.u32 %v389, 7
  %v391 = vsub.s32 %v388, %v390
  %v392 = vrot.slane %v384, %v391
  %394 = vset.pattern.permute.xlu0 0
  %395 = vperm.xlu0 %394, %v172
  %v396 = vpop.permute.xlu0 %395
  %v399 = vunpack.c.l.s4 839922192
  %v400 = vunpack.c.0.s8 %v399
  %v401 = vlaneseq
  %v402 = vshrl.u32 %v401, 7
  %v403 = vsub.s32 %v400, %v402
  %v404 = vrot.slane %v396, %v403
  %406 = vset.pattern.permute.xlu0 0
  %407 = vperm.xlu0 %406, %v173
  %v408 = vpop.permute.xlu0 %407
  %v411 = vunpack.c.l.s4 839922192
  %v412 = vunpack.c.0.s8 %v411
  %v413 = vlaneseq
  %v414 = vshrl.u32 %v413, 7
  %v415 = vsub.s32 %v412, %v414
  %v416 = vrot.slane %v408, %v415
  %418 = vset.pattern.permute.xlu0 0
  %419 = vperm.xlu0 %418, %v174
  %v420 = vpop.permute.xlu0 %419
  %v423 = vunpack.c.l.s4 839922192
  %v424 = vunpack.c.0.s8 %v423
  %v425 = vlaneseq
  %v426 = vshrl.u32 %v425, 7
  %v427 = vsub.s32 %v424, %v426
  %v428 = vrot.slane %v420, %v427
  %430 = vset.pattern.permute.xlu0 0
  %431 = vperm.xlu0 %430, %v175
  %v432 = vpop.permute.xlu0 %431
  %v435 = vunpack.c.l.s4 839922192
  %v436 = vunpack.c.0.s8 %v435
  %v437 = vlaneseq
  %v438 = vshrl.u32 %v437, 7
  %v439 = vsub.s32 %v436, %v438
  %v440 = vrot.slane %v432, %v439
  %442 = vset.pattern.permute.xlu0 0
  %443 = vperm.xlu0 %442, %v176
  %v444 = vpop.permute.xlu0 %443
  %v447 = vunpack.c.l.s4 839922192
  %v448 = vunpack.c.0.s8 %v447
  %v449 = vlaneseq
  %v450 = vshrl.u32 %v449, 7
  %v451 = vsub.s32 %v448, %v450
  %v452 = vrot.slane %v444, %v451
  %454 = vset.pattern.permute.xlu0 0
  %455 = vperm.xlu0 %454, %v177
  %v456 = vpop.permute.xlu0 %455
  %v459 = vunpack.c.l.s4 839922192
  %v460 = vunpack.c.0.s8 %v459
  %v461 = vlaneseq
  %v462 = vshrl.u32 %v461, 7
  %v463 = vsub.s32 %v460, %v462
  %v464 = vrot.slane %v456, %v463
  %466 = vset.pattern.permute.xlu0 0
  %467 = vperm.xlu0 %466, %v178
  %v468 = vpop.permute.xlu0 %467
  %v471 = vunpack.c.l.s4 839922192
  %v472 = vunpack.c.0.s8 %v471
  %v473 = vlaneseq
  %v474 = vshrl.u32 %v473, 7
  %v475 = vsub.s32 %v472, %v474
  %v476 = vrot.slane %v468, %v475
  %478 = vset.pattern.permute.xlu0 0
  %479 = vperm.xlu0 %478, %v179
  %v480 = vpop.permute.xlu0 %479
  %v483 = vunpack.c.l.s4 839922192
  %v484 = vunpack.c.0.s8 %v483
  %v485 = vlaneseq
  %v486 = vshrl.u32 %v485, 7
  %v487 = vsub.s32 %v484, %v486
  %v488 = vrot.slane %v480, %v487
  %490 = vset.pattern.permute.xlu0 0
  %491 = vperm.xlu0 %490, %v180
  %v492 = vpop.permute.xlu0 %491
  %v495 = vunpack.c.l.s4 839922192
  %v496 = vunpack.c.0.s8 %v495
  %v497 = vlaneseq
  %v498 = vshrl.u32 %v497, 7
  %v499 = vsub.s32 %v496, %v498
  %v500 = vrot.slane %v492, %v499
  %502 = vset.pattern.permute.xlu0 0
  %503 = vperm.xlu0 %502, %v181
  %v504 = vpop.permute.xlu0 %503
  %v507 = vunpack.c.l.s4 839922192
  %v508 = vunpack.c.0.s8 %v507
  %v509 = vlaneseq
  %v510 = vshrl.u32 %v509, 7
  %v511 = vsub.s32 %v508, %v510
  %v512 = vrot.slane %v504, %v511
  %514 = vset.pattern.permute.xlu0 0
  %515 = vperm.xlu0 %514, %v182
  %v516 = vpop.permute.xlu0 %515
  %v519 = vunpack.c.l.s4 839922192
  %v520 = vunpack.c.0.s8 %v519
  %v521 = vlaneseq
  %v522 = vshrl.u32 %v521, 7
  %v523 = vsub.s32 %v520, %v522
  %v524 = vrot.slane %v516, %v523
  %526 = vset.pattern.permute.xlu0 0
  %527 = vperm.xlu0 %526, %v183
  %v528 = vpop.permute.xlu0 %527
  %v531 = vunpack.c.l.s4 839922192
  %v532 = vunpack.c.0.s8 %v531
  %v533 = vlaneseq
  %v534 = vshrl.u32 %v533, 7
  %v535 = vsub.s32 %v532, %v534
  %v536 = vrot.slane %v528, %v535
  %538 = vset.pattern.permute.xlu0 0
  %539 = vperm.xlu0 %538, %v184
  %v540 = vpop.permute.xlu0 %539
  %v543 = vunpack.c.l.s4 839922192
  %v544 = vunpack.c.0.s8 %v543
  %v545 = vlaneseq
  %v546 = vshrl.u32 %v545, 7
  %v547 = vsub.s32 %v544, %v546
  %v548 = vrot.slane %v540, %v547
  %550 = vset.pattern.permute.xlu0 0
  %551 = vperm.xlu0 %550, %v185
  %v552 = vpop.permute.xlu0 %551
  %v555 = vunpack.c.l.s4 839922192
  %v556 = vunpack.c.0.s8 %v555
  %v557 = vlaneseq
  %v558 = vshrl.u32 %v557, 7
  %v559 = vsub.s32 %v556, %v558
  %v560 = vrot.slane %v552, %v559
  %562 = vset.pattern.permute.xlu0 0
  %563 = vperm.xlu0 %562, %v186
  %v564 = vpop.permute.xlu0 %563
  %v567 = vunpack.c.l.s4 839922192
  %v568 = vunpack.c.0.s8 %v567
  %v569 = vlaneseq
  %v570 = vshrl.u32 %v569, 7
  %v571 = vsub.s32 %v568, %v570
  %v572 = vrot.slane %v564, %v571
  %574 = vset.pattern.permute.xlu0 0
  %575 = vperm.xlu0 %574, %v187
  %v576 = vpop.permute.xlu0 %575
  %v579 = vunpack.c.l.s4 839922192
  %v580 = vunpack.c.0.s8 %v579
  %v581 = vlaneseq
  %v582 = vshrl.u32 %v581, 7
  %v583 = vsub.s32 %v580, %v582
  %v584 = vrot.slane %v576, %v583
  %586 = vset.pattern.permute.xlu0 0
  %587 = vperm.xlu0 %586, %v188
  %v588 = vpop.permute.xlu0 %587
  %v591 = vunpack.c.l.s4 839922192
  %v592 = vunpack.c.0.s8 %v591
  %v593 = vlaneseq
  %v594 = vshrl.u32 %v593, 7
  %v595 = vsub.s32 %v592, %v594
  %v596 = vrot.slane %v588, %v595
  %598 = vset.pattern.permute.xlu0 0
  %599 = vperm.xlu0 %598, %v189
  %v600 = vpop.permute.xlu0 %599
  %v603 = vunpack.c.l.s4 839922192
  %v604 = vunpack.c.0.s8 %v603
  %v605 = vlaneseq
  %v606 = vshrl.u32 %v605, 7
  %v607 = vsub.s32 %v604, %v606
  %v608 = vrot.slane %v600, %v607
  %610 = vset.pattern.permute.xlu0 0
  %611 = vperm.xlu0 %610, %v190
  %v612 = vpop.permute.xlu0 %611
  %v615 = vunpack.c.l.s4 839922192
  %v616 = vunpack.c.0.s8 %v615
  %v617 = vlaneseq
  %v618 = vshrl.u32 %v617, 7
  %v619 = vsub.s32 %v616, %v618
  %v620 = vrot.slane %v612, %v619
  %622 = vset.pattern.permute.xlu0 0
  %623 = vperm.xlu0 %622, %v191
  %v624 = vpop.permute.xlu0 %623
  %v627 = vunpack.c.l.s4 839922192
  %v628 = vunpack.c.0.s8 %v627
  %v629 = vlaneseq
  %v630 = vshrl.u32 %v629, 7
  %v631 = vsub.s32 %v628, %v630
  %v632 = vrot.slane %v624, %v631
  %634 = vset.pattern.permute.xlu0 0
  %635 = vperm.xlu0 %634, %v192
  %v636 = vpop.permute.xlu0 %635
  %v639 = vunpack.c.l.s4 839922192
  %v640 = vunpack.c.0.s8 %v639
  %v641 = vlaneseq
  %v642 = vshrl.u32 %v641, 7
  %v643 = vsub.s32 %v640, %v642
  %v644 = vrot.slane %v636, %v643
  %646 = vset.pattern.permute.xlu0 0
  %647 = vperm.xlu0 %646, %v193
  %v648 = vpop.permute.xlu0 %647
  %v651 = vunpack.c.l.s4 839922192
  %v652 = vunpack.c.0.s8 %v651
  %v653 = vlaneseq
  %v654 = vshrl.u32 %v653, 7
  %v655 = vsub.s32 %v652, %v654
  %v656 = vrot.slane %v648, %v655
  %658 = vset.pattern.permute.xlu0 0
  %659 = vperm.xlu0 %658, %v194
  %v660 = vpop.permute.xlu0 %659
  %v663 = vunpack.c.l.s4 839922192
  %v664 = vunpack.c.0.s8 %v663
  %v665 = vlaneseq
  %v666 = vshrl.u32 %v665, 7
  %v667 = vsub.s32 %v664, %v666
  %v668 = vrot.slane %v660, %v667
  %670 = vset.pattern.permute.xlu0 0
  %671 = vperm.xlu0 %670, %v195
  %v672 = vpop.permute.xlu0 %671
  %v675 = vunpack.c.l.s4 839922192
  %v676 = vunpack.c.0.s8 %v675
  %v677 = vlaneseq
  %v678 = vshrl.u32 %v677, 7
  %v679 = vsub.s32 %v676, %v678
  %v680 = vrot.slane %v672, %v679
  %682 = vset.pattern.permute.xlu0 0
  %683 = vperm.xlu0 %682, %v196
  %v684 = vpop.permute.xlu0 %683
  %v687 = vunpack.c.l.s4 839922192
  %v688 = vunpack.c.0.s8 %v687
  %v689 = vlaneseq
  %v690 = vshrl.u32 %v689, 7
  %v691 = vsub.s32 %v688, %v690
  %v692 = vrot.slane %v684, %v691
  %694 = vset.pattern.permute.xlu0 0
  %695 = vperm.xlu0 %694, %v197
  %v696 = vpop.permute.xlu0 %695
  %v699 = vunpack.c.l.s4 839922192
  %v700 = vunpack.c.0.s8 %v699
  %v701 = vlaneseq
  %v702 = vshrl.u32 %v701, 7
  %v703 = vsub.s32 %v700, %v702
  %v704 = vrot.slane %v696, %v703
  %706 = vset.pattern.permute.xlu0 0
  %707 = vperm.xlu0 %706, %v198
  %v708 = vpop.permute.xlu0 %707
  %v711 = vunpack.c.l.s4 839922192
  %v712 = vunpack.c.0.s8 %v711
  %v713 = vlaneseq
  %v714 = vshrl.u32 %v713, 7
  %v715 = vsub.s32 %v712, %v714
  %v716 = vrot.slane %v708, %v715
  %718 = vset.pattern.permute.xlu0 0
  %719 = vperm.xlu0 %718, %v199
  %v720 = vpop.permute.xlu0 %719
  %v723 = vunpack.c.l.s4 839922192
  %v724 = vunpack.c.0.s8 %v723
  %v725 = vlaneseq
  %v726 = vshrl.u32 %v725, 7
  %v727 = vsub.s32 %v724, %v726
  %v728 = vrot.slane %v720, %v727
  %730 = vset.pattern.permute.xlu0 0
  %731 = vperm.xlu0 %730, %v200
  %v732 = vpop.permute.xlu0 %731
  %v735 = vunpack.c.l.s4 839922192
  %v736 = vunpack.c.0.s8 %v735
  %v737 = vlaneseq
  %v738 = vshrl.u32 %v737, 7
  %v739 = vsub.s32 %v736, %v738
  %v740 = vrot.slane %v732, %v739
  %742 = vset.pattern.permute.xlu0 0
  %743 = vperm.xlu0 %742, %v201
  %v744 = vpop.permute.xlu0 %743
  %v747 = vunpack.c.l.s4 839922192
  %v748 = vunpack.c.0.s8 %v747
  %v749 = vlaneseq
  %v750 = vshrl.u32 %v749, 7
  %v751 = vsub.s32 %v748, %v750
  %v752 = vrot.slane %v744, %v751
  %754 = vset.pattern.permute.xlu0 0
  %755 = vperm.xlu0 %754, %v202
  %v756 = vpop.permute.xlu0 %755
  %v759 = vunpack.c.l.s4 839922192
  %v760 = vunpack.c.0.s8 %v759
  %v761 = vlaneseq
  %v762 = vshrl.u32 %v761, 7
  %v763 = vsub.s32 %v760, %v762
  %v764 = vrot.slane %v756, %v763
  %766 = vset.pattern.permute.xlu0 0
  %767 = vperm.xlu0 %766, %v203
  %v768 = vpop.permute.xlu0 %767
  %v771 = vunpack.c.l.s4 839922192
  %v772 = vunpack.c.0.s8 %v771
  %v773 = vlaneseq
  %v774 = vshrl.u32 %v773, 7
  %v775 = vsub.s32 %v772, %v774
  %v776 = vrot.slane %v768, %v775
  %778 = vset.pattern.permute.xlu0 0
  %779 = vperm.xlu0 %778, %v204
  %v780 = vpop.permute.xlu0 %779
  %v783 = vunpack.c.l.s4 839922192
  %v784 = vunpack.c.0.s8 %v783
  %v785 = vlaneseq
  %v786 = vshrl.u32 %v785, 7
  %v787 = vsub.s32 %v784, %v786
  %v788 = vrot.slane %v780, %v787
  %790 = vset.pattern.permute.xlu0 0
  %791 = vperm.xlu0 %790, %v205
  %v792 = vpop.permute.xlu0 %791
  %v795 = vunpack.c.l.s4 839922192
  %v796 = vunpack.c.0.s8 %v795
  %v797 = vlaneseq
  %v798 = vshrl.u32 %v797, 7
  %v799 = vsub.s32 %v796, %v798
  %v800 = vrot.slane %v792, %v799
  %802 = vset.pattern.permute.xlu0 0
  %803 = vperm.xlu0 %802, %v206
  %v804 = vpop.permute.xlu0 %803
  %v807 = vunpack.c.l.s4 839922192
  %v808 = vunpack.c.0.s8 %v807
  %v809 = vlaneseq
  %v810 = vshrl.u32 %v809, 7
  %v811 = vsub.s32 %v808, %v810
  %v812 = vrot.slane %v804, %v811
  %814 = vset.pattern.permute.xlu0 0
  %815 = vperm.xlu0 %814, %v207
  %v816 = vpop.permute.xlu0 %815
  %v819 = vunpack.c.l.s4 839922192
  %v820 = vunpack.c.0.s8 %v819
  %v821 = vlaneseq
  %v822 = vshrl.u32 %v821, 7
  %v823 = vsub.s32 %v820, %v822
  %v824 = vrot.slane %v816, %v823
  %826 = vset.pattern.permute.xlu0 0
  %827 = vperm.xlu0 %826, %v208
  %v828 = vpop.permute.xlu0 %827
  %v831 = vunpack.c.l.s4 839922192
  %v832 = vunpack.c.0.s8 %v831
  %v833 = vlaneseq
  %v834 = vshrl.u32 %v833, 7
  %v835 = vsub.s32 %v832, %v834
  %v836 = vrot.slane %v828, %v835
  %838 = vset.pattern.permute.xlu0 0
  %839 = vperm.xlu0 %838, %v209
  %v840 = vpop.permute.xlu0 %839
  %v843 = vunpack.c.l.s4 839922192
  %v844 = vunpack.c.0.s8 %v843
  %v845 = vlaneseq
  %v846 = vshrl.u32 %v845, 7
  %v847 = vsub.s32 %v844, %v846
  %v848 = vrot.slane %v840, %v847
  %850 = vset.pattern.permute.xlu0 0
  %851 = vperm.xlu0 %850, %v210
  %v852 = vpop.permute.xlu0 %851
  %v855 = vunpack.c.l.s4 839922192
  %v856 = vunpack.c.0.s8 %v855
  %v857 = vlaneseq
  %v858 = vshrl.u32 %v857, 7
  %v859 = vsub.s32 %v856, %v858
  %v860 = vrot.slane %v852, %v859
  %862 = vset.pattern.permute.xlu0 0
  %863 = vperm.xlu0 %862, %v211
  %v864 = vpop.permute.xlu0 %863
  %v867 = vunpack.c.l.s4 839922192
  %v868 = vunpack.c.0.s8 %v867
  %v869 = vlaneseq
  %v870 = vshrl.u32 %v869, 7
  %v871 = vsub.s32 %v868, %v870
  %v872 = vrot.slane %v864, %v871
  %874 = vset.pattern.permute.xlu0 0
  %875 = vperm.xlu0 %874, %v212
  %v876 = vpop.permute.xlu0 %875
  %v879 = vunpack.c.l.s4 839922192
  %v880 = vunpack.c.0.s8 %v879
  %v881 = vlaneseq
  %v882 = vshrl.u32 %v881, 7
  %v883 = vsub.s32 %v880, %v882
  %v884 = vrot.slane %v876, %v883
  %886 = vset.pattern.permute.xlu0 0
  %887 = vperm.xlu0 %886, %v213
  %v888 = vpop.permute.xlu0 %887
  %v891 = vunpack.c.l.s4 839922192
  %v892 = vunpack.c.0.s8 %v891
  %v893 = vlaneseq
  %v894 = vshrl.u32 %v893, 7
  %v895 = vsub.s32 %v892, %v894
  %v896 = vrot.slane %v888, %v895
  %898 = vset.pattern.permute.xlu0 0
  %899 = vperm.xlu0 %898, %v214
  %v900 = vpop.permute.xlu0 %899
  %v903 = vunpack.c.l.s4 839922192
  %v904 = vunpack.c.0.s8 %v903
  %v905 = vlaneseq
  %v906 = vshrl.u32 %v905, 7
  %v907 = vsub.s32 %v904, %v906
  %v908 = vrot.slane %v900, %v907
  %910 = vset.pattern.permute.xlu0 0
  %911 = vperm.xlu0 %910, %v215
  %v912 = vpop.permute.xlu0 %911
  %v915 = vunpack.c.l.s4 839922192
  %v916 = vunpack.c.0.s8 %v915
  %v917 = vlaneseq
  %v918 = vshrl.u32 %v917, 7
  %v919 = vsub.s32 %v916, %v918
  %v920 = vrot.slane %v912, %v919
  %922 = vset.pattern.permute.xlu0 0
  %923 = vperm.xlu0 %922, %v216
  %v924 = vpop.permute.xlu0 %923
  %v927 = vunpack.c.l.s4 839922192
  %v928 = vunpack.c.0.s8 %v927
  %v929 = vlaneseq
  %v930 = vshrl.u32 %v929, 7
  %v931 = vsub.s32 %v928, %v930
  %v932 = vrot.slane %v924, %v931
  %934 = vset.pattern.permute.xlu0 0
  %935 = vperm.xlu0 %934, %v217
  %v936 = vpop.permute.xlu0 %935
  %v939 = vunpack.c.l.s4 839922192
  %v940 = vunpack.c.0.s8 %v939
  %v941 = vlaneseq
  %v942 = vshrl.u32 %v941, 7
  %v943 = vsub.s32 %v940, %v942
  %v944 = vrot.slane %v936, %v943
  %946 = vset.pattern.permute.xlu0 0
  %947 = vperm.xlu0 %946, %v218
  %v948 = vpop.permute.xlu0 %947
  %v951 = vunpack.c.l.s4 839922192
  %v952 = vunpack.c.0.s8 %v951
  %v953 = vlaneseq
  %v954 = vshrl.u32 %v953, 7
  %v955 = vsub.s32 %v952, %v954
  %v956 = vrot.slane %v948, %v955
  %958 = vset.pattern.permute.xlu0 0
  %959 = vperm.xlu0 %958, %v219
  %v960 = vpop.permute.xlu0 %959
  %v963 = vunpack.c.l.s4 839922192
  %v964 = vunpack.c.0.s8 %v963
  %v965 = vlaneseq
  %v966 = vshrl.u32 %v965, 7
  %v967 = vsub.s32 %v964, %v966
  %v968 = vrot.slane %v960, %v967
  %970 = vset.pattern.permute.xlu0 0
  %971 = vperm.xlu0 %970, %v220
  %v972 = vpop.permute.xlu0 %971
  %v975 = vunpack.c.l.s4 839922192
  %v976 = vunpack.c.0.s8 %v975
  %v977 = vlaneseq
  %v978 = vshrl.u32 %v977, 7
  %v979 = vsub.s32 %v976, %v978
  %v980 = vrot.slane %v972, %v979
  %982 = vset.pattern.permute.xlu0 0
  %983 = vperm.xlu0 %982, %v221
  %v984 = vpop.permute.xlu0 %983
  %v987 = vunpack.c.l.s4 839922192
  %v988 = vunpack.c.0.s8 %v987
  %v989 = vlaneseq
  %v990 = vshrl.u32 %v989, 7
  %v991 = vsub.s32 %v988, %v990
  %v992 = vrot.slane %v984, %v991
  %994 = vset.pattern.permute.xlu0 0
  %995 = vperm.xlu0 %994, %v222
  %v996 = vpop.permute.xlu0 %995
  %v999 = vunpack.c.l.s4 839922192
  %v1000 = vunpack.c.0.s8 %v999
  %v1001 = vlaneseq
  %v1002 = vshrl.u32 %v1001, 7
  %v1003 = vsub.s32 %v1000, %v1002
  %v1004 = vrot.slane %v996, %v1003
  %1006 = vset.pattern.permute.xlu0 0
  %1007 = vperm.xlu0 %1006, %v223
  %v1008 = vpop.permute.xlu0 %1007
  %v1011 = vunpack.c.l.s4 839922192
  %v1012 = vunpack.c.0.s8 %v1011
  %v1013 = vlaneseq
  %v1014 = vshrl.u32 %v1013, 7
  %v1015 = vsub.s32 %v1012, %v1014
  %v1016 = vrot.slane %v1008, %v1015
  %1018 = vset.pattern.permute.xlu0 0
  %1019 = vperm.xlu0 %1018, %v224
  %v1020 = vpop.permute.xlu0 %1019
  %v1023 = vunpack.c.l.s4 839922192
  %v1024 = vunpack.c.0.s8 %v1023
  %v1025 = vlaneseq
  %v1026 = vshrl.u32 %v1025, 7
  %v1027 = vsub.s32 %v1024, %v1026
  %v1028 = vrot.slane %v1020, %v1027
  %1030 = vset.pattern.permute.xlu0 0
  %1031 = vperm.xlu0 %1030, %v225
  %v1032 = vpop.permute.xlu0 %1031
  %v1035 = vunpack.c.l.s4 839922192
  %v1036 = vunpack.c.0.s8 %v1035
  %v1037 = vlaneseq
  %v1038 = vshrl.u32 %v1037, 7
  %v1039 = vsub.s32 %v1036, %v1038
  %v1040 = vrot.slane %v1032, %v1039
  %1042 = vset.pattern.permute.xlu0 0
  %1043 = vperm.xlu0 %1042, %v226
  %v1044 = vpop.permute.xlu0 %1043
  %v1047 = vunpack.c.l.s4 839922192
  %v1048 = vunpack.c.0.s8 %v1047
  %v1049 = vlaneseq
  %v1050 = vshrl.u32 %v1049, 7
  %v1051 = vsub.s32 %v1048, %v1050
  %v1052 = vrot.slane %v1044, %v1051
  %1054 = vset.pattern.permute.xlu0 0
  %1055 = vperm.xlu0 %1054, %v227
  %v1056 = vpop.permute.xlu0 %1055
  %v1059 = vunpack.c.l.s4 839922192
  %v1060 = vunpack.c.0.s8 %v1059
  %v1061 = vlaneseq
  %v1062 = vshrl.u32 %v1061, 7
  %v1063 = vsub.s32 %v1060, %v1062
  %v1064 = vrot.slane %v1056, %v1063
  %1066 = vset.pattern.permute.xlu0 0
  %1067 = vperm.xlu0 %1066, %v228
  %v1068 = vpop.permute.xlu0 %1067
  %v1071 = vunpack.c.l.s4 839922192
  %v1072 = vunpack.c.0.s8 %v1071
  %v1073 = vlaneseq
  %v1074 = vshrl.u32 %v1073, 7
  %v1075 = vsub.s32 %v1072, %v1074
  %v1076 = vrot.slane %v1068, %v1075
  %1078 = vset.pattern.permute.xlu0 0
  %1079 = vperm.xlu0 %1078, %v229
  %v1080 = vpop.permute.xlu0 %1079
  %v1083 = vunpack.c.l.s4 839922192
  %v1084 = vunpack.c.0.s8 %v1083
  %v1085 = vlaneseq
  %v1086 = vshrl.u32 %v1085, 7
  %v1087 = vsub.s32 %v1084, %v1086
  %v1088 = vrot.slane %v1080, %v1087
  %1090 = vset.pattern.permute.xlu0 0
  %1091 = vperm.xlu0 %1090, %v230
  %v1092 = vpop.permute.xlu0 %1091
  %v1095 = vunpack.c.l.s4 839922192
  %v1096 = vunpack.c.0.s8 %v1095
  %v1097 = vlaneseq
  %v1098 = vshrl.u32 %v1097, 7
  %v1099 = vsub.s32 %v1096, %v1098
  %v1100 = vrot.slane %v1092, %v1099
  %1102 = vset.pattern.permute.xlu0 0
  %1103 = vperm.xlu0 %1102, %v231
  %v1104 = vpop.permute.xlu0 %1103
  %v1107 = vunpack.c.l.s4 839922192
  %v1108 = vunpack.c.0.s8 %v1107
  %v1109 = vlaneseq
  %v1110 = vshrl.u32 %v1109, 7
  %v1111 = vsub.s32 %v1108, %v1110
  %v1112 = vrot.slane %v1104, %v1111
  %1114 = vset.pattern.permute.xlu0 0
  %1115 = vperm.xlu0 %1114, %v232
  %v1116 = vpop.permute.xlu0 %1115
  %v1119 = vunpack.c.l.s4 839922192
  %v1120 = vunpack.c.0.s8 %v1119
  %v1121 = vlaneseq
  %v1122 = vshrl.u32 %v1121, 7
  %v1123 = vsub.s32 %v1120, %v1122
  %v1124 = vrot.slane %v1116, %v1123
  %1126 = vset.pattern.permute.xlu0 0
  %1127 = vperm.xlu0 %1126, %v233
  %v1128 = vpop.permute.xlu0 %1127
  %v1131 = vunpack.c.l.s4 839922192
  %v1132 = vunpack.c.0.s8 %v1131
  %v1133 = vlaneseq
  %v1134 = vshrl.u32 %v1133, 7
  %v1135 = vsub.s32 %v1132, %v1134
  %v1136 = vrot.slane %v1128, %v1135
  %1138 = vset.pattern.permute.xlu0 0
  %1139 = vperm.xlu0 %1138, %v234
  %v1140 = vpop.permute.xlu0 %1139
  %v1143 = vunpack.c.l.s4 839922192
  %v1144 = vunpack.c.0.s8 %v1143
  %v1145 = vlaneseq
  %v1146 = vshrl.u32 %v1145, 7
  %v1147 = vsub.s32 %v1144, %v1146
  %v1148 = vrot.slane %v1140, %v1147
  %1150 = vset.pattern.permute.xlu0 0
  %1151 = vperm.xlu0 %1150, %v235
  %v1152 = vpop.permute.xlu0 %1151
  %v1155 = vunpack.c.l.s4 839922192
  %v1156 = vunpack.c.0.s8 %v1155
  %v1157 = vlaneseq
  %v1158 = vshrl.u32 %v1157, 7
  %v1159 = vsub.s32 %v1156, %v1158
  %v1160 = vrot.slane %v1152, %v1159
  %1162 = vset.pattern.permute.xlu0 0
  %1163 = vperm.xlu0 %1162, %v236
  %v1164 = vpop.permute.xlu0 %1163
  %v1167 = vunpack.c.l.s4 839922192
  %v1168 = vunpack.c.0.s8 %v1167
  %v1169 = vlaneseq
  %v1170 = vshrl.u32 %v1169, 7
  %v1171 = vsub.s32 %v1168, %v1170
  %v1172 = vrot.slane %v1164, %v1171
  %1174 = vset.pattern.permute.xlu0 0
  %1175 = vperm.xlu0 %1174, %v237
  %v1176 = vpop.permute.xlu0 %1175
  %v1179 = vunpack.c.l.s4 839922192
  %v1180 = vunpack.c.0.s8 %v1179
  %v1181 = vlaneseq
  %v1182 = vshrl.u32 %v1181, 7
  %v1183 = vsub.s32 %v1180, %v1182
  %v1184 = vrot.slane %v1176, %v1183
  %1186 = vset.pattern.permute.xlu0 0
  %1187 = vperm.xlu0 %1186, %v238
  %v1188 = vpop.permute.xlu0 %1187
  %v1191 = vunpack.c.l.s4 839922192
  %v1192 = vunpack.c.0.s8 %v1191
  %v1193 = vlaneseq
  %v1194 = vshrl.u32 %v1193, 7
  %v1195 = vsub.s32 %v1192, %v1194
  %v1196 = vrot.slane %v1188, %v1195
  %1198 = vset.pattern.permute.xlu0 0
  %1199 = vperm.xlu0 %1198, %v239
  %v1200 = vpop.permute.xlu0 %1199
  %v1203 = vunpack.c.l.s4 839922192
  %v1204 = vunpack.c.0.s8 %v1203
  %v1205 = vlaneseq
  %v1206 = vshrl.u32 %v1205, 7
  %v1207 = vsub.s32 %v1204, %v1206
  %v1208 = vrot.slane %v1200, %v1207
  %1210 = vset.pattern.permute.xlu0 0
  %1211 = vperm.xlu0 %1210, %v240
  %v1212 = vpop.permute.xlu0 %1211
  %v1215 = vunpack.c.l.s4 839922192
  %v1216 = vunpack.c.0.s8 %v1215
  %v1217 = vlaneseq
  %v1218 = vshrl.u32 %v1217, 7
  %v1219 = vsub.s32 %v1216, %v1218
  %v1220 = vrot.slane %v1212, %v1219
  %1222 = vset.pattern.permute.xlu0 0
  %1223 = vperm.xlu0 %1222, %v241
  %v1224 = vpop.permute.xlu0 %1223
  %v1227 = vunpack.c.l.s4 839922192
  %v1228 = vunpack.c.0.s8 %v1227
  %v1229 = vlaneseq
  %v1230 = vshrl.u32 %v1229, 7
  %v1231 = vsub.s32 %v1228, %v1230
  %v1232 = vrot.slane %v1224, %v1231
  %1234 = vset.pattern.permute.xlu0 0
  %1235 = vperm.xlu0 %1234, %v242
  %v1236 = vpop.permute.xlu0 %1235
  %v1239 = vunpack.c.l.s4 839922192
  %v1240 = vunpack.c.0.s8 %v1239
  %v1241 = vlaneseq
  %v1242 = vshrl.u32 %v1241, 7
  %v1243 = vsub.s32 %v1240, %v1242
  %v1244 = vrot.slane %v1236, %v1243
  %1246 = vset.pattern.permute.xlu0 0
  %1247 = vperm.xlu0 %1246, %v243
  %v1248 = vpop.permute.xlu0 %1247
  %v1251 = vunpack.c.l.s4 839922192
  %v1252 = vunpack.c.0.s8 %v1251
  %v1253 = vlaneseq
  %v1254 = vshrl.u32 %v1253, 7
  %v1255 = vsub.s32 %v1252, %v1254
  %v1256 = vrot.slane %v1248, %v1255
  %1258 = vset.pattern.permute.xlu0 0
  %1259 = vperm.xlu0 %1258, %v244
  %v1260 = vpop.permute.xlu0 %1259
  %v1263 = vunpack.c.l.s4 839922192
  %v1264 = vunpack.c.0.s8 %v1263
  %v1265 = vlaneseq
  %v1266 = vshrl.u32 %v1265, 7
  %v1267 = vsub.s32 %v1264, %v1266
  %v1268 = vrot.slane %v1260, %v1267
  %1270 = vset.pattern.permute.xlu0 0
  %1271 = vperm.xlu0 %1270, %v245
  %v1272 = vpop.permute.xlu0 %1271
  %v1275 = vunpack.c.l.s4 839922192
  %v1276 = vunpack.c.0.s8 %v1275
  %v1277 = vlaneseq
  %v1278 = vshrl.u32 %v1277, 7
  %v1279 = vsub.s32 %v1276, %v1278
  %v1280 = vrot.slane %v1272, %v1279
  %1282 = vset.pattern.permute.xlu0 0
  %1283 = vperm.xlu0 %1282, %v246
  %v1284 = vpop.permute.xlu0 %1283
  %v1287 = vunpack.c.l.s4 839922192
  %v1288 = vunpack.c.0.s8 %v1287
  %v1289 = vlaneseq
  %v1290 = vshrl.u32 %v1289, 7
  %v1291 = vsub.s32 %v1288, %v1290
  %v1292 = vrot.slane %v1284, %v1291
  %1294 = vset.pattern.permute.xlu0 0
  %1295 = vperm.xlu0 %1294, %v247
  %v1296 = vpop.permute.xlu0 %1295
  %v1299 = vunpack.c.l.s4 839922192
  %v1300 = vunpack.c.0.s8 %v1299
  %v1301 = vlaneseq
  %v1302 = vshrl.u32 %v1301, 7
  %v1303 = vsub.s32 %v1300, %v1302
  %v1304 = vrot.slane %v1296, %v1303
  %1306 = vset.pattern.permute.xlu0 0
  %1307 = vperm.xlu0 %1306, %v248
  %v1308 = vpop.permute.xlu0 %1307
  %v1311 = vunpack.c.l.s4 839922192
  %v1312 = vunpack.c.0.s8 %v1311
  %v1313 = vlaneseq
  %v1314 = vshrl.u32 %v1313, 7
  %v1315 = vsub.s32 %v1312, %v1314
  %v1316 = vrot.slane %v1308, %v1315
  %1318 = vset.pattern.permute.xlu0 0
  %1319 = vperm.xlu0 %1318, %v249
  %v1320 = vpop.permute.xlu0 %1319
  %v1323 = vunpack.c.l.s4 839922192
  %v1324 = vunpack.c.0.s8 %v1323
  %v1325 = vlaneseq
  %v1326 = vshrl.u32 %v1325, 7
  %v1327 = vsub.s32 %v1324, %v1326
  %v1328 = vrot.slane %v1320, %v1327
  %1330 = vset.pattern.permute.xlu0 0
  %1331 = vperm.xlu0 %1330, %v250
  %v1332 = vpop.permute.xlu0 %1331
  %v1335 = vunpack.c.l.s4 839922192
  %v1336 = vunpack.c.0.s8 %v1335
  %v1337 = vlaneseq
  %v1338 = vshrl.u32 %v1337, 7
  %v1339 = vsub.s32 %v1336, %v1338
  %v1340 = vrot.slane %v1332, %v1339
  %1342 = vset.pattern.permute.xlu0 0
  %1343 = vperm.xlu0 %1342, %v251
  %v1344 = vpop.permute.xlu0 %1343
  %v1347 = vunpack.c.l.s4 839922192
  %v1348 = vunpack.c.0.s8 %v1347
  %v1349 = vlaneseq
  %v1350 = vshrl.u32 %v1349, 7
  %v1351 = vsub.s32 %v1348, %v1350
  %v1352 = vrot.slane %v1344, %v1351
  %1354 = vset.pattern.permute.xlu0 0
  %1355 = vperm.xlu0 %1354, %v252
  %v1356 = vpop.permute.xlu0 %1355
  %v1359 = vunpack.c.l.s4 839922192
  %v1360 = vunpack.c.0.s8 %v1359
  %v1361 = vlaneseq
  %v1362 = vshrl.u32 %v1361, 7
  %v1363 = vsub.s32 %v1360, %v1362
  %v1364 = vrot.slane %v1356, %v1363
  %1366 = vset.pattern.permute.xlu0 0
  %1367 = vperm.xlu0 %1366, %v253
  %v1368 = vpop.permute.xlu0 %1367
  %v1371 = vunpack.c.l.s4 839922192
  %v1372 = vunpack.c.0.s8 %v1371
  %v1373 = vlaneseq
  %v1374 = vshrl.u32 %v1373, 7
  %v1375 = vsub.s32 %v1372, %v1374
  %v1376 = vrot.slane %v1368, %v1375
  %1378 = vset.pattern.permute.xlu0 0
  %1379 = vperm.xlu0 %1378, %v254
  %v1380 = vpop.permute.xlu0 %1379
  %v1383 = vunpack.c.l.s4 839922192
  %v1384 = vunpack.c.0.s8 %v1383
  %v1385 = vlaneseq
  %v1386 = vshrl.u32 %v1385, 7
  %v1387 = vsub.s32 %v1384, %v1386
  %v1388 = vrot.slane %v1380, %v1387
  %1390 = vset.pattern.permute.xlu0 0
  %1391 = vperm.xlu0 %1390, %v255
  %v1392 = vpop.permute.xlu0 %1391
  %v1395 = vunpack.c.l.s4 839922192
  %v1396 = vunpack.c.0.s8 %v1395
  %v1397 = vlaneseq
  %v1398 = vshrl.u32 %v1397, 7
  %v1399 = vsub.s32 %v1396, %v1398
  %v1400 = vrot.slane %v1392, %v1399
  %1402 = vset.pattern.permute.xlu0 0
  %1403 = vperm.xlu0 %1402, %v256
  %v1404 = vpop.permute.xlu0 %1403
  %v1407 = vunpack.c.l.s4 839922192
  %v1408 = vunpack.c.0.s8 %v1407
  %v1409 = vlaneseq
  %v1410 = vshrl.u32 %v1409, 7
  %v1411 = vsub.s32 %v1408, %v1410
  %v1412 = vrot.slane %v1404, %v1411
  %1414 = vset.pattern.permute.xlu0 0
  %1415 = vperm.xlu0 %1414, %v257
  %v1416 = vpop.permute.xlu0 %1415
  %v1419 = vunpack.c.l.s4 839922192
  %v1420 = vunpack.c.0.s8 %v1419
  %v1421 = vlaneseq
  %v1422 = vshrl.u32 %v1421, 7
  %v1423 = vsub.s32 %v1420, %v1422
  %v1424 = vrot.slane %v1416, %v1423
  %1426 = vset.pattern.permute.xlu0 0
  %1427 = vperm.xlu0 %1426, %v258
  %v1428 = vpop.permute.xlu0 %1427
  %v1431 = vunpack.c.l.s4 839922192
  %v1432 = vunpack.c.0.s8 %v1431
  %v1433 = vlaneseq
  %v1434 = vshrl.u32 %v1433, 7
  %v1435 = vsub.s32 %v1432, %v1434
  %v1436 = vrot.slane %v1428, %v1435
  %1438 = vset.pattern.permute.xlu0 0
  %1439 = vperm.xlu0 %1438, %v259
  %v1440 = vpop.permute.xlu0 %1439
  %v1443 = vunpack.c.l.s4 839922192
  %v1444 = vunpack.c.0.s8 %v1443
  %v1445 = vlaneseq
  %v1446 = vshrl.u32 %v1445, 7
  %v1447 = vsub.s32 %v1444, %v1446
  %v1448 = vrot.slane %v1440, %v1447
  %1450 = vset.pattern.permute.xlu0 0
  %1451 = vperm.xlu0 %1450, %v260
  %v1452 = vpop.permute.xlu0 %1451
  %v1455 = vunpack.c.l.s4 839922192
  %v1456 = vunpack.c.0.s8 %v1455
  %v1457 = vlaneseq
  %v1458 = vshrl.u32 %v1457, 7
  %v1459 = vsub.s32 %v1456, %v1458
  %v1460 = vrot.slane %v1452, %v1459
  %1462 = vset.pattern.permute.xlu0 0
  %1463 = vperm.xlu0 %1462, %v261
  %v1464 = vpop.permute.xlu0 %1463
  %v1467 = vunpack.c.l.s4 839922192
  %v1468 = vunpack.c.0.s8 %v1467
  %v1469 = vlaneseq
  %v1470 = vshrl.u32 %v1469, 7
  %v1471 = vsub.s32 %v1468, %v1470
  %v1472 = vrot.slane %v1464, %v1471
  %1474 = vset.pattern.permute.xlu0 0
  %1475 = vperm.xlu0 %1474, %v262
  %v1476 = vpop.permute.xlu0 %1475
  %v1479 = vunpack.c.l.s4 839922192
  %v1480 = vunpack.c.0.s8 %v1479
  %v1481 = vlaneseq
  %v1482 = vshrl.u32 %v1481, 7
  %v1483 = vsub.s32 %v1480, %v1482
  %v1484 = vrot.slane %v1476, %v1483
  %1486 = vset.pattern.permute.xlu0 0
  %1487 = vperm.xlu0 %1486, %v263
  %v1488 = vpop.permute.xlu0 %1487
  %v1491 = vunpack.c.l.s4 839922192
  %v1492 = vunpack.c.0.s8 %v1491
  %v1493 = vlaneseq
  %v1494 = vshrl.u32 %v1493, 7
  %v1495 = vsub.s32 %v1492, %v1494
  %v1496 = vrot.slane %v1488, %v1495
  %1498 = vset.pattern.permute.xlu0 0
  %1499 = vperm.xlu0 %1498, %v264
  %v1500 = vpop.permute.xlu0 %1499
  %v1503 = vunpack.c.l.s4 839922192
  %v1504 = vunpack.c.0.s8 %v1503
  %v1505 = vlaneseq
  %v1506 = vshrl.u32 %v1505, 7
  %v1507 = vsub.s32 %v1504, %v1506
  %v1508 = vrot.slane %v1500, %v1507
  %1510 = vset.pattern.permute.xlu0 0
  %1511 = vperm.xlu0 %1510, %v265
  %v1512 = vpop.permute.xlu0 %1511
  %v1515 = vunpack.c.l.s4 839922192
  %v1516 = vunpack.c.0.s8 %v1515
  %v1517 = vlaneseq
  %v1518 = vshrl.u32 %v1517, 7
  %v1519 = vsub.s32 %v1516, %v1518
  %v1520 = vrot.slane %v1512, %v1519
  %1522 = vset.pattern.permute.xlu0 0
  %1523 = vperm.xlu0 %1522, %v266
  %v1524 = vpop.permute.xlu0 %1523
  %v1527 = vunpack.c.l.s4 839922192
  %v1528 = vunpack.c.0.s8 %v1527
  %v1529 = vlaneseq
  %v1530 = vshrl.u32 %v1529, 7
  %v1531 = vsub.s32 %v1528, %v1530
  %v1532 = vrot.slane %v1524, %v1531
  %1534 = vset.pattern.permute.xlu0 0
  %1535 = vperm.xlu0 %1534, %v267
  %v1536 = vpop.permute.xlu0 %1535
  %v1539 = vunpack.c.l.s4 839922192
  %v1540 = vunpack.c.0.s8 %v1539
  %v1541 = vlaneseq
  %v1542 = vshrl.u32 %v1541, 7
  %v1543 = vsub.s32 %v1540, %v1542
  %v1544 = vrot.slane %v1536, %v1543
  %1546 = vset.pattern.permute.xlu0 0
  %1547 = vperm.xlu0 %1546, %v268
  %v1548 = vpop.permute.xlu0 %1547
  %v1551 = vunpack.c.l.s4 839922192
  %v1552 = vunpack.c.0.s8 %v1551
  %v1553 = vlaneseq
  %v1554 = vshrl.u32 %v1553, 7
  %v1555 = vsub.s32 %v1552, %v1554
  %v1556 = vrot.slane %v1548, %v1555
  %1558 = vset.pattern.permute.xlu0 0
  %1559 = vperm.xlu0 %1558, %v269
  %v1560 = vpop.permute.xlu0 %1559
  %v1563 = vunpack.c.l.s4 839922192
  %v1564 = vunpack.c.0.s8 %v1563
  %v1565 = vlaneseq
  %v1566 = vshrl.u32 %v1565, 7
  %v1567 = vsub.s32 %v1564, %v1566
  %v1568 = vrot.slane %v1560, %v1567
  %1570 = vset.pattern.permute.xlu0 0
  %1571 = vperm.xlu0 %1570, %v270
  %v1572 = vpop.permute.xlu0 %1571
  %v1575 = vunpack.c.l.s4 839922192
  %v1576 = vunpack.c.0.s8 %v1575
  %v1577 = vlaneseq
  %v1578 = vshrl.u32 %v1577, 7
  %v1579 = vsub.s32 %v1576, %v1578
  %v1580 = vrot.slane %v1572, %v1579
  %1582 = vset.pattern.permute.xlu0 0
  %1583 = vperm.xlu0 %1582, %v271
  %v1584 = vpop.permute.xlu0 %1583
  %v1587 = vunpack.c.l.s4 839922192
  %v1588 = vunpack.c.0.s8 %v1587
  %v1589 = vlaneseq
  %v1590 = vshrl.u32 %v1589, 7
  %v1591 = vsub.s32 %v1588, %v1590
  %v1592 = vrot.slane %v1584, %v1591
  %1594 = vset.pattern.permute.xlu0 0
  %1595 = vperm.xlu0 %1594, %v272
  %v1596 = vpop.permute.xlu0 %1595
  %v1599 = vunpack.c.l.s4 839922192
  %v1600 = vunpack.c.0.s8 %v1599
  %v1601 = vlaneseq
  %v1602 = vshrl.u32 %v1601, 7
  %v1603 = vsub.s32 %v1600, %v1602
  %v1604 = vrot.slane %v1596, %v1603
  %1606 = vset.pattern.permute.xlu0 0
  %1607 = vperm.xlu0 %1606, %v273
  %v1608 = vpop.permute.xlu0 %1607
  %v1611 = vunpack.c.l.s4 839922192
  %v1612 = vunpack.c.0.s8 %v1611
  %v1613 = vlaneseq
  %v1614 = vshrl.u32 %v1613, 7
  %v1615 = vsub.s32 %v1612, %v1614
  %v1616 = vrot.slane %v1608, %v1615
  %1618 = vset.pattern.permute.xlu0 0
  %1619 = vperm.xlu0 %1618, %v274
  %v1620 = vpop.permute.xlu0 %1619
  %v1623 = vunpack.c.l.s4 839922192
  %v1624 = vunpack.c.0.s8 %v1623
  %v1625 = vlaneseq
  %v1626 = vshrl.u32 %v1625, 7
  %v1627 = vsub.s32 %v1624, %v1626
  %v1628 = vrot.slane %v1620, %v1627
  %1630 = vset.pattern.permute.xlu0 0
  %1631 = vperm.xlu0 %1630, %v275
  %v1632 = vpop.permute.xlu0 %1631
  %v1635 = vunpack.c.l.s4 839922192
  %v1636 = vunpack.c.0.s8 %v1635
  %v1637 = vlaneseq
  %v1638 = vshrl.u32 %v1637, 7
  %v1639 = vsub.s32 %v1636, %v1638
  %v1640 = vrot.slane %v1632, %v1639
  %1642 = vset.pattern.permute.xlu0 0
  %1643 = vperm.xlu0 %1642, %v276
  %v1644 = vpop.permute.xlu0 %1643
  %v1647 = vunpack.c.l.s4 839922192
  %v1648 = vunpack.c.0.s8 %v1647
  %v1649 = vlaneseq
  %v1650 = vshrl.u32 %v1649, 7
  %v1651 = vsub.s32 %v1648, %v1650
  %v1652 = vrot.slane %v1644, %v1651
  %1654 = vset.pattern.permute.xlu0 0
  %1655 = vperm.xlu0 %1654, %v277
  %v1656 = vpop.permute.xlu0 %1655
  %v1659 = vunpack.c.l.s4 839922192
  %v1660 = vunpack.c.0.s8 %v1659
  %v1661 = vlaneseq
  %v1662 = vshrl.u32 %v1661, 7
  %v1663 = vsub.s32 %v1660, %v1662
  %v1664 = vrot.slane %v1656, %v1663
  %1666 = vset.pattern.permute.xlu0 0
  %1667 = vperm.xlu0 %1666, %v278
  %v1668 = vpop.permute.xlu0 %1667
  %v1671 = vunpack.c.l.s4 839922192
  %v1672 = vunpack.c.0.s8 %v1671
  %v1673 = vlaneseq
  %v1674 = vshrl.u32 %v1673, 7
  %v1675 = vsub.s32 %v1672, %v1674
  %v1676 = vrot.slane %v1668, %v1675
  %1678 = vset.pattern.permute.xlu0 0
  %1679 = vperm.xlu0 %1678, %v279
  %v1680 = vpop.permute.xlu0 %1679
  %v1683 = vunpack.c.l.s4 839922192
  %v1684 = vunpack.c.0.s8 %v1683
  %v1685 = vlaneseq
  %v1686 = vshrl.u32 %v1685, 7
  %v1687 = vsub.s32 %v1684, %v1686
  %v1688 = vrot.slane %v1680, %v1687
  %1690 = vset.pattern.permute.xlu0 0
  %1691 = vperm.xlu0 %1690, %v280
  %v1692 = vpop.permute.xlu0 %1691
  %v1695 = vunpack.c.l.s4 839922192
  %v1696 = vunpack.c.0.s8 %v1695
  %v1697 = vlaneseq
  %v1698 = vshrl.u32 %v1697, 7
  %v1699 = vsub.s32 %v1696, %v1698
  %v1700 = vrot.slane %v1692, %v1699
  %1702 = vset.pattern.permute.xlu0 0
  %1703 = vperm.xlu0 %1702, %v281
  %v1704 = vpop.permute.xlu0 %1703
  %v1707 = vunpack.c.l.s4 839922192
  %v1708 = vunpack.c.0.s8 %v1707
  %v1709 = vlaneseq
  %v1710 = vshrl.u32 %v1709, 7
  %v1711 = vsub.s32 %v1708, %v1710
  %v1712 = vrot.slane %v1704, %v1711
  %1714 = vset.pattern.permute.xlu0 0
  %1715 = vperm.xlu0 %1714, %v282
  %v1716 = vpop.permute.xlu0 %1715
  %v1719 = vunpack.c.l.s4 839922192
  %v1720 = vunpack.c.0.s8 %v1719
  %v1721 = vlaneseq
  %v1722 = vshrl.u32 %v1721, 7
  %v1723 = vsub.s32 %v1720, %v1722
  %v1724 = vrot.slane %v1716, %v1723
  %1726 = vset.pattern.permute.xlu0 0
  %1727 = vperm.xlu0 %1726, %v283
  %v1728 = vpop.permute.xlu0 %1727
  %v1731 = vunpack.c.l.s4 839922192
  %v1732 = vunpack.c.0.s8 %v1731
  %v1733 = vlaneseq
  %v1734 = vshrl.u32 %v1733, 7
  %v1735 = vsub.s32 %v1732, %v1734
  %v1736 = vrot.slane %v1728, %v1735
  %1738 = vset.pattern.permute.xlu0 0
  %1739 = vperm.xlu0 %1738, %v284
  %v1740 = vpop.permute.xlu0 %1739
  %v1743 = vunpack.c.l.s4 839922192
  %v1744 = vunpack.c.0.s8 %v1743
  %v1745 = vlaneseq
  %v1746 = vshrl.u32 %v1745, 7
  %v1747 = vsub.s32 %v1744, %v1746
  %v1748 = vrot.slane %v1740, %v1747
  %1750 = vset.pattern.permute.xlu0 0
  %1751 = vperm.xlu0 %1750, %v285
  %v1752 = vpop.permute.xlu0 %1751
  %v1755 = vunpack.c.l.s4 839922192
  %v1756 = vunpack.c.0.s8 %v1755
  %v1757 = vlaneseq
  %v1758 = vshrl.u32 %v1757, 7
  %v1759 = vsub.s32 %v1756, %v1758
  %v1760 = vrot.slane %v1752, %v1759
  %1762 = vset.pattern.permute.xlu0 0
  %1763 = vperm.xlu0 %1762, %v286
  %v1764 = vpop.permute.xlu0 %1763
  %v1767 = vunpack.c.l.s4 839922192
  %v1768 = vunpack.c.0.s8 %v1767
  %v1769 = vlaneseq
  %v1770 = vshrl.u32 %v1769, 7
  %v1771 = vsub.s32 %v1768, %v1770
  %v1772 = vrot.slane %v1764, %v1771
  %1774 = vset.pattern.permute.xlu0 0
  %1775 = vperm.xlu0 %1774, %v287
  %v1776 = vpop.permute.xlu0 %1775
  %v1779 = vunpack.c.l.s4 839922192
  %v1780 = vunpack.c.0.s8 %v1779
  %v1781 = vlaneseq
  %v1782 = vshrl.u32 %v1781, 7
  %v1783 = vsub.s32 %v1780, %v1782
  %v1784 = vrot.slane %v1776, %v1783
  %1786 = vset.pattern.permute.xlu0 0
  %1787 = vperm.xlu0 %1786, %v288
  %v1788 = vpop.permute.xlu0 %1787
  %v1791 = vunpack.c.l.s4 839922192
  %v1792 = vunpack.c.0.s8 %v1791
  %v1793 = vlaneseq
  %v1794 = vshrl.u32 %v1793, 7
  %v1795 = vsub.s32 %v1792, %v1794
  %v1796 = vrot.slane %v1788, %v1795
  %1798 = vset.pattern.permute.xlu0 0
  %1799 = vperm.xlu0 %1798, %v289
  %v1800 = vpop.permute.xlu0 %1799
  %v1803 = vunpack.c.l.s4 839922192
  %v1804 = vunpack.c.0.s8 %v1803
  %v1805 = vlaneseq
  %v1806 = vshrl.u32 %v1805, 7
  %v1807 = vsub.s32 %v1804, %v1806
  %v1808 = vrot.slane %v1800, %v1807
  %1810 = vset.pattern.permute.xlu0 0
  %1811 = vperm.xlu0 %1810, %v290
  %v1812 = vpop.permute.xlu0 %1811
  %v1815 = vunpack.c.l.s4 839922192
  %v1816 = vunpack.c.0.s8 %v1815
  %v1817 = vlaneseq
  %v1818 = vshrl.u32 %v1817, 7
  %v1819 = vsub.s32 %v1816, %v1818
  %v1820 = vrot.slane %v1812, %v1819
  %1822 = vset.pattern.permute.xlu0 0
  %1823 = vperm.xlu0 %1822, %v291
  %v1824 = vpop.permute.xlu0 %1823
  %v1827 = vunpack.c.l.s4 839922192
  %v1828 = vunpack.c.0.s8 %v1827
  %v1829 = vlaneseq
  %v1830 = vshrl.u32 %v1829, 7
  %v1831 = vsub.s32 %v1828, %v1830
  %v1832 = vrot.slane %v1824, %v1831
  %1834 = vset.pattern.permute.xlu0 0
  %1835 = vperm.xlu0 %1834, %v292
  %v1836 = vpop.permute.xlu0 %1835
  %v1839 = vunpack.c.l.s4 839922192
  %v1840 = vunpack.c.0.s8 %v1839
  %v1841 = vlaneseq
  %v1842 = vshrl.u32 %v1841, 7
  %v1843 = vsub.s32 %v1840, %v1842
  %v1844 = vrot.slane %v1836, %v1843
  %1846 = vset.pattern.permute.xlu0 0
  %1847 = vperm.xlu0 %1846, %v293
  %v1848 = vpop.permute.xlu0 %1847
  %v1851 = vunpack.c.l.s4 839922192
  %v1852 = vunpack.c.0.s8 %v1851
  %v1853 = vlaneseq
  %v1854 = vshrl.u32 %v1853, 7
  %v1855 = vsub.s32 %v1852, %v1854
  %v1856 = vrot.slane %v1848, %v1855
  %1858 = vset.pattern.permute.xlu0 0
  %1859 = vperm.xlu0 %1858, %v294
  %v1860 = vpop.permute.xlu0 %1859
  %v1863 = vunpack.c.l.s4 839922192
  %v1864 = vunpack.c.0.s8 %v1863
  %v1865 = vlaneseq
  %v1866 = vshrl.u32 %v1865, 7
  %v1867 = vsub.s32 %v1864, %v1866
  %v1868 = vrot.slane %v1860, %v1867
  %1870 = vset.pattern.permute.xlu0 0
  %1871 = vperm.xlu0 %1870, %v295
  %v1872 = vpop.permute.xlu0 %1871
  %v1875 = vunpack.c.l.s4 839922192
  %v1876 = vunpack.c.0.s8 %v1875
  %v1877 = vlaneseq
  %v1878 = vshrl.u32 %v1877, 7
  %v1879 = vsub.s32 %v1876, %v1878
  %v1880 = vrot.slane %v1872, %v1879
  %1882 = vset.pattern.permute.xlu0 0
  %1883 = vperm.xlu0 %1882, %v296
  %v1884 = vpop.permute.xlu0 %1883
  %v1887 = vunpack.c.l.s4 839922192
  %v1888 = vunpack.c.0.s8 %v1887
  %v1889 = vlaneseq
  %v1890 = vshrl.u32 %v1889, 7
  %v1891 = vsub.s32 %v1888, %v1890
  %v1892 = vrot.slane %v1884, %v1891
  %1894 = vset.pattern.permute.xlu0 0
  %1895 = vperm.xlu0 %1894, %v297
  %v1896 = vpop.permute.xlu0 %1895
  %v1899 = vunpack.c.l.s4 839922192
  %v1900 = vunpack.c.0.s8 %v1899
  %v1901 = vlaneseq
  %v1902 = vshrl.u32 %v1901, 7
  %v1903 = vsub.s32 %v1900, %v1902
  %v1904 = vrot.slane %v1896, %v1903
  %1906 = vset.pattern.permute.xlu0 0
  %1907 = vperm.xlu0 %1906, %v298
  %v1908 = vpop.permute.xlu0 %1907
  %v1911 = vunpack.c.l.s4 839922192
  %v1912 = vunpack.c.0.s8 %v1911
  %v1913 = vlaneseq
  %v1914 = vshrl.u32 %v1913, 7
  %v1915 = vsub.s32 %v1912, %v1914
  %v1916 = vrot.slane %v1908, %v1915
  %1918 = vset.pattern.permute.xlu0 0
  %1919 = vperm.xlu0 %1918, %v299
  %v1920 = vpop.permute.xlu0 %1919
  %v1923 = vunpack.c.l.s4 839922192
  %v1924 = vunpack.c.0.s8 %v1923
  %v1925 = vlaneseq
  %v1926 = vshrl.u32 %v1925, 7
  %v1927 = vsub.s32 %v1924, %v1926
  %v1928 = vrot.slane %v1920, %v1927
  %1930 = vset.pattern.permute.xlu0 0
  %1931 = vperm.xlu0 %1930, %v300
  %v1932 = vpop.permute.xlu0 %1931
  %v1935 = vunpack.c.l.s4 839922192
  %v1936 = vunpack.c.0.s8 %v1935
  %v1937 = vlaneseq
  %v1938 = vshrl.u32 %v1937, 7
  %v1939 = vsub.s32 %v1936, %v1938
  %v1940 = vrot.slane %v1932, %v1939
  %1942 = vset.pattern.permute.xlu0 0
  %1943 = vperm.xlu0 %1942, %v301
  %v1944 = vpop.permute.xlu0 %1943
  %v1947 = vunpack.c.l.s4 839922192
  %v1948 = vunpack.c.0.s8 %v1947
  %v1949 = vlaneseq
  %v1950 = vshrl.u32 %v1949, 7
  %v1951 = vsub.s32 %v1948, %v1950
  %v1952 = vrot.slane %v1944, %v1951
  %1954 = vset.pattern.permute.xlu0 0
  %1955 = vperm.xlu0 %1954, %v302
  %v1956 = vpop.permute.xlu0 %1955
  %v1959 = vunpack.c.l.s4 839922192
  %v1960 = vunpack.c.0.s8 %v1959
  %v1961 = vlaneseq
  %v1962 = vshrl.u32 %v1961, 7
  %v1963 = vsub.s32 %v1960, %v1962
  %v1964 = vrot.slane %v1956, %v1963
  %1966 = vset.pattern.permute.xlu0 0
  %1967 = vperm.xlu0 %1966, %v303
  %v1968 = vpop.permute.xlu0 %1967
  %v1971 = vunpack.c.l.s4 839922192
  %v1972 = vunpack.c.0.s8 %v1971
  %v1973 = vlaneseq
  %v1974 = vshrl.u32 %v1973, 7
  %v1975 = vsub.s32 %v1972, %v1974
  %v1976 = vrot.slane %v1968, %v1975
  %1978 = vset.pattern.permute.xlu0 0
  %1979 = vperm.xlu0 %1978, %v304
  %v1980 = vpop.permute.xlu0 %1979
  %v1983 = vunpack.c.l.s4 839922192
  %v1984 = vunpack.c.0.s8 %v1983
  %v1985 = vlaneseq
  %v1986 = vshrl.u32 %v1985, 7
  %v1987 = vsub.s32 %v1984, %v1986
  %v1988 = vrot.slane %v1980, %v1987
  %1990 = vset.pattern.permute.xlu0 0
  %1991 = vperm.xlu0 %1990, %v305
  %v1992 = vpop.permute.xlu0 %1991
  %v1995 = vunpack.c.l.s4 839922192
  %v1996 = vunpack.c.0.s8 %v1995
  %v1997 = vlaneseq
  %v1998 = vshrl.u32 %v1997, 7
  %v1999 = vsub.s32 %v1996, %v1998
  %v2000 = vrot.slane %v1992, %v1999
  %2002 = vset.pattern.permute.xlu0 0
  %2003 = vperm.xlu0 %2002, %v306
  %v2004 = vpop.permute.xlu0 %2003
  %v2007 = vunpack.c.l.s4 839922192
  %v2008 = vunpack.c.0.s8 %v2007
  %v2009 = vlaneseq
  %v2010 = vshrl.u32 %v2009, 7
  %v2011 = vsub.s32 %v2008, %v2010
  %v2012 = vrot.slane %v2004, %v2011
  %2014 = vset.pattern.permute.xlu0 0
  %2015 = vperm.xlu0 %2014, %v307
  %v2016 = vpop.permute.xlu0 %2015
  %v2019 = vunpack.c.l.s4 839922192
  %v2020 = vunpack.c.0.s8 %v2019
  %v2021 = vlaneseq
  %v2022 = vshrl.u32 %v2021, 7
  %v2023 = vsub.s32 %v2020, %v2022
  %v2024 = vrot.slane %v2016, %v2023
  %2026 = vset.pattern.permute.xlu0 0
  %2027 = vperm.xlu0 %2026, %v308
  %v2028 = vpop.permute.xlu0 %2027
  %v2031 = vunpack.c.l.s4 839922192
  %v2032 = vunpack.c.0.s8 %v2031
  %v2033 = vlaneseq
  %v2034 = vshrl.u32 %v2033, 7
  %v2035 = vsub.s32 %v2032, %v2034
  %v2036 = vrot.slane %v2028, %v2035
  %v2037 = vmul.bf16 %v21, %v320
  %v2038 = vmul.bf16 %v22, %v332
  %v2039 = vmul.bf16 %v23, %v344
  %v2040 = vmul.bf16 %v24, %v356
  %v2041 = vmul.bf16 %v25, %v368
  %v2042 = vmul.bf16 %v26, %v380
  %v2043 = vmul.bf16 %v27, %v392
  %v2044 = vmul.bf16 %v28, %v404
  %v2045 = vmul.bf16 %v29, %v416
  %v2046 = vmul.bf16 %v30, %v428
  %v2047 = vmul.bf16 %v31, %v440
  %v2048 = vmul.bf16 %v32, %v452
  %v2049 = vmul.bf16 %v33, %v464
  %v2050 = vmul.bf16 %v34, %v476
  %v2051 = vmul.bf16 %v35, %v488
  %v2052 = vmul.bf16 %v36, %v500
  %v2053 = vmul.bf16 %v37, %v512
  %v2054 = vmul.bf16 %v38, %v524
  %v2055 = vmul.bf16 %v39, %v536
  %v2056 = vmul.bf16 %v40, %v548
  %v2057 = vmul.bf16 %v41, %v560
  %v2058 = vmul.bf16 %v42, %v572
  %v2059 = vmul.bf16 %v43, %v584
  %v2060 = vmul.bf16 %v44, %v596
  %v2061 = vmul.bf16 %v45, %v608
  %v2062 = vmul.bf16 %v46, %v620
  %v2063 = vmul.bf16 %v47, %v632
  %v2064 = vmul.bf16 %v48, %v644
  %v2065 = vmul.bf16 %v49, %v656
  %v2066 = vmul.bf16 %v50, %v668
  %v2067 = vmul.bf16 %v51, %v680
  %v2068 = vmul.bf16 %v52, %v692
  %v2069 = vmul.bf16 %v53, %v704
  %v2070 = vmul.bf16 %v54, %v716
  %v2071 = vmul.bf16 %v55, %v728
  %v2072 = vmul.bf16 %v56, %v740
  %v2073 = vmul.bf16 %v57, %v752
  %v2074 = vmul.bf16 %v58, %v764
  %v2075 = vmul.bf16 %v59, %v776
  %v2076 = vmul.bf16 %v60, %v788
  %v2077 = vmul.bf16 %v61, %v800
  %v2078 = vmul.bf16 %v62, %v812
  %v2079 = vmul.bf16 %v63, %v824
  %v2080 = vmul.bf16 %v64, %v836
  %v2081 = vmul.bf16 %v65, %v848
  %v2082 = vmul.bf16 %v66, %v860
  %v2083 = vmul.bf16 %v67, %v872
  %v2084 = vmul.bf16 %v68, %v884
  %v2085 = vmul.bf16 %v69, %v896
  %v2086 = vmul.bf16 %v70, %v908
  %v2087 = vmul.bf16 %v71, %v920
  %v2088 = vmul.bf16 %v72, %v932
  %v2089 = vmul.bf16 %v73, %v944
  %v2090 = vmul.bf16 %v74, %v956
  %v2091 = vmul.bf16 %v75, %v968
  %v2092 = vmul.bf16 %v76, %v980
  %v2093 = vmul.bf16 %v77, %v992
  %v2094 = vmul.bf16 %v78, %v1004
  %v2095 = vmul.bf16 %v79, %v1016
  %v2096 = vmul.bf16 %v80, %v1028
  %v2097 = vmul.bf16 %v81, %v1040
  %v2098 = vmul.bf16 %v82, %v1052
  %v2099 = vmul.bf16 %v83, %v1064
  %v2100 = vmul.bf16 %v84, %v1076
  %v2101 = vmul.bf16 %v85, %v1088
  %v2102 = vmul.bf16 %v86, %v1100
  %v2103 = vmul.bf16 %v87, %v1112
  %v2104 = vmul.bf16 %v88, %v1124
  %v2105 = vmul.bf16 %v89, %v1136
  %v2106 = vmul.bf16 %v90, %v1148
  %v2107 = vmul.bf16 %v91, %v1160
  %v2108 = vmul.bf16 %v92, %v1172
  %v2109 = vmul.bf16 %v93, %v1184
  %v2110 = vmul.bf16 %v94, %v1196
  %v2111 = vmul.bf16 %v95, %v1208
  %v2112 = vmul.bf16 %v96, %v1220
  %v2113 = vmul.bf16 %v97, %v1232
  %v2114 = vmul.bf16 %v98, %v1244
  %v2115 = vmul.bf16 %v99, %v1256
  %v2116 = vmul.bf16 %v100, %v1268
  %v2117 = vmul.bf16 %v101, %v1280
  %v2118 = vmul.bf16 %v102, %v1292
  %v2119 = vmul.bf16 %v103, %v1304
  %v2120 = vmul.bf16 %v104, %v1316
  %v2121 = vmul.bf16 %v105, %v1328
  %v2122 = vmul.bf16 %v106, %v1340
  %v2123 = vmul.bf16 %v107, %v1352
  %v2124 = vmul.bf16 %v108, %v1364
  %v2125 = vmul.bf16 %v109, %v1376
  %v2126 = vmul.bf16 %v110, %v1388
  %v2127 = vmul.bf16 %v111, %v1400
  %v2128 = vmul.bf16 %v112, %v1412
  %v2129 = vmul.bf16 %v113, %v1424
  %v2130 = vmul.bf16 %v114, %v1436
  %v2131 = vmul.bf16 %v115, %v1448
  %v2132 = vmul.bf16 %v116, %v1460
  %v2133 = vmul.bf16 %v117, %v1472
  %v2134 = vmul.bf16 %v118, %v1484
  %v2135 = vmul.bf16 %v119, %v1496
  %v2136 = vmul.bf16 %v120, %v1508
  %v2137 = vmul.bf16 %v121, %v1520
  %v2138 = vmul.bf16 %v122, %v1532
  %v2139 = vmul.bf16 %v123, %v1544
  %v2140 = vmul.bf16 %v124, %v1556
  %v2141 = vmul.bf16 %v125, %v1568
  %v2142 = vmul.bf16 %v126, %v1580
  %v2143 = vmul.bf16 %v127, %v1592
  %v2144 = vmul.bf16 %v128, %v1604
  %v2145 = vmul.bf16 %v129, %v1616
  %v2146 = vmul.bf16 %v130, %v1628
  %v2147 = vmul.bf16 %v131, %v1640
  %v2148 = vmul.bf16 %v132, %v1652
  %v2149 = vmul.bf16 %v133, %v1664
  %v2150 = vmul.bf16 %v134, %v1676
  %v2151 = vmul.bf16 %v135, %v1688
  %v2152 = vmul.bf16 %v136, %v1700
  %v2153 = vmul.bf16 %v137, %v1712
  %v2154 = vmul.bf16 %v138, %v1724
  %v2155 = vmul.bf16 %v139, %v1736
  %v2156 = vmul.bf16 %v140, %v1748
  %v2157 = vmul.bf16 %v141, %v1760
  %v2158 = vmul.bf16 %v142, %v1772
  %v2159 = vmul.bf16 %v143, %v1784
  %v2160 = vmul.bf16 %v144, %v1796
  %v2161 = vmul.bf16 %v145, %v1808
  %v2162 = vmul.bf16 %v146, %v1820
  %v2163 = vmul.bf16 %v147, %v1832
  %v2164 = vmul.bf16 %v148, %v1844
  %v2165 = vmul.bf16 %v149, %v1856
  %v2166 = vmul.bf16 %v150, %v1868
  %v2167 = vmul.bf16 %v151, %v1880
  %v2168 = vmul.bf16 %v152, %v1892
  %v2169 = vmul.bf16 %v153, %v1904
  %v2170 = vmul.bf16 %v154, %v1916
  %v2171 = vmul.bf16 %v155, %v1928
  %v2172 = vmul.bf16 %v156, %v1940
  %v2173 = vmul.bf16 %v157, %v1952
  %v2174 = vmul.bf16 %v158, %v1964
  %v2175 = vmul.bf16 %v159, %v1976
  %v2176 = vmul.bf16 %v160, %v1988
  %v2177 = vmul.bf16 %v161, %v2000
  %v2178 = vmul.bf16 %v162, %v2012
  %v2179 = vmul.bf16 %v163, %v2024
  %v2180 = vmul.bf16 %v164, %v2036
  %v2181 = vld [vmem:[%s2] sm:$0xff]
  %v2182 = vld [vmem:[%s2 + $0x8] sm:$0xff]
  %v2183 = vld [vmem:[%s2 + $0x10] sm:$0xff]
  %v2184 = vld [vmem:[%s2 + $0x18] sm:$0xff]
  %v2185 = vld [vmem:[%s2 + $0x20] sm:$0xf]
  %v2186 = vld [vmem:[%s2 + $0x24] sm:$0xff]
  %v2187 = vld [vmem:[%s2 + $0x2c] sm:$0xff]
  %v2188 = vld [vmem:[%s2 + $0x34] sm:$0xff]
  %v2189 = vld [vmem:[%s2 + $0x3c] sm:$0xff]
  %v2190 = vld [vmem:[%s2 + $0x44] sm:$0xf]
  %v2191 = vld [vmem:[%s2 + $0x48] sm:$0xff]
  %v2192 = vld [vmem:[%s2 + $0x50] sm:$0xff]
  %v2193 = vld [vmem:[%s2 + $0x58] sm:$0xff]
  %v2194 = vld [vmem:[%s2 + $0x60] sm:$0xff]
  %v2195 = vld [vmem:[%s2 + $0x68] sm:$0xf]
  %v2196 = vld [vmem:[%s2 + $0x6c] sm:$0xff]
  %v2197 = vld [vmem:[%s2 + $0x74] sm:$0xff]
  %v2198 = vld [vmem:[%s2 + $0x7c] sm:$0xff]
  %v2199 = vld [vmem:[%s2 + $0x84] sm:$0xff]
  %v2200 = vld [vmem:[%s2 + $0x8c] sm:$0xf]
  %v2201 = vld [vmem:[%s2 + $0x90] sm:$0xff]
  %v2202 = vld [vmem:[%s2 + $0x98] sm:$0xff]
  %v2203 = vld [vmem:[%s2 + $0xa0] sm:$0xff]
  %v2204 = vld [vmem:[%s2 + $0xa8] sm:$0xff]
  %v2205 = vld [vmem:[%s2 + $0xb0] sm:$0xf]
  %v2206 = vld [vmem:[%s2 + $0xb4] sm:$0xff]
  %v2207 = vld [vmem:[%s2 + $0xbc] sm:$0xff]
  %v2208 = vld [vmem:[%s2 + $0xc4] sm:$0xff]
  %v2209 = vld [vmem:[%s2 + $0xcc] sm:$0xff]
  %v2210 = vld [vmem:[%s2 + $0xd4] sm:$0xf]
  %v2211 = vld [vmem:[%s2 + $0xd8] sm:$0xff]
  %v2212 = vld [vmem:[%s2 + $0xe0] sm:$0xff]
  %v2213 = vld [vmem:[%s2 + $0xe8] sm:$0xff]
  %v2214 = vld [vmem:[%s2 + $0xf0] sm:$0xff]
  %v2215 = vld [vmem:[%s2 + $0xf8] sm:$0xf]
  %v2216 = vld [vmem:[%s2 + $0xfc] sm:$0xff]
  %v2217 = vld [vmem:[%s2 + $0x104] sm:$0xff]
  %v2218 = vld [vmem:[%s2 + $0x10c] sm:$0xff]
  %v2219 = vld [vmem:[%s2 + $0x114] sm:$0xff]
  %v2220 = vld [vmem:[%s2 + $0x11c] sm:$0xf]
  %v2221 = vld [vmem:[%s2 + $0x120] sm:$0xff]
  %v2222 = vld [vmem:[%s2 + $0x128] sm:$0xff]
  %v2223 = vld [vmem:[%s2 + $0x130] sm:$0xff]
  %v2224 = vld [vmem:[%s2 + $0x138] sm:$0xff]
  %v2225 = vld [vmem:[%s2 + $0x140] sm:$0xf]
  %v2226 = vld [vmem:[%s2 + $0x144] sm:$0xff]
  %v2227 = vld [vmem:[%s2 + $0x14c] sm:$0xff]
  %v2228 = vld [vmem:[%s2 + $0x154] sm:$0xff]
  %v2229 = vld [vmem:[%s2 + $0x15c] sm:$0xff]
  %v2230 = vld [vmem:[%s2 + $0x164] sm:$0xf]
  %v2231 = vld [vmem:[%s2 + $0x168] sm:$0xff]
  %v2232 = vld [vmem:[%s2 + $0x170] sm:$0xff]
  %v2233 = vld [vmem:[%s2 + $0x178] sm:$0xff]
  %v2234 = vld [vmem:[%s2 + $0x180] sm:$0xff]
  %v2235 = vld [vmem:[%s2 + $0x188] sm:$0xf]
  %v2236 = vld [vmem:[%s2 + $0x18c] sm:$0xff]
  %v2237 = vld [vmem:[%s2 + $0x194] sm:$0xff]
  %v2238 = vld [vmem:[%s2 + $0x19c] sm:$0xff]
  %v2239 = vld [vmem:[%s2 + $0x1a4] sm:$0xff]
  %v2240 = vld [vmem:[%s2 + $0x1ac] sm:$0xf]
  %v2241 = vld [vmem:[%s2 + $0x1b0] sm:$0xff]
  %v2242 = vld [vmem:[%s2 + $0x1b8] sm:$0xff]
  %v2243 = vld [vmem:[%s2 + $0x1c0] sm:$0xff]
  %v2244 = vld [vmem:[%s2 + $0x1c8] sm:$0xff]
  %v2245 = vld [vmem:[%s2 + $0x1d0] sm:$0xf]
  %v2246 = vld [vmem:[%s2 + $0x1d4] sm:$0xff]
  %v2247 = vld [vmem:[%s2 + $0x1dc] sm:$0xff]
  %v2248 = vld [vmem:[%s2 + $0x1e4] sm:$0xff]
  %v2249 = vld [vmem:[%s2 + $0x1ec] sm:$0xff]
  %v2250 = vld [vmem:[%s2 + $0x1f4] sm:$0xf]
  %v2251 = vld [vmem:[%s2 + $0x1f8] sm:$0xff]
  %v2252 = vld [vmem:[%s2 + $0x200] sm:$0xff]
  %v2253 = vld [vmem:[%s2 + $0x208] sm:$0xff]
  %v2254 = vld [vmem:[%s2 + $0x210] sm:$0xff]
  %v2255 = vld [vmem:[%s2 + $0x218] sm:$0xf]
  %v2256 = vld [vmem:[%s2 + $0x21c] sm:$0xff]
  %v2257 = vld [vmem:[%s2 + $0x224] sm:$0xff]
  %v2258 = vld [vmem:[%s2 + $0x22c] sm:$0xff]
  %v2259 = vld [vmem:[%s2 + $0x234] sm:$0xff]
  %v2260 = vld [vmem:[%s2 + $0x23c] sm:$0xf]
  %v2261 = vld [vmem:[%s2 + $0x240] sm:$0xff]
  %v2262 = vld [vmem:[%s2 + $0x248] sm:$0xff]
  %v2263 = vld [vmem:[%s2 + $0x250] sm:$0xff]
  %v2264 = vld [vmem:[%s2 + $0x258] sm:$0xff]
  %v2265 = vld [vmem:[%s2 + $0x260] sm:$0xf]
  %v2266 = vld [vmem:[%s2 + $0x264] sm:$0xff]
  %v2267 = vld [vmem:[%s2 + $0x26c] sm:$0xff]
  %v2268 = vld [vmem:[%s2 + $0x274] sm:$0xff]
  %v2269 = vld [vmem:[%s2 + $0x27c] sm:$0xff]
  %v2270 = vld [vmem:[%s2 + $0x284] sm:$0xf]
  %v2271 = vld [vmem:[%s2 + $0x288] sm:$0xff]
  %v2272 = vld [vmem:[%s2 + $0x290] sm:$0xff]
  %v2273 = vld [vmem:[%s2 + $0x298] sm:$0xff]
  %v2274 = vld [vmem:[%s2 + $0x2a0] sm:$0xff]
  %v2275 = vld [vmem:[%s2 + $0x2a8] sm:$0xf]
  %v2276 = vld [vmem:[%s2 + $0x2ac] sm:$0xff]
  %v2277 = vld [vmem:[%s2 + $0x2b4] sm:$0xff]
  %v2278 = vld [vmem:[%s2 + $0x2bc] sm:$0xff]
  %v2279 = vld [vmem:[%s2 + $0x2c4] sm:$0xff]
  %v2280 = vld [vmem:[%s2 + $0x2cc] sm:$0xf]
  %v2281 = vld [vmem:[%s2 + $0x2d0] sm:$0xff]
  %v2282 = vld [vmem:[%s2 + $0x2d8] sm:$0xff]
  %v2283 = vld [vmem:[%s2 + $0x2e0] sm:$0xff]
  %v2284 = vld [vmem:[%s2 + $0x2e8] sm:$0xff]
  %v2285 = vld [vmem:[%s2 + $0x2f0] sm:$0xf]
  %v2286 = vld [vmem:[%s2 + $0x2f4] sm:$0xff]
  %v2287 = vld [vmem:[%s2 + $0x2fc] sm:$0xff]
  %v2288 = vld [vmem:[%s2 + $0x304] sm:$0xff]
  %v2289 = vld [vmem:[%s2 + $0x30c] sm:$0xff]
  %v2290 = vld [vmem:[%s2 + $0x314] sm:$0xf]
  %v2291 = vld [vmem:[%s2 + $0x318] sm:$0xff]
  %v2292 = vld [vmem:[%s2 + $0x320] sm:$0xff]
  %v2293 = vld [vmem:[%s2 + $0x328] sm:$0xff]
  %v2294 = vld [vmem:[%s2 + $0x330] sm:$0xff]
  %v2295 = vld [vmem:[%s2 + $0x338] sm:$0xf]
  %v2296 = vld [vmem:[%s2 + $0x33c] sm:$0xff]
  %v2297 = vld [vmem:[%s2 + $0x344] sm:$0xff]
  %v2298 = vld [vmem:[%s2 + $0x34c] sm:$0xff]
  %v2299 = vld [vmem:[%s2 + $0x354] sm:$0xff]
  %v2300 = vld [vmem:[%s2 + $0x35c] sm:$0xf]
  %v2421 = vunpack.c.l.b16 %v2181
  %v2422 = vunpack.c.h.b16 %v2181
  %v2423 = vunpack.c.l.b16 %v2182
  %v2424 = vunpack.c.h.b16 %v2182
  %v2425 = vunpack.c.l.b16 %v2183
  %v2426 = vunpack.c.h.b16 %v2183
  %v2427 = vunpack.c.l.b16 %v2184
  %v2428 = vunpack.c.h.b16 %v2184
  %v2429 = vunpack.c.l.b16 %v2185
  %v2430 = vunpack.c.l.b16 %v2186
  %v2431 = vunpack.c.h.b16 %v2186
  %v2432 = vunpack.c.l.b16 %v2187
  %v2433 = vunpack.c.h.b16 %v2187
  %v2434 = vunpack.c.l.b16 %v2188
  %v2435 = vunpack.c.h.b16 %v2188
  %v2436 = vunpack.c.l.b16 %v2189
  %v2437 = vunpack.c.h.b16 %v2189
  %v2438 = vunpack.c.l.b16 %v2190
  %v2439 = vunpack.c.l.b16 %v2191
  %v2440 = vunpack.c.h.b16 %v2191
  %v2441 = vunpack.c.l.b16 %v2192
  %v2442 = vunpack.c.h.b16 %v2192
  %v2443 = vunpack.c.l.b16 %v2193
  %v2444 = vunpack.c.h.b16 %v2193
  %v2445 = vunpack.c.l.b16 %v2194
  %v2446 = vunpack.c.h.b16 %v2194
  %v2447 = vunpack.c.l.b16 %v2195
  %v2448 = vunpack.c.l.b16 %v2196
  %v2449 = vunpack.c.h.b16 %v2196
  %v2450 = vunpack.c.l.b16 %v2197
  %v2451 = vunpack.c.h.b16 %v2197
  %v2452 = vunpack.c.l.b16 %v2198
  %v2453 = vunpack.c.h.b16 %v2198
  %v2454 = vunpack.c.l.b16 %v2199
  %v2455 = vunpack.c.h.b16 %v2199
  %v2456 = vunpack.c.l.b16 %v2200
  %v2457 = vunpack.c.l.b16 %v2201
  %v2458 = vunpack.c.h.b16 %v2201
  %v2459 = vunpack.c.l.b16 %v2202
  %v2460 = vunpack.c.h.b16 %v2202
  %v2461 = vunpack.c.l.b16 %v2203
  %v2462 = vunpack.c.h.b16 %v2203
  %v2463 = vunpack.c.l.b16 %v2204
  %v2464 = vunpack.c.h.b16 %v2204
  %v2465 = vunpack.c.l.b16 %v2205
  %v2466 = vunpack.c.l.b16 %v2206
  %v2467 = vunpack.c.h.b16 %v2206
  %v2468 = vunpack.c.l.b16 %v2207
  %v2469 = vunpack.c.h.b16 %v2207
  %v2470 = vunpack.c.l.b16 %v2208
  %v2471 = vunpack.c.h.b16 %v2208
  %v2472 = vunpack.c.l.b16 %v2209
  %v2473 = vunpack.c.h.b16 %v2209
  %v2474 = vunpack.c.l.b16 %v2210
  %v2475 = vunpack.c.l.b16 %v2211
  %v2476 = vunpack.c.h.b16 %v2211
  %v2477 = vunpack.c.l.b16 %v2212
  %v2478 = vunpack.c.h.b16 %v2212
  %v2479 = vunpack.c.l.b16 %v2213
  %v2480 = vunpack.c.h.b16 %v2213
  %v2481 = vunpack.c.l.b16 %v2214
  %v2482 = vunpack.c.h.b16 %v2214
  %v2483 = vunpack.c.l.b16 %v2215
  %v2484 = vunpack.c.l.b16 %v2216
  %v2485 = vunpack.c.h.b16 %v2216
  %v2486 = vunpack.c.l.b16 %v2217
  %v2487 = vunpack.c.h.b16 %v2217
  %v2488 = vunpack.c.l.b16 %v2218
  %v2489 = vunpack.c.h.b16 %v2218
  %v2490 = vunpack.c.l.b16 %v2219
  %v2491 = vunpack.c.h.b16 %v2219
  %v2492 = vunpack.c.l.b16 %v2220
  %v2493 = vunpack.c.l.b16 %v2221
  %v2494 = vunpack.c.h.b16 %v2221
  %v2495 = vunpack.c.l.b16 %v2222
  %v2496 = vunpack.c.h.b16 %v2222
  %v2497 = vunpack.c.l.b16 %v2223
  %v2498 = vunpack.c.h.b16 %v2223
  %v2499 = vunpack.c.l.b16 %v2224
  %v2500 = vunpack.c.h.b16 %v2224
  %v2501 = vunpack.c.l.b16 %v2225
  %v2502 = vunpack.c.l.b16 %v2226
  %v2503 = vunpack.c.h.b16 %v2226
  %v2504 = vunpack.c.l.b16 %v2227
  %v2505 = vunpack.c.h.b16 %v2227
  %v2506 = vunpack.c.l.b16 %v2228
  %v2507 = vunpack.c.h.b16 %v2228
  %v2508 = vunpack.c.l.b16 %v2229
  %v2509 = vunpack.c.h.b16 %v2229
  %v2510 = vunpack.c.l.b16 %v2230
  %v2511 = vunpack.c.l.b16 %v2231
  %v2512 = vunpack.c.h.b16 %v2231
  %v2513 = vunpack.c.l.b16 %v2232
  %v2514 = vunpack.c.h.b16 %v2232
  %v2515 = vunpack.c.l.b16 %v2233
  %v2516 = vunpack.c.h.b16 %v2233
  %v2517 = vunpack.c.l.b16 %v2234
  %v2518 = vunpack.c.h.b16 %v2234
  %v2519 = vunpack.c.l.b16 %v2235
  %v2520 = vunpack.c.l.b16 %v2236
  %v2521 = vunpack.c.h.b16 %v2236
  %v2522 = vunpack.c.l.b16 %v2237
  %v2523 = vunpack.c.h.b16 %v2237
  %v2524 = vunpack.c.l.b16 %v2238
  %v2525 = vunpack.c.h.b16 %v2238
  %v2526 = vunpack.c.l.b16 %v2239
  %v2527 = vunpack.c.h.b16 %v2239
  %v2528 = vunpack.c.l.b16 %v2240
  %v2529 = vunpack.c.l.b16 %v2241
  %v2530 = vunpack.c.h.b16 %v2241
  %v2531 = vunpack.c.l.b16 %v2242
  %v2532 = vunpack.c.h.b16 %v2242
  %v2533 = vunpack.c.l.b16 %v2243
  %v2534 = vunpack.c.h.b16 %v2243
  %v2535 = vunpack.c.l.b16 %v2244
  %v2536 = vunpack.c.h.b16 %v2244
  %v2537 = vunpack.c.l.b16 %v2245
  %v2538 = vunpack.c.l.b16 %v2246
  %v2539 = vunpack.c.h.b16 %v2246
  %v2540 = vunpack.c.l.b16 %v2247
  %v2541 = vunpack.c.h.b16 %v2247
  %v2542 = vunpack.c.l.b16 %v2248
  %v2543 = vunpack.c.h.b16 %v2248
  %v2544 = vunpack.c.l.b16 %v2249
  %v2545 = vunpack.c.h.b16 %v2249
  %v2546 = vunpack.c.l.b16 %v2250
  %v2547 = vunpack.c.l.b16 %v2251
  %v2548 = vunpack.c.h.b16 %v2251
  %v2549 = vunpack.c.l.b16 %v2252
  %v2550 = vunpack.c.h.b16 %v2252
  %v2551 = vunpack.c.l.b16 %v2253
  %v2552 = vunpack.c.h.b16 %v2253
  %v2553 = vunpack.c.l.b16 %v2254
  %v2554 = vunpack.c.h.b16 %v2254
  %v2555 = vunpack.c.l.b16 %v2255
  %v2556 = vunpack.c.l.b16 %v2256
  %v2557 = vunpack.c.h.b16 %v2256
  %v2558 = vunpack.c.l.b16 %v2257
  %v2559 = vunpack.c.h.b16 %v2257
  %v2560 = vunpack.c.l.b16 %v2258
  %v2561 = vunpack.c.h.b16 %v2258
  %v2562 = vunpack.c.l.b16 %v2259
  %v2563 = vunpack.c.h.b16 %v2259
  %v2564 = vunpack.c.l.b16 %v2260
  %v2565 = vunpack.c.l.b16 %v2261
  %v2566 = vunpack.c.h.b16 %v2261
  %v2567 = vunpack.c.l.b16 %v2262
  %v2568 = vunpack.c.h.b16 %v2262
  %v2569 = vunpack.c.l.b16 %v2263
  %v2570 = vunpack.c.h.b16 %v2263
  %v2571 = vunpack.c.l.b16 %v2264
  %v2572 = vunpack.c.h.b16 %v2264
  %v2573 = vunpack.c.l.b16 %v2265
  %v2574 = vunpack.c.l.b16 %v2266
  %v2575 = vunpack.c.h.b16 %v2266
  %v2576 = vunpack.c.l.b16 %v2267
  %v2577 = vunpack.c.h.b16 %v2267
  %v2578 = vunpack.c.l.b16 %v2268
  %v2579 = vunpack.c.h.b16 %v2268
  %v2580 = vunpack.c.l.b16 %v2269
  %v2581 = vunpack.c.h.b16 %v2269
  %v2582 = vunpack.c.l.b16 %v2270
  %v2583 = vunpack.c.l.b16 %v2271
  %v2584 = vunpack.c.h.b16 %v2271
  %v2585 = vunpack.c.l.b16 %v2272
  %v2586 = vunpack.c.h.b16 %v2272
  %v2587 = vunpack.c.l.b16 %v2273
  %v2588 = vunpack.c.h.b16 %v2273
  %v2589 = vunpack.c.l.b16 %v2274
  %v2590 = vunpack.c.h.b16 %v2274
  %v2591 = vunpack.c.l.b16 %v2275
  %v2592 = vunpack.c.l.b16 %v2276
  %v2593 = vunpack.c.h.b16 %v2276
  %v2594 = vunpack.c.l.b16 %v2277
  %v2595 = vunpack.c.h.b16 %v2277
  %v2596 = vunpack.c.l.b16 %v2278
  %v2597 = vunpack.c.h.b16 %v2278
  %v2598 = vunpack.c.l.b16 %v2279
  %v2599 = vunpack.c.h.b16 %v2279
  %v2600 = vunpack.c.l.b16 %v2280
  %v2601 = vunpack.c.l.b16 %v2281
  %v2602 = vunpack.c.h.b16 %v2281
  %v2603 = vunpack.c.l.b16 %v2282
  %v2604 = vunpack.c.h.b16 %v2282
  %v2605 = vunpack.c.l.b16 %v2283
  %v2606 = vunpack.c.h.b16 %v2283
  %v2607 = vunpack.c.l.b16 %v2284
  %v2608 = vunpack.c.h.b16 %v2284
  %v2609 = vunpack.c.l.b16 %v2285
  %v2610 = vunpack.c.l.b16 %v2286
  %v2611 = vunpack.c.h.b16 %v2286
  %v2612 = vunpack.c.l.b16 %v2287
  %v2613 = vunpack.c.h.b16 %v2287
  %v2614 = vunpack.c.l.b16 %v2288
  %v2615 = vunpack.c.h.b16 %v2288
  %v2616 = vunpack.c.l.b16 %v2289
  %v2617 = vunpack.c.h.b16 %v2289
  %v2618 = vunpack.c.l.b16 %v2290
  %v2619 = vunpack.c.l.b16 %v2291
  %v2620 = vunpack.c.h.b16 %v2291
  %v2621 = vunpack.c.l.b16 %v2292
  %v2622 = vunpack.c.h.b16 %v2292
  %v2623 = vunpack.c.l.b16 %v2293
  %v2624 = vunpack.c.h.b16 %v2293
  %v2625 = vunpack.c.l.b16 %v2294
  %v2626 = vunpack.c.h.b16 %v2294
  %v2627 = vunpack.c.l.b16 %v2295
  %v2628 = vunpack.c.l.b16 %v2296
  %v2629 = vunpack.c.h.b16 %v2296
  %v2630 = vunpack.c.l.b16 %v2297
  %v2631 = vunpack.c.h.b16 %v2297
  %v2632 = vunpack.c.l.b16 %v2298
  %v2633 = vunpack.c.h.b16 %v2298
  %v2634 = vunpack.c.l.b16 %v2299
  %v2635 = vunpack.c.h.b16 %v2299
  %v2636 = vunpack.c.l.b16 %v2300
  %v2637 = vpack.c.b16 %v2430, %v2421
  %v2638 = vpack.c.b16 %v2431, %v2422
  %v2639 = vpack.c.b16 %v2432, %v2423
  %v2640 = vpack.c.b16 %v2433, %v2424
  %v2641 = vpack.c.b16 %v2434, %v2425
  %v2642 = vpack.c.b16 %v2435, %v2426
  %v2643 = vpack.c.b16 %v2436, %v2427
  %v2644 = vpack.c.b16 %v2437, %v2428
  %v2645 = vpack.c.b16 %v2438, %v2429
  %v2646 = vpack.c.b16 %v2448, %v2439
  %v2647 = vpack.c.b16 %v2449, %v2440
  %v2648 = vpack.c.b16 %v2450, %v2441
  %v2649 = vpack.c.b16 %v2451, %v2442
  %v2650 = vpack.c.b16 %v2452, %v2443
  %v2651 = vpack.c.b16 %v2453, %v2444
  %v2652 = vpack.c.b16 %v2454, %v2445
  %v2653 = vpack.c.b16 %v2455, %v2446
  %v2654 = vpack.c.b16 %v2456, %v2447
  %v2655 = vpack.c.b16 %v2466, %v2457
  %v2656 = vpack.c.b16 %v2467, %v2458
  %v2657 = vpack.c.b16 %v2468, %v2459
  %v2658 = vpack.c.b16 %v2469, %v2460
  %v2659 = vpack.c.b16 %v2470, %v2461
  %v2660 = vpack.c.b16 %v2471, %v2462
  %v2661 = vpack.c.b16 %v2472, %v2463
  %v2662 = vpack.c.b16 %v2473, %v2464
  %v2663 = vpack.c.b16 %v2474, %v2465
  %v2664 = vpack.c.b16 %v2484, %v2475
  %v2665 = vpack.c.b16 %v2485, %v2476
  %v2666 = vpack.c.b16 %v2486, %v2477
  %v2667 = vpack.c.b16 %v2487, %v2478
  %v2668 = vpack.c.b16 %v2488, %v2479
  %v2669 = vpack.c.b16 %v2489, %v2480
  %v2670 = vpack.c.b16 %v2490, %v2481
  %v2671 = vpack.c.b16 %v2491, %v2482
  %v2672 = vpack.c.b16 %v2492, %v2483
  %v2673 = vpack.c.b16 %v2502, %v2493
  %v2674 = vpack.c.b16 %v2503, %v2494
  %v2675 = vpack.c.b16 %v2504, %v2495
  %v2676 = vpack.c.b16 %v2505, %v2496
  %v2677 = vpack.c.b16 %v2506, %v2497
  %v2678 = vpack.c.b16 %v2507, %v2498
  %v2679 = vpack.c.b16 %v2508, %v2499
  %v2680 = vpack.c.b16 %v2509, %v2500
  %v2681 = vpack.c.b16 %v2510, %v2501
  %v2682 = vpack.c.b16 %v2520, %v2511
  %v2683 = vpack.c.b16 %v2521, %v2512
  %v2684 = vpack.c.b16 %v2522, %v2513
  %v2685 = vpack.c.b16 %v2523, %v2514
  %v2686 = vpack.c.b16 %v2524, %v2515
  %v2687 = vpack.c.b16 %v2525, %v2516
  %v2688 = vpack.c.b16 %v2526, %v2517
  %v2689 = vpack.c.b16 %v2527, %v2518
  %v2690 = vpack.c.b16 %v2528, %v2519
  %v2691 = vpack.c.b16 %v2538, %v2529
  %v2692 = vpack.c.b16 %v2539, %v2530
  %v2693 = vpack.c.b16 %v2540, %v2531
  %v2694 = vpack.c.b16 %v2541, %v2532
  %v2695 = vpack.c.b16 %v2542, %v2533
  %v2696 = vpack.c.b16 %v2543, %v2534
  %v2697 = vpack.c.b16 %v2544, %v2535
  %v2698 = vpack.c.b16 %v2545, %v2536
  %v2699 = vpack.c.b16 %v2546, %v2537
  %v2700 = vpack.c.b16 %v2556, %v2547
  %v2701 = vpack.c.b16 %v2557, %v2548
  %v2702 = vpack.c.b16 %v2558, %v2549
  %v2703 = vpack.c.b16 %v2559, %v2550
  %v2704 = vpack.c.b16 %v2560, %v2551
  %v2705 = vpack.c.b16 %v2561, %v2552
  %v2706 = vpack.c.b16 %v2562, %v2553
  %v2707 = vpack.c.b16 %v2563, %v2554
  %v2708 = vpack.c.b16 %v2564, %v2555
  %v2709 = vpack.c.b16 %v2574, %v2565
  %v2710 = vpack.c.b16 %v2575, %v2566
  %v2711 = vpack.c.b16 %v2576, %v2567
  %v2712 = vpack.c.b16 %v2577, %v2568
  %v2713 = vpack.c.b16 %v2578, %v2569
  %v2714 = vpack.c.b16 %v2579, %v2570
  %v2715 = vpack.c.b16 %v2580, %v2571
  %v2716 = vpack.c.b16 %v2581, %v2572
  %v2717 = vpack.c.b16 %v2582, %v2573
  %v2718 = vpack.c.b16 %v2592, %v2583
  %v2719 = vpack.c.b16 %v2593, %v2584
  %v2720 = vpack.c.b16 %v2594, %v2585
  %v2721 = vpack.c.b16 %v2595, %v2586
  %v2722 = vpack.c.b16 %v2596, %v2587
  %v2723 = vpack.c.b16 %v2597, %v2588
  %v2724 = vpack.c.b16 %v2598, %v2589
  %v2725 = vpack.c.b16 %v2599, %v2590
  %v2726 = vpack.c.b16 %v2600, %v2591
  %v2727 = vpack.c.b16 %v2610, %v2601
  %v2728 = vpack.c.b16 %v2611, %v2602
  %v2729 = vpack.c.b16 %v2612, %v2603
  %v2730 = vpack.c.b16 %v2613, %v2604
  %v2731 = vpack.c.b16 %v2614, %v2605
  %v2732 = vpack.c.b16 %v2615, %v2606
  %v2733 = vpack.c.b16 %v2616, %v2607
  %v2734 = vpack.c.b16 %v2617, %v2608
  %v2735 = vpack.c.b16 %v2618, %v2609
  %v2736 = vpack.c.b16 %v2628, %v2619
  %v2737 = vpack.c.b16 %v2629, %v2620
  %v2738 = vpack.c.b16 %v2630, %v2621
  %v2739 = vpack.c.b16 %v2631, %v2622
  %v2740 = vpack.c.b16 %v2632, %v2623
  %v2741 = vpack.c.b16 %v2633, %v2624
  %v2742 = vpack.c.b16 %v2634, %v2625
  %v2743 = vpack.c.b16 %v2635, %v2626
  %v2744 = vpack.c.b16 %v2636, %v2627
  %v2997 = vunpack.c.l.b16 %v2037
  %v2998 = vunpack.c.l.b16 %v2038
  %v2999 = vunpack.c.l.b16 %v2039
  %v3000 = vunpack.c.l.b16 %v2040
  %v3001 = vunpack.c.l.b16 %v2041
  %v3002 = vunpack.c.l.b16 %v2042
  %v3003 = vunpack.c.l.b16 %v2043
  %v3004 = vunpack.c.l.b16 %v2044
  %v3005 = vunpack.c.l.b16 %v2045
  %v3006 = vunpack.c.l.b16 %v2046
  %v3007 = vunpack.c.l.b16 %v2047
  %v3008 = vunpack.c.l.b16 %v2048
  %v3009 = vunpack.c.l.b16 %v2049
  %v3010 = vunpack.c.l.b16 %v2050
  %v3011 = vunpack.c.l.b16 %v2051
  %v3012 = vunpack.c.l.b16 %v2052
  %v3013 = vunpack.c.l.b16 %v2053
  %v3014 = vunpack.c.l.b16 %v2054
  %v3015 = vunpack.c.l.b16 %v2055
  %v3016 = vunpack.c.l.b16 %v2056
  %v3017 = vunpack.c.l.b16 %v2057
  %v3018 = vunpack.c.l.b16 %v2058
  %v3019 = vunpack.c.l.b16 %v2059
  %v3020 = vunpack.c.l.b16 %v2060
  %v3021 = vunpack.c.l.b16 %v2061
  %v3022 = vunpack.c.l.b16 %v2062
  %v3023 = vunpack.c.l.b16 %v2063
  %v3024 = vunpack.c.l.b16 %v2064
  %v3025 = vunpack.c.l.b16 %v2065
  %v3026 = vunpack.c.l.b16 %v2066
  %v3027 = vunpack.c.l.b16 %v2067
  %v3028 = vunpack.c.l.b16 %v2068
  %v3029 = vunpack.c.l.b16 %v2069
  %v3030 = vunpack.c.l.b16 %v2070
  %v3031 = vunpack.c.l.b16 %v2071
  %v3032 = vunpack.c.l.b16 %v2072
  %v3033 = vunpack.c.l.b16 %v2073
  %v3034 = vunpack.c.l.b16 %v2074
  %v3035 = vunpack.c.l.b16 %v2075
  %v3036 = vunpack.c.l.b16 %v2076
  %v3037 = vunpack.c.l.b16 %v2077
  %v3038 = vunpack.c.l.b16 %v2078
  %v3039 = vunpack.c.l.b16 %v2079
  %v3040 = vunpack.c.l.b16 %v2080
  %v3041 = vunpack.c.l.b16 %v2081
  %v3042 = vunpack.c.l.b16 %v2082
  %v3043 = vunpack.c.l.b16 %v2083
  %v3044 = vunpack.c.l.b16 %v2084
  %v3045 = vunpack.c.l.b16 %v2085
  %v3046 = vunpack.c.l.b16 %v2086
  %v3047 = vunpack.c.l.b16 %v2087
  %v3048 = vunpack.c.l.b16 %v2088
  %v3049 = vunpack.c.l.b16 %v2089
  %v3050 = vunpack.c.l.b16 %v2090
  %v3051 = vunpack.c.l.b16 %v2091
  %v3052 = vunpack.c.l.b16 %v2092
  %v3053 = vunpack.c.l.b16 %v2093
  %v3054 = vunpack.c.l.b16 %v2094
  %v3055 = vunpack.c.l.b16 %v2095
  %v3056 = vunpack.c.l.b16 %v2096
  %v3057 = vunpack.c.l.b16 %v2097
  %v3058 = vunpack.c.l.b16 %v2098
  %v3059 = vunpack.c.l.b16 %v2099
  %v3060 = vunpack.c.l.b16 %v2100
  %v3061 = vunpack.c.l.b16 %v2101
  %v3062 = vunpack.c.l.b16 %v2102
  %v3063 = vunpack.c.l.b16 %v2103
  %v3064 = vunpack.c.l.b16 %v2104
  %v3065 = vunpack.c.l.b16 %v2105
  %v3066 = vunpack.c.l.b16 %v2106
  %v3067 = vunpack.c.l.b16 %v2107
  %v3068 = vunpack.c.l.b16 %v2108
  %v3069 = vunpack.c.l.b16 %v2109
  %v3070 = vunpack.c.l.b16 %v2110
  %v3071 = vunpack.c.l.b16 %v2111
  %v3072 = vunpack.c.l.b16 %v2112
  %v3073 = vunpack.c.l.b16 %v2113
  %v3074 = vunpack.c.l.b16 %v2114
  %v3075 = vunpack.c.l.b16 %v2115
  %v3076 = vunpack.c.l.b16 %v2116
  %v3077 = vunpack.c.l.b16 %v2117
  %v3078 = vunpack.c.l.b16 %v2118
  %v3079 = vunpack.c.l.b16 %v2119
  %v3080 = vunpack.c.l.b16 %v2120
  %v3081 = vunpack.c.l.b16 %v2121
  %v3082 = vunpack.c.l.b16 %v2122
  %v3083 = vunpack.c.l.b16 %v2123
  %v3084 = vunpack.c.l.b16 %v2124
  %v3085 = vunpack.c.l.b16 %v2125
  %v3086 = vunpack.c.l.b16 %v2126
  %v3087 = vunpack.c.l.b16 %v2127
  %v3088 = vunpack.c.l.b16 %v2128
  %v3089 = vunpack.c.l.b16 %v2129
  %v3090 = vunpack.c.l.b16 %v2130
  %v3091 = vunpack.c.l.b16 %v2131
  %v3092 = vunpack.c.l.b16 %v2132
  %v3093 = vunpack.c.l.b16 %v2133
  %v3094 = vunpack.c.l.b16 %v2134
  %v3095 = vunpack.c.l.b16 %v2135
  %v3096 = vunpack.c.l.b16 %v2136
  %v3097 = vunpack.c.l.b16 %v2137
  %v3098 = vunpack.c.l.b16 %v2138
  %v3099 = vunpack.c.l.b16 %v2139
  %v3100 = vunpack.c.l.b16 %v2140
  %v3101 = vunpack.c.l.b16 %v2141
  %v3102 = vunpack.c.l.b16 %v2142
  %v3103 = vunpack.c.l.b16 %v2143
  %v3104 = vunpack.c.l.b16 %v2144
  %v3105 = vunpack.c.l.b16 %v2145
  %v3106 = vunpack.c.l.b16 %v2146
  %v3107 = vunpack.c.l.b16 %v2147
  %v3108 = vunpack.c.l.b16 %v2148
  %v3109 = vunpack.c.l.b16 %v2149
  %v3110 = vunpack.c.l.b16 %v2150
  %v3111 = vunpack.c.l.b16 %v2151
  %v3112 = vunpack.c.l.b16 %v2152
  %v3113 = vunpack.c.l.b16 %v2153
  %v3114 = vunpack.c.l.b16 %v2154
  %v3115 = vunpack.c.l.b16 %v2155
  %v3116 = vunpack.c.l.b16 %v2156
  %v3117 = vunpack.c.l.b16 %v2157
  %v3118 = vunpack.c.l.b16 %v2158
  %v3119 = vunpack.c.l.b16 %v2159
  %v3120 = vunpack.c.l.b16 %v2160
  %v3121 = vunpack.c.l.b16 %v2161
  %v3122 = vunpack.c.l.b16 %v2162
  %v3123 = vunpack.c.l.b16 %v2163
  %v3124 = vunpack.c.l.b16 %v2164
  %v3125 = vunpack.c.l.b16 %v2165
  %v3126 = vunpack.c.l.b16 %v2166
  %v3127 = vunpack.c.l.b16 %v2167
  %v3128 = vunpack.c.l.b16 %v2168
  %v3129 = vunpack.c.l.b16 %v2169
  %v3130 = vunpack.c.l.b16 %v2170
  %v3131 = vunpack.c.l.b16 %v2171
  %v3132 = vunpack.c.l.b16 %v2172
  %v3133 = vunpack.c.l.b16 %v2173
  %v3134 = vunpack.c.l.b16 %v2174
  %v3135 = vunpack.c.l.b16 %v2175
  %v3136 = vunpack.c.l.b16 %v2176
  %v3137 = vunpack.c.l.b16 %v2177
  %v3138 = vunpack.c.l.b16 %v2178
  %v3139 = vunpack.c.l.b16 %v2179
  %v3140 = vunpack.c.l.b16 %v2180
  %v3141 = vpack.c.b16 %v2998, %v2997
  %v3142 = vpack.c.b16 %v3000, %v2999
  %v3143 = vpack.c.b16 %v3002, %v3001
  %v3144 = vpack.c.b16 %v3004, %v3003
  %v3145 = vpack.c.b16 %v3006, %v3005
  %v3146 = vpack.c.b16 %v3008, %v3007
  %v3147 = vpack.c.b16 %v3010, %v3009
  %v3148 = vpack.c.b16 %v3012, %v3011
  %v3149 = vpack.c.b16 %v3014, %v3013
  %v3150 = vpack.c.b16 %v3016, %v3015
  %v3151 = vpack.c.b16 %v3018, %v3017
  %v3152 = vpack.c.b16 %v3020, %v3019
  %v3153 = vpack.c.b16 %v3022, %v3021
  %v3154 = vpack.c.b16 %v3024, %v3023
  %v3155 = vpack.c.b16 %v3026, %v3025
  %v3156 = vpack.c.b16 %v3028, %v3027
  %v3157 = vpack.c.b16 %v3030, %v3029
  %v3158 = vpack.c.b16 %v3032, %v3031
  %v3159 = vpack.c.b16 %v3034, %v3033
  %v3160 = vpack.c.b16 %v3036, %v3035
  %v3161 = vpack.c.b16 %v3038, %v3037
  %v3162 = vpack.c.b16 %v3040, %v3039
  %v3163 = vpack.c.b16 %v3042, %v3041
  %v3164 = vpack.c.b16 %v3044, %v3043
  %v3165 = vpack.c.b16 %v3046, %v3045
  %v3166 = vpack.c.b16 %v3048, %v3047
  %v3167 = vpack.c.b16 %v3050, %v3049
  %v3168 = vpack.c.b16 %v3052, %v3051
  %v3169 = vpack.c.b16 %v3054, %v3053
  %v3170 = vpack.c.b16 %v3056, %v3055
  %v3171 = vpack.c.b16 %v3058, %v3057
  %v3172 = vpack.c.b16 %v3060, %v3059
  %v3173 = vpack.c.b16 %v3062, %v3061
  %v3174 = vpack.c.b16 %v3064, %v3063
  %v3175 = vpack.c.b16 %v3066, %v3065
  %v3176 = vpack.c.b16 %v3068, %v3067
  %v3177 = vpack.c.b16 %v3070, %v3069
  %v3178 = vpack.c.b16 %v3072, %v3071
  %v3179 = vpack.c.b16 %v3074, %v3073
  %v3180 = vpack.c.b16 %v3076, %v3075
  %v3181 = vpack.c.b16 %v3078, %v3077
  %v3182 = vpack.c.b16 %v3080, %v3079
  %v3183 = vpack.c.b16 %v3082, %v3081
  %v3184 = vpack.c.b16 %v3084, %v3083
  %v3185 = vpack.c.b16 %v3086, %v3085
  %v3186 = vpack.c.b16 %v3088, %v3087
  %v3187 = vpack.c.b16 %v3090, %v3089
  %v3188 = vpack.c.b16 %v3092, %v3091
  %v3189 = vpack.c.b16 %v3094, %v3093
  %v3190 = vpack.c.b16 %v3096, %v3095
  %v3191 = vpack.c.b16 %v3098, %v3097
  %v3192 = vpack.c.b16 %v3100, %v3099
  %v3193 = vpack.c.b16 %v3102, %v3101
  %v3194 = vpack.c.b16 %v3104, %v3103
  %v3195 = vpack.c.b16 %v3106, %v3105
  %v3196 = vpack.c.b16 %v3108, %v3107
  %v3197 = vpack.c.b16 %v3110, %v3109
  %v3198 = vpack.c.b16 %v3112, %v3111
  %v3199 = vpack.c.b16 %v3114, %v3113
  %v3200 = vpack.c.b16 %v3116, %v3115
  %v3201 = vpack.c.b16 %v3118, %v3117
  %v3202 = vpack.c.b16 %v3120, %v3119
  %v3203 = vpack.c.b16 %v3122, %v3121
  %v3204 = vpack.c.b16 %v3124, %v3123
  %v3205 = vpack.c.b16 %v3126, %v3125
  %v3206 = vpack.c.b16 %v3128, %v3127
  %v3207 = vpack.c.b16 %v3130, %v3129
  %v3208 = vpack.c.b16 %v3132, %v3131
  %v3209 = vpack.c.b16 %v3134, %v3133
  %v3210 = vpack.c.b16 %v3136, %v3135
  %v3211 = vpack.c.b16 %v3138, %v3137
  %v3212 = vpack.c.b16 %v3140, %v3139
  %3285 = vmatprep.subr.bf16.mxu0 0
  %3286 = vmatpush1.bf16.msra.mxu0 %v3141
  %3287 = vmatprep.subr.bf16.mxu0 0
  %3288 = vmatpush1.bf16.msra.mxu0 %v3142
  %3289 = vmatprep.subr.bf16.mxu0 0
  %3290 = vmatpush1.bf16.msra.mxu0 %v3143
  %3291 = vmatprep.subr.bf16.mxu0 0
  %3292 = vmatpush1.bf16.msra.mxu0 %v3144
  %3293 = vmatprep.subr.bf16.mxu0 0
  %3294 = vmatpush1.bf16.msra.mxu0 %v3145
  %3295 = vmatprep.subr.bf16.mxu0 0
  %3296 = vmatpush1.bf16.msra.mxu0 %v3146
  %3297 = vmatprep.subr.bf16.mxu0 0
  %3298 = vmatpush1.bf16.msra.mxu0 %v3147
  %3299 = vmatprep.subr.bf16.mxu0 0
  %3300 = vmatpush1.bf16.msra.mxu0 %v3148
  %3301 = vmatprep.subr.bf16.mxu0 0
  %3302 = vmatpush1.bf16.msra.mxu0 %v3149
  %3303 = vmatprep.subr.bf16.mxu0 0
  %3304 = vmatpush1.bf16.msra.mxu0 %v3150
  %3305 = vmatprep.subr.bf16.mxu0 0
  %3306 = vmatpush1.bf16.msra.mxu0 %v3151
  %3307 = vmatprep.subr.bf16.mxu0 0
  %3308 = vmatpush1.bf16.msra.mxu0 %v3152
  %3309 = vmatprep.subr.bf16.mxu0 0
  %3310 = vmatpush1.bf16.msra.mxu0 %v3153
  %3311 = vmatprep.subr.bf16.mxu0 0
  %3312 = vmatpush1.bf16.msra.mxu0 %v3154
  %3313 = vmatprep.subr.bf16.mxu0 0
  %3314 = vmatpush1.bf16.msra.mxu0 %v3155
  %3315 = vmatprep.subr.bf16.mxu0 0
  %3316 = vmatpush1.bf16.msra.mxu0 %v3156
  %3317 = vmatprep.mubr.bf16.mxu0 %v2638
  %3318 = vmatmul.mubr.bf16.gmra.mrb[0].mxu0 %v2637
  %v3319 = vpop.f32.mrb[0].mxu0
  %v3320 = vadd.f32 0.0, %v3319
  %v3321 = vpop.f32.mrb[0].mxu0
  %v3322 = vpop.f32.mrb[0].mxu0
  %v3323 = vadd.f32 0.0, %v3322
  %v3324 = vpop.f32.mrb[0].mxu0
  %3325 = vmatprep.mubr.bf16.mxu0 %v2647
  %3326 = vmatmul.mubr.bf16.gmra.mrb[0].mxu0 %v2646
  %v3327 = vpop.f32.mrb[0].mxu0
  %v3328 = vadd.f32 0.0, %v3327
  %v3329 = vpop.f32.mrb[0].mxu0
  %v3330 = vpop.f32.mrb[0].mxu0
  %v3331 = vadd.f32 0.0, %v3330
  %v3332 = vpop.f32.mrb[0].mxu0
  %3333 = vmatprep.mubr.bf16.mxu0 %v2656
  %3334 = vmatmul.mubr.bf16.gmra.mrb[0].mxu0 %v2655
  %v3335 = vpop.f32.mrb[0].mxu0
  %v3336 = vadd.f32 0.0, %v3335
  %v3337 = vpop.f32.mrb[0].mxu0
  %v3338 = vpop.f32.mrb[0].mxu0
  %v3339 = vadd.f32 0.0, %v3338
  %v3340 = vpop.f32.mrb[0].mxu0
  %3341 = vmatprep.mubr.bf16.mxu0 %v2665
  %3342 = vmatmul.mubr.bf16.gmra.mrb[0].mxu0 %v2664
  %v3343 = vpop.f32.mrb[0].mxu0
  %v3344 = vadd.f32 0.0, %v3343
  %v3345 = vpop.f32.mrb[0].mxu0
  %v3346 = vpop.f32.mrb[0].mxu0
  %v3347 = vadd.f32 0.0, %v3346
  %v3348 = vpop.f32.mrb[0].mxu0
  %3349 = vmatprep.mubr.bf16.mxu0 %v2674
  %3350 = vmatmul.mubr.bf16.gmra.mrb[0].mxu0 %v2673
  %v3351 = vpop.f32.mrb[0].mxu0
  %v3352 = vadd.f32 0.0, %v3351
  %v3353 = vpop.f32.mrb[0].mxu0
  %v3354 = vpop.f32.mrb[0].mxu0
  %v3355 = vadd.f32 0.0, %v3354
  %v3356 = vpop.f32.mrb[0].mxu0
  %3357 = vmatprep.mubr.bf16.mxu0 %v2683
  %3358 = vmatmul.mubr.bf16.gmra.mrb[0].mxu0 %v2682
  %v3359 = vpop.f32.mrb[0].mxu0
  %v3360 = vadd.f32 0.0, %v3359
  %v3361 = vpop.f32.mrb[0].mxu0
  %v3362 = vpop.f32.mrb[0].mxu0
  %v3363 = vadd.f32 0.0, %v3362
  %v3364 = vpop.f32.mrb[0].mxu0
  %3365 = vmatprep.mubr.bf16.mxu0 %v2692
  %3366 = vmatmul.mubr.bf16.gmra.mrb[0].mxu0 %v2691
  %v3367 = vpop.f32.mrb[0].mxu0
  %v3368 = vadd.f32 0.0, %v3367
  %v3369 = vpop.f32.mrb[0].mxu0
  %v3370 = vpop.f32.mrb[0].mxu0
  %v3371 = vadd.f32 0.0, %v3370
  %v3372 = vpop.f32.mrb[0].mxu0
  %3373 = vmatprep.mubr.bf16.mxu0 %v2701
  %3374 = vmatmul.mubr.bf16.gmra.mrb[0].mxu0 %v2700
  %v3375 = vpop.f32.mrb[0].mxu0
  %v3376 = vadd.f32 0.0, %v3375
  %v3377 = vpop.f32.mrb[0].mxu0
  %v3378 = vpop.f32.mrb[0].mxu0
  %v3379 = vadd.f32 0.0, %v3378
  %v3380 = vpop.f32.mrb[0].mxu0
  %3381 = vmatprep.mubr.bf16.mxu0 %v2710
  %3382 = vmatmul.mubr.bf16.gmra.mrb[0].mxu0 %v2709
  %v3383 = vpop.f32.mrb[0].mxu0
  %v3384 = vadd.f32 0.0, %v3383
  %v3385 = vpop.f32.mrb[0].mxu0
  %v3386 = vpop.f32.mrb[0].mxu0
  %v3387 = vadd.f32 0.0, %v3386
  %v3388 = vpop.f32.mrb[0].mxu0
  %3389 = vmatprep.mubr.bf16.mxu0 %v2719
  %3390 = vmatmul.mubr.bf16.gmra.mrb[0].mxu0 %v2718
  %v3391 = vpop.f32.mrb[0].mxu0
  %v3392 = vadd.f32 0.0, %v3391
  %v3393 = vpop.f32.mrb[0].mxu0
  %v3394 = vpop.f32.mrb[0].mxu0
  %v3395 = vadd.f32 0.0, %v3394
  %v3396 = vpop.f32.mrb[0].mxu0
  %3397 = vmatprep.mubr.bf16.mxu0 %v2728
  %3398 = vmatmul.mubr.bf16.gmra.mrb[0].mxu0 %v2727
  %v3399 = vpop.f32.mrb[0].mxu0
  %v3400 = vadd.f32 0.0, %v3399
  %v3401 = vpop.f32.mrb[0].mxu0
  %v3402 = vpop.f32.mrb[0].mxu0
  %v3403 = vadd.f32 0.0, %v3402
  %v3404 = vpop.f32.mrb[0].mxu0
  %3405 = vmatprep.mubr.bf16.mxu0 %v2737
  %3406 = vmatmul.mubr.bf16.gmra.mrb[0].mxu0 %v2736
  %v3407 = vpop.f32.mrb[0].mxu0
  %v3408 = vadd.f32 0.0, %v3407
  %v3409 = vpop.f32.mrb[0].mxu0
  %v3410 = vpop.f32.mrb[0].mxu0
  %v3411 = vadd.f32 0.0, %v3410
  %v3412 = vpop.f32.mrb[0].mxu0
  %3413 = vdwg.mxu0
  %3414 = vmatprep.subr.bf16.mxu0 0
  %3415 = vmatpush1.bf16.msra.mxu0 %v3157
  %3416 = vmatprep.subr.bf16.mxu0 0
  %3417 = vmatpush1.bf16.msra.mxu0 %v3158
  %3418 = vmatprep.subr.bf16.mxu0 0
  %3419 = vmatpush1.bf16.msra.mxu0 %v3159
  %3420 = vmatprep.subr.bf16.mxu0 0
  %3421 = vmatpush1.bf16.msra.mxu0 %v3160
  %3422 = vmatprep.subr.bf16.mxu0 0
  %3423 = vmatpush1.bf16.msra.mxu0 %v3161
  %3424 = vmatprep.subr.bf16.mxu0 0
  %3425 = vmatpush1.bf16.msra.mxu0 %v3162
  %3426 = vmatprep.subr.bf16.mxu0 0
  %3427 = vmatpush1.bf16.msra.mxu0 %v3163
  %3428 = vmatprep.subr.bf16.mxu0 0
  %3429 = vmatpush1.bf16.msra.mxu0 %v3164
  %3430 = vmatprep.subr.bf16.mxu0 0
  %3431 = vmatpush1.bf16.msra.mxu0 %v3165
  %3432 = vmatprep.subr.bf16.mxu0 0
  %3433 = vmatpush1.bf16.msra.mxu0 %v3166
  %3434 = vmatprep.subr.bf16.mxu0 0
  %3435 = vmatpush1.bf16.msra.mxu0 %v3167
  %3436 = vmatprep.subr.bf16.mxu0 0
  %3437 = vmatpush1.bf16.msra.mxu0 %v3168
  %3438 = vmatprep.subr.bf16.mxu0 0
  %3439 = vmatpush1.bf16.msra.mxu0 %v3169
  %3440 = vmatprep.subr.bf16.mxu0 0
  %3441 = vmatpush1.bf16.msra.mxu0 %v3170
  %3442 = vmatprep.subr.bf16.mxu0 0
  %3443 = vmatpush1.bf16.msra.mxu0 %v3171
  %3444 = vmatprep.subr.bf16.mxu0 0
  %3445 = vmatpush1.bf16.msra.mxu0 %v3172
  %3446 = vmatprep.mubr.bf16.mxu0 %v2640
  %3447 = vmatmul.mubr.bf16.gmra.mrb[0].mxu0 %v2639
  %v3448 = vpop.f32.mrb[0].mxu0
  %v3449 = vadd.f32 %v3320, %v3448
  %v3450 = vpop.f32.mrb[0].mxu0
  %v3451 = vpop.f32.mrb[0].mxu0
  %v3452 = vadd.f32 %v3323, %v3451
  %v3453 = vpop.f32.mrb[0].mxu0
  %3454 = vmatprep.mubr.bf16.mxu0 %v2649
  %3455 = vmatmul.mubr.bf16.gmra.mrb[0].mxu0 %v2648
  %v3456 = vpop.f32.mrb[0].mxu0
  %v3457 = vadd.f32 %v3328, %v3456
  %v3458 = vpop.f32.mrb[0].mxu0
  %v3459 = vpop.f32.mrb[0].mxu0
  %v3460 = vadd.f32 %v3331, %v3459
  %v3461 = vpop.f32.mrb[0].mxu0
  %3462 = vmatprep.mubr.bf16.mxu0 %v2658
  %3463 = vmatmul.mubr.bf16.gmra.mrb[0].mxu0 %v2657
  %v3464 = vpop.f32.mrb[0].mxu0
  %v3465 = vadd.f32 %v3336, %v3464
  %v3466 = vpop.f32.mrb[0].mxu0
  %v3467 = vpop.f32.mrb[0].mxu0
  %v3468 = vadd.f32 %v3339, %v3467
  %v3469 = vpop.f32.mrb[0].mxu0
  %3470 = vmatprep.mubr.bf16.mxu0 %v2667
  %3471 = vmatmul.mubr.bf16.gmra.mrb[0].mxu0 %v2666
  %v3472 = vpop.f32.mrb[0].mxu0
  %v3473 = vadd.f32 %v3344, %v3472
  %v3474 = vpop.f32.mrb[0].mxu0
  %v3475 = vpop.f32.mrb[0].mxu0
  %v3476 = vadd.f32 %v3347, %v3475
  %v3477 = vpop.f32.mrb[0].mxu0
  %3478 = vmatprep.mubr.bf16.mxu0 %v2676
  %3479 = vmatmul.mubr.bf16.gmra.mrb[0].mxu0 %v2675
  %v3480 = vpop.f32.mrb[0].mxu0
  %v3481 = vadd.f32 %v3352, %v3480
  %v3482 = vpop.f32.mrb[0].mxu0
  %v3483 = vpop.f32.mrb[0].mxu0
  %v3484 = vadd.f32 %v3355, %v3483
  %v3485 = vpop.f32.mrb[0].mxu0
  %3486 = vmatprep.mubr.bf16.mxu0 %v2685
  %3487 = vmatmul.mubr.bf16.gmra.mrb[0].mxu0 %v2684
  %v3488 = vpop.f32.mrb[0].mxu0
  %v3489 = vadd.f32 %v3360, %v3488
  %v3490 = vpop.f32.mrb[0].mxu0
  %v3491 = vpop.f32.mrb[0].mxu0
  %v3492 = vadd.f32 %v3363, %v3491
  %v3493 = vpop.f32.mrb[0].mxu0
  %3494 = vmatprep.mubr.bf16.mxu0 %v2694
  %3495 = vmatmul.mubr.bf16.gmra.mrb[0].mxu0 %v2693
  %v3496 = vpop.f32.mrb[0].mxu0
  %v3497 = vadd.f32 %v3368, %v3496
  %v3498 = vpop.f32.mrb[0].mxu0
  %v3499 = vpop.f32.mrb[0].mxu0
  %v3500 = vadd.f32 %v3371, %v3499
  %v3501 = vpop.f32.mrb[0].mxu0
  %3502 = vmatprep.mubr.bf16.mxu0 %v2703
  %3503 = vmatmul.mubr.bf16.gmra.mrb[0].mxu0 %v2702
  %v3504 = vpop.f32.mrb[0].mxu0
  %v3505 = vadd.f32 %v3376, %v3504
  %v3506 = vpop.f32.mrb[0].mxu0
  %v3507 = vpop.f32.mrb[0].mxu0
  %v3508 = vadd.f32 %v3379, %v3507
  %v3509 = vpop.f32.mrb[0].mxu0
  %3510 = vmatprep.mubr.bf16.mxu0 %v2712
  %3511 = vmatmul.mubr.bf16.gmra.mrb[0].mxu0 %v2711
  %v3512 = vpop.f32.mrb[0].mxu0
  %v3513 = vadd.f32 %v3384, %v3512
  %v3514 = vpop.f32.mrb[0].mxu0
  %v3515 = vpop.f32.mrb[0].mxu0
  %v3516 = vadd.f32 %v3387, %v3515
  %v3517 = vpop.f32.mrb[0].mxu0
  %3518 = vmatprep.mubr.bf16.mxu0 %v2721
  %3519 = vmatmul.mubr.bf16.gmra.mrb[0].mxu0 %v2720
  %v3520 = vpop.f32.mrb[0].mxu0
  %v3521 = vadd.f32 %v3392, %v3520
  %v3522 = vpop.f32.mrb[0].mxu0
  %v3523 = vpop.f32.mrb[0].mxu0
  %v3524 = vadd.f32 %v3395, %v3523
  %v3525 = vpop.f32.mrb[0].mxu0
  %3526 = vmatprep.mubr.bf16.mxu0 %v2730
  %3527 = vmatmul.mubr.bf16.gmra.mrb[0].mxu0 %v2729
  %v3528 = vpop.f32.mrb[0].mxu0
  %v3529 = vadd.f32 %v3400, %v3528
  %v3530 = vpop.f32.mrb[0].mxu0
  %v3531 = vpop.f32.mrb[0].mxu0
  %v3532 = vadd.f32 %v3403, %v3531
  %v3533 = vpop.f32.mrb[0].mxu0
  %3534 = vmatprep.mubr.bf16.mxu0 %v2739
  %3535 = vmatmul.mubr.bf16.gmra.mrb[0].mxu0 %v2738
  %v3536 = vpop.f32.mrb[0].mxu0
  %v3537 = vadd.f32 %v3408, %v3536
  %v3538 = vpop.f32.mrb[0].mxu0
  %v3539 = vpop.f32.mrb[0].mxu0
  %v3540 = vadd.f32 %v3411, %v3539
  %v3541 = vpop.f32.mrb[0].mxu0
  %3542 = vdwg.mxu0
  %3543 = vmatprep.subr.bf16.mxu0 0
  %3544 = vmatpush1.bf16.msra.mxu0 %v3173
  %3545 = vmatprep.subr.bf16.mxu0 0
  %3546 = vmatpush1.bf16.msra.mxu0 %v3174
  %3547 = vmatprep.subr.bf16.mxu0 0
  %3548 = vmatpush1.bf16.msra.mxu0 %v3175
  %3549 = vmatprep.subr.bf16.mxu0 0
  %3550 = vmatpush1.bf16.msra.mxu0 %v3176
  %3551 = vmatprep.subr.bf16.mxu0 0
  %3552 = vmatpush1.bf16.msra.mxu0 %v3177
  %3553 = vmatprep.subr.bf16.mxu0 0
  %3554 = vmatpush1.bf16.msra.mxu0 %v3178
  %3555 = vmatprep.subr.bf16.mxu0 0
  %3556 = vmatpush1.bf16.msra.mxu0 %v3179
  %3557 = vmatprep.subr.bf16.mxu0 0
  %3558 = vmatpush1.bf16.msra.mxu0 %v3180
  %3559 = vmatprep.subr.bf16.mxu0 0
  %3560 = vmatpush1.bf16.msra.mxu0 %v3181
  %3561 = vmatprep.subr.bf16.mxu0 0
  %3562 = vmatpush1.bf16.msra.mxu0 %v3182
  %3563 = vmatprep.subr.bf16.mxu0 0
  %3564 = vmatpush1.bf16.msra.mxu0 %v3183
  %3565 = vmatprep.subr.bf16.mxu0 0
  %3566 = vmatpush1.bf16.msra.mxu0 %v3184
  %3567 = vmatprep.subr.bf16.mxu0 0
  %3568 = vmatpush1.bf16.msra.mxu0 %v3185
  %3569 = vmatprep.subr.bf16.mxu0 0
  %3570 = vmatpush1.bf16.msra.mxu0 %v3186
  %3571 = vmatprep.subr.bf16.mxu0 0
  %3572 = vmatpush1.bf16.msra.mxu0 %v3187
  %3573 = vmatprep.subr.bf16.mxu0 0
  %3574 = vmatpush1.bf16.msra.mxu0 %v3188
  %3575 = vmatprep.mubr.bf16.mxu0 %v2642
  %3576 = vmatmul.mubr.bf16.gmra.mrb[0].mxu0 %v2641
  %v3577 = vpop.f32.mrb[0].mxu0
  %v3578 = vadd.f32 %v3449, %v3577
  %v3579 = vpop.f32.mrb[0].mxu0
  %v3580 = vpop.f32.mrb[0].mxu0
  %v3581 = vadd.f32 %v3452, %v3580
  %v3582 = vpop.f32.mrb[0].mxu0
  %3583 = vmatprep.mubr.bf16.mxu0 %v2651
  %3584 = vmatmul.mubr.bf16.gmra.mrb[0].mxu0 %v2650
  %v3585 = vpop.f32.mrb[0].mxu0
  %v3586 = vadd.f32 %v3457, %v3585
  %v3587 = vpop.f32.mrb[0].mxu0
  %v3588 = vpop.f32.mrb[0].mxu0
  %v3589 = vadd.f32 %v3460, %v3588
  %v3590 = vpop.f32.mrb[0].mxu0
  %3591 = vmatprep.mubr.bf16.mxu0 %v2660
  %3592 = vmatmul.mubr.bf16.gmra.mrb[0].mxu0 %v2659
  %v3593 = vpop.f32.mrb[0].mxu0
  %v3594 = vadd.f32 %v3465, %v3593
  %v3595 = vpop.f32.mrb[0].mxu0
  %v3596 = vpop.f32.mrb[0].mxu0
  %v3597 = vadd.f32 %v3468, %v3596
  %v3598 = vpop.f32.mrb[0].mxu0
  %3599 = vmatprep.mubr.bf16.mxu0 %v2669
  %3600 = vmatmul.mubr.bf16.gmra.mrb[0].mxu0 %v2668
  %v3601 = vpop.f32.mrb[0].mxu0
  %v3602 = vadd.f32 %v3473, %v3601
  %v3603 = vpop.f32.mrb[0].mxu0
  %v3604 = vpop.f32.mrb[0].mxu0
  %v3605 = vadd.f32 %v3476, %v3604
  %v3606 = vpop.f32.mrb[0].mxu0
  %3607 = vmatprep.mubr.bf16.mxu0 %v2678
  %3608 = vmatmul.mubr.bf16.gmra.mrb[0].mxu0 %v2677
  %v3609 = vpop.f32.mrb[0].mxu0
  %v3610 = vadd.f32 %v3481, %v3609
  %v3611 = vpop.f32.mrb[0].mxu0
  %v3612 = vpop.f32.mrb[0].mxu0
  %v3613 = vadd.f32 %v3484, %v3612
  %v3614 = vpop.f32.mrb[0].mxu0
  %3615 = vmatprep.mubr.bf16.mxu0 %v2687
  %3616 = vmatmul.mubr.bf16.gmra.mrb[0].mxu0 %v2686
  %v3617 = vpop.f32.mrb[0].mxu0
  %v3618 = vadd.f32 %v3489, %v3617
  %v3619 = vpop.f32.mrb[0].mxu0
  %v3620 = vpop.f32.mrb[0].mxu0
  %v3621 = vadd.f32 %v3492, %v3620
  %v3622 = vpop.f32.mrb[0].mxu0
  %3623 = vmatprep.mubr.bf16.mxu0 %v2696
  %3624 = vmatmul.mubr.bf16.gmra.mrb[0].mxu0 %v2695
  %v3625 = vpop.f32.mrb[0].mxu0
  %v3626 = vadd.f32 %v3497, %v3625
  %v3627 = vpop.f32.mrb[0].mxu0
  %v3628 = vpop.f32.mrb[0].mxu0
  %v3629 = vadd.f32 %v3500, %v3628
  %v3630 = vpop.f32.mrb[0].mxu0
  %3631 = vmatprep.mubr.bf16.mxu0 %v2705
  %3632 = vmatmul.mubr.bf16.gmra.mrb[0].mxu0 %v2704
  %v3633 = vpop.f32.mrb[0].mxu0
  %v3634 = vadd.f32 %v3505, %v3633
  %v3635 = vpop.f32.mrb[0].mxu0
  %v3636 = vpop.f32.mrb[0].mxu0
  %v3637 = vadd.f32 %v3508, %v3636
  %v3638 = vpop.f32.mrb[0].mxu0
  %3639 = vmatprep.mubr.bf16.mxu0 %v2714
  %3640 = vmatmul.mubr.bf16.gmra.mrb[0].mxu0 %v2713
  %v3641 = vpop.f32.mrb[0].mxu0
  %v3642 = vadd.f32 %v3513, %v3641
  %v3643 = vpop.f32.mrb[0].mxu0
  %v3644 = vpop.f32.mrb[0].mxu0
  %v3645 = vadd.f32 %v3516, %v3644
  %v3646 = vpop.f32.mrb[0].mxu0
  %3647 = vmatprep.mubr.bf16.mxu0 %v2723
  %3648 = vmatmul.mubr.bf16.gmra.mrb[0].mxu0 %v2722
  %v3649 = vpop.f32.mrb[0].mxu0
  %v3650 = vadd.f32 %v3521, %v3649
  %v3651 = vpop.f32.mrb[0].mxu0
  %v3652 = vpop.f32.mrb[0].mxu0
  %v3653 = vadd.f32 %v3524, %v3652
  %v3654 = vpop.f32.mrb[0].mxu0
  %3655 = vmatprep.mubr.bf16.mxu0 %v2732
  %3656 = vmatmul.mubr.bf16.gmra.mrb[0].mxu0 %v2731
  %v3657 = vpop.f32.mrb[0].mxu0
  %v3658 = vadd.f32 %v3529, %v3657
  %v3659 = vpop.f32.mrb[0].mxu0
  %v3660 = vpop.f32.mrb[0].mxu0
  %v3661 = vadd.f32 %v3532, %v3660
  %v3662 = vpop.f32.mrb[0].mxu0
  %3663 = vmatprep.mubr.bf16.mxu0 %v2741
  %3664 = vmatmul.mubr.bf16.gmra.mrb[0].mxu0 %v2740
  %v3665 = vpop.f32.mrb[0].mxu0
  %v3666 = vadd.f32 %v3537, %v3665
  %v3667 = vpop.f32.mrb[0].mxu0
  %v3668 = vpop.f32.mrb[0].mxu0
  %v3669 = vadd.f32 %v3540, %v3668
  %v3670 = vpop.f32.mrb[0].mxu0
  %3671 = vdwg.mxu0
  %3672 = vmatprep.subr.bf16.mxu0 0
  %3673 = vmatpush1.bf16.msra.mxu0 %v3189
  %3674 = vmatprep.subr.bf16.mxu0 0
  %3675 = vmatpush1.bf16.msra.mxu0 %v3190
  %3676 = vmatprep.subr.bf16.mxu0 0
  %3677 = vmatpush1.bf16.msra.mxu0 %v3191
  %3678 = vmatprep.subr.bf16.mxu0 0
  %3679 = vmatpush1.bf16.msra.mxu0 %v3192
  %3680 = vmatprep.subr.bf16.mxu0 0
  %3681 = vmatpush1.bf16.msra.mxu0 %v3193
  %3682 = vmatprep.subr.bf16.mxu0 0
  %3683 = vmatpush1.bf16.msra.mxu0 %v3194
  %3684 = vmatprep.subr.bf16.mxu0 0
  %3685 = vmatpush1.bf16.msra.mxu0 %v3195
  %3686 = vmatprep.subr.bf16.mxu0 0
  %3687 = vmatpush1.bf16.msra.mxu0 %v3196
  %3688 = vmatprep.subr.bf16.mxu0 0
  %3689 = vmatpush1.bf16.msra.mxu0 %v3197
  %3690 = vmatprep.subr.bf16.mxu0 0
  %3691 = vmatpush1.bf16.msra.mxu0 %v3198
  %3692 = vmatprep.subr.bf16.mxu0 0
  %3693 = vmatpush1.bf16.msra.mxu0 %v3199
  %3694 = vmatprep.subr.bf16.mxu0 0
  %3695 = vmatpush1.bf16.msra.mxu0 %v3200
  %3696 = vmatprep.subr.bf16.mxu0 0
  %3697 = vmatpush1.bf16.msra.mxu0 %v3201
  %3698 = vmatprep.subr.bf16.mxu0 0
  %3699 = vmatpush1.bf16.msra.mxu0 %v3202
  %3700 = vmatprep.subr.bf16.mxu0 0
  %3701 = vmatpush1.bf16.msra.mxu0 %v3203
  %3702 = vmatprep.subr.bf16.mxu0 0
  %3703 = vmatpush1.bf16.msra.mxu0 %v3204
  %3704 = vmatprep.mubr.bf16.mxu0 %v2644
  %3705 = vmatmul.mubr.bf16.gmra.mrb[0].mxu0 %v2643
  %v3706 = vpop.f32.mrb[0].mxu0
  %v3707 = vadd.f32 %v3578, %v3706
  %v3708 = vpop.f32.mrb[0].mxu0
  %v3709 = vpop.f32.mrb[0].mxu0
  %v3710 = vadd.f32 %v3581, %v3709
  %v3711 = vpop.f32.mrb[0].mxu0
  %3712 = vmatprep.mubr.bf16.mxu0 %v2653
  %3713 = vmatmul.mubr.bf16.gmra.mrb[0].mxu0 %v2652
  %v3714 = vpop.f32.mrb[0].mxu0
  %v3715 = vadd.f32 %v3586, %v3714
  %v3716 = vpop.f32.mrb[0].mxu0
  %v3717 = vpop.f32.mrb[0].mxu0
  %v3718 = vadd.f32 %v3589, %v3717
  %v3719 = vpop.f32.mrb[0].mxu0
  %3720 = vmatprep.mubr.bf16.mxu0 %v2662
  %3721 = vmatmul.mubr.bf16.gmra.mrb[0].mxu0 %v2661
  %v3722 = vpop.f32.mrb[0].mxu0
  %v3723 = vadd.f32 %v3594, %v3722
  %v3724 = vpop.f32.mrb[0].mxu0
  %v3725 = vpop.f32.mrb[0].mxu0
  %v3726 = vadd.f32 %v3597, %v3725
  %v3727 = vpop.f32.mrb[0].mxu0
  %3728 = vmatprep.mubr.bf16.mxu0 %v2671
  %3729 = vmatmul.mubr.bf16.gmra.mrb[0].mxu0 %v2670
  %v3730 = vpop.f32.mrb[0].mxu0
  %v3731 = vadd.f32 %v3602, %v3730
  %v3732 = vpop.f32.mrb[0].mxu0
  %v3733 = vpop.f32.mrb[0].mxu0
  %v3734 = vadd.f32 %v3605, %v3733
  %v3735 = vpop.f32.mrb[0].mxu0
  %3736 = vmatprep.mubr.bf16.mxu0 %v2680
  %3737 = vmatmul.mubr.bf16.gmra.mrb[0].mxu0 %v2679
  %v3738 = vpop.f32.mrb[0].mxu0
  %v3739 = vadd.f32 %v3610, %v3738
  %v3740 = vpop.f32.mrb[0].mxu0
  %v3741 = vpop.f32.mrb[0].mxu0
  %v3742 = vadd.f32 %v3613, %v3741
  %v3743 = vpop.f32.mrb[0].mxu0
  %3744 = vmatprep.mubr.bf16.mxu0 %v2689
  %3745 = vmatmul.mubr.bf16.gmra.mrb[0].mxu0 %v2688
  %v3746 = vpop.f32.mrb[0].mxu0
  %v3747 = vadd.f32 %v3618, %v3746
  %v3748 = vpop.f32.mrb[0].mxu0
  %v3749 = vpop.f32.mrb[0].mxu0
  %v3750 = vadd.f32 %v3621, %v3749
  %v3751 = vpop.f32.mrb[0].mxu0
  %3752 = vmatprep.mubr.bf16.mxu0 %v2698
  %3753 = vmatmul.mubr.bf16.gmra.mrb[0].mxu0 %v2697
  %v3754 = vpop.f32.mrb[0].mxu0
  %v3755 = vadd.f32 %v3626, %v3754
  %v3756 = vpop.f32.mrb[0].mxu0
  %v3757 = vpop.f32.mrb[0].mxu0
  %v3758 = vadd.f32 %v3629, %v3757
  %v3759 = vpop.f32.mrb[0].mxu0
  %3760 = vmatprep.mubr.bf16.mxu0 %v2707
  %3761 = vmatmul.mubr.bf16.gmra.mrb[0].mxu0 %v2706
  %v3762 = vpop.f32.mrb[0].mxu0
  %v3763 = vadd.f32 %v3634, %v3762
  %v3764 = vpop.f32.mrb[0].mxu0
  %v3765 = vpop.f32.mrb[0].mxu0
  %v3766 = vadd.f32 %v3637, %v3765
  %v3767 = vpop.f32.mrb[0].mxu0
  %3768 = vmatprep.mubr.bf16.mxu0 %v2716
  %3769 = vmatmul.mubr.bf16.gmra.mrb[0].mxu0 %v2715
  %v3770 = vpop.f32.mrb[0].mxu0
  %v3771 = vadd.f32 %v3642, %v3770
  %v3772 = vpop.f32.mrb[0].mxu0
  %v3773 = vpop.f32.mrb[0].mxu0
  %v3774 = vadd.f32 %v3645, %v3773
  %v3775 = vpop.f32.mrb[0].mxu0
  %3776 = vmatprep.mubr.bf16.mxu0 %v2725
  %3777 = vmatmul.mubr.bf16.gmra.mrb[0].mxu0 %v2724
  %v3778 = vpop.f32.mrb[0].mxu0
  %v3779 = vadd.f32 %v3650, %v3778
  %v3780 = vpop.f32.mrb[0].mxu0
  %v3781 = vpop.f32.mrb[0].mxu0
  %v3782 = vadd.f32 %v3653, %v3781
  %v3783 = vpop.f32.mrb[0].mxu0
  %3784 = vmatprep.mubr.bf16.mxu0 %v2734
  %3785 = vmatmul.mubr.bf16.gmra.mrb[0].mxu0 %v2733
  %v3786 = vpop.f32.mrb[0].mxu0
  %v3787 = vadd.f32 %v3658, %v3786
  %v3788 = vpop.f32.mrb[0].mxu0
  %v3789 = vpop.f32.mrb[0].mxu0
  %v3790 = vadd.f32 %v3661, %v3789
  %v3791 = vpop.f32.mrb[0].mxu0
  %3792 = vmatprep.mubr.bf16.mxu0 %v2743
  %3793 = vmatmul.mubr.bf16.gmra.mrb[0].mxu0 %v2742
  %v3794 = vpop.f32.mrb[0].mxu0
  %v3795 = vadd.f32 %v3666, %v3794
  %v3796 = vpop.f32.mrb[0].mxu0
  %v3797 = vpop.f32.mrb[0].mxu0
  %v3798 = vadd.f32 %v3669, %v3797
  %v3799 = vpop.f32.mrb[0].mxu0
  %3800 = vdwg.mxu0
  %3801 = vmatprep.subr.bf16.mxu0 0
  %3802 = vmatpush1.bf16.msra.mxu0 %v3205
  %3803 = vmatprep.subr.bf16.mxu0 0
  %3804 = vmatpush1.bf16.msra.mxu0 %v3206
  %3805 = vmatprep.subr.bf16.mxu0 0
  %3806 = vmatpush1.bf16.msra.mxu0 %v3207
  %3807 = vmatprep.subr.bf16.mxu0 0
  %3808 = vmatpush1.bf16.msra.mxu0 %v3208
  %3809 = vmatprep.subr.bf16.mxu0 0
  %3810 = vmatpush1.bf16.msra.mxu0 %v3209
  %3811 = vmatprep.subr.bf16.mxu0 0
  %3812 = vmatpush1.bf16.msra.mxu0 %v3210
  %3813 = vmatprep.subr.bf16.mxu0 0
  %3814 = vmatpush1.bf16.msra.mxu0 %v3211
  %3815 = vmatprep.subr.bf16.mxu0 0
  %3816 = vmatpush1.bf16.msra.mxu0 %v3212
  %3817 = vmatprep.subr.bf16.mxu0 0
  %3818 = vmatpush1.bf16.msra.mxu0 0
  %3819 = vmatprep.subr.bf16.mxu0 0
  %3820 = vmatpush1.bf16.msra.mxu0 0
  %3821 = vmatprep.subr.bf16.mxu0 0
  %3822 = vmatpush1.bf16.msra.mxu0 0
  %3823 = vmatprep.subr.bf16.mxu0 0
  %3824 = vmatpush1.bf16.msra.mxu0 0
  %3825 = vmatprep.subr.bf16.mxu0 0
  %3826 = vmatpush1.bf16.msra.mxu0 0
  %3827 = vmatprep.subr.bf16.mxu0 0
  %3828 = vmatpush1.bf16.msra.mxu0 0
  %3829 = vmatprep.subr.bf16.mxu0 0
  %3830 = vmatpush1.bf16.msra.mxu0 0
  %3831 = vmatprep.subr.bf16.mxu0 0
  %3832 = vmatpush1.bf16.msra.mxu0 0
  %3833 = vmatprep.mubr.bf16.mxu0 0
  %3834 = vmatmul.mubr.bf16.gmra.mrb[0].mxu0 %v2645
  %v3835 = vpop.f32.mrb[0].mxu0
  %v3836 = vadd.f32 %v3707, %v3835
  %v3837 = vpop.f32.mrb[0].mxu0
  %v3838 = vpop.f32.mrb[0].mxu0
  %v3839 = vadd.f32 %v3710, %v3838
  %v3840 = vpop.f32.mrb[0].mxu0
  %3841 = vmatprep.mubr.bf16.mxu0 0
  %3842 = vmatmul.mubr.bf16.gmra.mrb[0].mxu0 %v2654
  %v3843 = vpop.f32.mrb[0].mxu0
  %v3844 = vadd.f32 %v3715, %v3843
  %v3845 = vpop.f32.mrb[0].mxu0
  %v3846 = vpop.f32.mrb[0].mxu0
  %v3847 = vadd.f32 %v3718, %v3846
  %v3848 = vpop.f32.mrb[0].mxu0
  %3849 = vmatprep.mubr.bf16.mxu0 0
  %3850 = vmatmul.mubr.bf16.gmra.mrb[0].mxu0 %v2663
  %v3851 = vpop.f32.mrb[0].mxu0
  %v3852 = vadd.f32 %v3723, %v3851
  %v3853 = vpop.f32.mrb[0].mxu0
  %v3854 = vpop.f32.mrb[0].mxu0
  %v3855 = vadd.f32 %v3726, %v3854
  %v3856 = vpop.f32.mrb[0].mxu0
  %3857 = vmatprep.mubr.bf16.mxu0 0
  %3858 = vmatmul.mubr.bf16.gmra.mrb[0].mxu0 %v2672
  %v3859 = vpop.f32.mrb[0].mxu0
  %v3860 = vadd.f32 %v3731, %v3859
  %v3861 = vpop.f32.mrb[0].mxu0
  %v3862 = vpop.f32.mrb[0].mxu0
  %v3863 = vadd.f32 %v3734, %v3862
  %v3864 = vpop.f32.mrb[0].mxu0
  %3865 = vmatprep.mubr.bf16.mxu0 0
  %3866 = vmatmul.mubr.bf16.gmra.mrb[0].mxu0 %v2681
  %v3867 = vpop.f32.mrb[0].mxu0
  %v3868 = vadd.f32 %v3739, %v3867
  %v3869 = vpop.f32.mrb[0].mxu0
  %v3870 = vpop.f32.mrb[0].mxu0
  %v3871 = vadd.f32 %v3742, %v3870
  %v3872 = vpop.f32.mrb[0].mxu0
  %3873 = vmatprep.mubr.bf16.mxu0 0
  %3874 = vmatmul.mubr.bf16.gmra.mrb[0].mxu0 %v2690
  %v3875 = vpop.f32.mrb[0].mxu0
  %v3876 = vadd.f32 %v3747, %v3875
  %v3877 = vpop.f32.mrb[0].mxu0
  %v3878 = vpop.f32.mrb[0].mxu0
  %v3879 = vadd.f32 %v3750, %v3878
  %v3880 = vpop.f32.mrb[0].mxu0
  %3881 = vmatprep.mubr.bf16.mxu0 0
  %3882 = vmatmul.mubr.bf16.gmra.mrb[0].mxu0 %v2699
  %v3883 = vpop.f32.mrb[0].mxu0
  %v3884 = vadd.f32 %v3755, %v3883
  %v3885 = vpop.f32.mrb[0].mxu0
  %v3886 = vpop.f32.mrb[0].mxu0
  %v3887 = vadd.f32 %v3758, %v3886
  %v3888 = vpop.f32.mrb[0].mxu0
  %3889 = vmatprep.mubr.bf16.mxu0 0
  %3890 = vmatmul.mubr.bf16.gmra.mrb[0].mxu0 %v2708
  %v3891 = vpop.f32.mrb[0].mxu0
  %v3892 = vadd.f32 %v3763, %v3891
  %v3893 = vpop.f32.mrb[0].mxu0
  %v3894 = vpop.f32.mrb[0].mxu0
  %v3895 = vadd.f32 %v3766, %v3894
  %v3896 = vpop.f32.mrb[0].mxu0
  %3897 = vmatprep.mubr.bf16.mxu0 0
  %3898 = vmatmul.mubr.bf16.gmra.mrb[0].mxu0 %v2717
  %v3899 = vpop.f32.mrb[0].mxu0
  %v3900 = vadd.f32 %v3771, %v3899
  %v3901 = vpop.f32.mrb[0].mxu0
  %v3902 = vpop.f32.mrb[0].mxu0
  %v3903 = vadd.f32 %v3774, %v3902
  %v3904 = vpop.f32.mrb[0].mxu0
  %3905 = vmatprep.mubr.bf16.mxu0 0
  %3906 = vmatmul.mubr.bf16.gmra.mrb[0].mxu0 %v2726
  %v3907 = vpop.f32.mrb[0].mxu0
  %v3908 = vadd.f32 %v3779, %v3907
  %v3909 = vpop.f32.mrb[0].mxu0
  %v3910 = vpop.f32.mrb[0].mxu0
  %v3911 = vadd.f32 %v3782, %v3910
  %v3912 = vpop.f32.mrb[0].mxu0
  %3913 = vmatprep.mubr.bf16.mxu0 0
  %3914 = vmatmul.mubr.bf16.gmra.mrb[0].mxu0 %v2735
  %v3915 = vpop.f32.mrb[0].mxu0
  %v3916 = vadd.f32 %v3787, %v3915
  %v3917 = vpop.f32.mrb[0].mxu0
  %v3918 = vpop.f32.mrb[0].mxu0
  %v3919 = vadd.f32 %v3790, %v3918
  %v3920 = vpop.f32.mrb[0].mxu0
  %3921 = vmatprep.mubr.bf16.mxu0 0
  %3922 = vmatmul.mubr.bf16.gmra.mrb[0].mxu0 %v2744
  %v3923 = vpop.f32.mrb[0].mxu0
  %v3924 = vadd.f32 %v3795, %v3923
  %v3925 = vpop.f32.mrb[0].mxu0
  %v3926 = vpop.f32.mrb[0].mxu0
  %v3927 = vadd.f32 %v3798, %v3926
  %v3928 = vpop.f32.mrb[0].mxu0
  %3929 = vdwg.mxu0
  %vm3930 = vcmask 400384
  %v3931 = vsel %vm3930, %v3836, 0.0
  %3932 = vadd.xlane.f32.xlu0 %v3931
  %v3933 = vpop.xlane.xlu0 %3932
  %v3934 = vsel %vm3930, %v3839, 0.0
  %3935 = vadd.xlane.f32.xlu0 %v3934
  %v3936 = vpop.xlane.xlu0 %3935
  %v3937 = vsel %vm3930, %v3844, 0.0
  %3938 = vadd.xlane.f32.xlu0 %v3937
  %v3939 = vpop.xlane.xlu0 %3938
  %v3940 = vsel %vm3930, %v3847, 0.0
  %3941 = vadd.xlane.f32.xlu0 %v3940
  %v3942 = vpop.xlane.xlu0 %3941
  %v3943 = vsel %vm3930, %v3852, 0.0
  %3944 = vadd.xlane.f32.xlu0 %v3943
  %v3945 = vpop.xlane.xlu0 %3944
  %v3946 = vsel %vm3930, %v3855, 0.0
  %3947 = vadd.xlane.f32.xlu0 %v3946
  %v3948 = vpop.xlane.xlu0 %3947
  %v3949 = vsel %vm3930, %v3860, 0.0
  %3950 = vadd.xlane.f32.xlu0 %v3949
  %v3951 = vpop.xlane.xlu0 %3950
  %v3952 = vsel %vm3930, %v3863, 0.0
  %3953 = vadd.xlane.f32.xlu0 %v3952
  %v3954 = vpop.xlane.xlu0 %3953
  %v3955 = vsel %vm3930, %v3868, 0.0
  %3956 = vadd.xlane.f32.xlu0 %v3955
  %v3957 = vpop.xlane.xlu0 %3956
  %v3958 = vsel %vm3930, %v3871, 0.0
  %3959 = vadd.xlane.f32.xlu0 %v3958
  %v3960 = vpop.xlane.xlu0 %3959
  %v3961 = vsel %vm3930, %v3876, 0.0
  %3962 = vadd.xlane.f32.xlu0 %v3961
  %v3963 = vpop.xlane.xlu0 %3962
  %v3964 = vsel %vm3930, %v3879, 0.0
  %3965 = vadd.xlane.f32.xlu0 %v3964
  %v3966 = vpop.xlane.xlu0 %3965
  %v3967 = vsel %vm3930, %v3884, 0.0
  %3968 = vadd.xlane.f32.xlu0 %v3967
  %v3969 = vpop.xlane.xlu0 %3968
  %v3970 = vsel %vm3930, %v3887, 0.0
  %3971 = vadd.xlane.f32.xlu0 %v3970
  %v3972 = vpop.xlane.xlu0 %3971
  %v3973 = vsel %vm3930, %v3892, 0.0
  %3974 = vadd.xlane.f32.xlu0 %v3973
  %v3975 = vpop.xlane.xlu0 %3974
  %v3976 = vsel %vm3930, %v3895, 0.0
  %3977 = vadd.xlane.f32.xlu0 %v3976
  %v3978 = vpop.xlane.xlu0 %3977
  %v3979 = vsel %vm3930, %v3900, 0.0
  %3980 = vadd.xlane.f32.xlu0 %v3979
  %v3981 = vpop.xlane.xlu0 %3980
  %v3982 = vsel %vm3930, %v3903, 0.0
  %3983 = vadd.xlane.f32.xlu0 %v3982
  %v3984 = vpop.xlane.xlu0 %3983
  %v3985 = vsel %vm3930, %v3908, 0.0
  %3986 = vadd.xlane.f32.xlu0 %v3985
  %v3987 = vpop.xlane.xlu0 %3986
  %v3988 = vsel %vm3930, %v3911, 0.0
  %3989 = vadd.xlane.f32.xlu0 %v3988
  %v3990 = vpop.xlane.xlu0 %3989
  %v3991 = vsel %vm3930, %v3916, 0.0
  %3992 = vadd.xlane.f32.xlu0 %v3991
  %v3993 = vpop.xlane.xlu0 %3992
  %v3994 = vsel %vm3930, %v3919, 0.0
  %3995 = vadd.xlane.f32.xlu0 %v3994
  %v3996 = vpop.xlane.xlu0 %3995
  %v3997 = vsel %vm3930, %v3924, 0.0
  %3998 = vadd.xlane.f32.xlu0 %v3997
  %v3999 = vpop.xlane.xlu0 %3998
  %v4000 = vsel %vm3930, %v3927, 0.0
  %4001 = vadd.xlane.f32.xlu0 %v4000
  %v4002 = vpop.xlane.xlu0 %4001
  %v4003 = vmul.f32 %v3933, 0.020408163
  %v4004 = vmul.f32 %v3936, 0.020408163
  %v4005 = vmul.f32 %v3939, 0.020408163
  %v4006 = vmul.f32 %v3942, 0.020408163
  %v4007 = vmul.f32 %v3945, 0.020408163
  %v4008 = vmul.f32 %v3948, 0.020408163
  %v4009 = vmul.f32 %v3951, 0.020408163
  %v4010 = vmul.f32 %v3954, 0.020408163
  %v4011 = vmul.f32 %v3957, 0.020408163
  %v4012 = vmul.f32 %v3960, 0.020408163
  %v4013 = vmul.f32 %v3963, 0.020408163
  %v4014 = vmul.f32 %v3966, 0.020408163
  %v4015 = vmul.f32 %v3969, 0.020408163
  %v4016 = vmul.f32 %v3972, 0.020408163
  %v4017 = vmul.f32 %v3975, 0.020408163
  %v4018 = vmul.f32 %v3978, 0.020408163
  %v4019 = vmul.f32 %v3981, 0.020408163
  %v4020 = vmul.f32 %v3984, 0.020408163
  %v4021 = vmul.f32 %v3987, 0.020408163
  %v4022 = vmul.f32 %v3990, 0.020408163
  %v4023 = vmul.f32 %v3993, 0.020408163
  %v4024 = vmul.f32 %v3996, 0.020408163
  %v4025 = vmul.f32 %v3999, 0.020408163
  %v4026 = vmul.f32 %v4002, 0.020408163
  %v4027 = vsub.f32 %v3836, %v4003
  %v4028 = vsub.f32 %v3839, %v4004
  %v4029 = vsub.f32 %v3844, %v4005
  %v4030 = vsub.f32 %v3847, %v4006
  %v4031 = vsub.f32 %v3852, %v4007
  %v4032 = vsub.f32 %v3855, %v4008
  %v4033 = vsub.f32 %v3860, %v4009
  %v4034 = vsub.f32 %v3863, %v4010
  %v4035 = vsub.f32 %v3868, %v4011
  %v4036 = vsub.f32 %v3871, %v4012
  %v4037 = vsub.f32 %v3876, %v4013
  %v4038 = vsub.f32 %v3879, %v4014
  %v4039 = vsub.f32 %v3884, %v4015
  %v4040 = vsub.f32 %v3887, %v4016
  %v4041 = vsub.f32 %v3892, %v4017
  %v4042 = vsub.f32 %v3895, %v4018
  %v4043 = vsub.f32 %v3900, %v4019
  %v4044 = vsub.f32 %v3903, %v4020
  %v4045 = vsub.f32 %v3908, %v4021
  %v4046 = vsub.f32 %v3911, %v4022
  %v4047 = vsub.f32 %v3916, %v4023
  %v4048 = vsub.f32 %v3919, %v4024
  %v4049 = vsub.f32 %v3924, %v4025
  %v4050 = vsub.f32 %v3927, %v4026
  %v4051 = vmul.f32 %v4027, %v4027
  %v4052 = vmul.f32 %v4028, %v4028
  %v4053 = vmul.f32 %v4029, %v4029
  %v4054 = vmul.f32 %v4030, %v4030
  %v4055 = vmul.f32 %v4031, %v4031
  %v4056 = vmul.f32 %v4032, %v4032
  %v4057 = vmul.f32 %v4033, %v4033
  %v4058 = vmul.f32 %v4034, %v4034
  %v4059 = vmul.f32 %v4035, %v4035
  %v4060 = vmul.f32 %v4036, %v4036
  %v4061 = vmul.f32 %v4037, %v4037
  %v4062 = vmul.f32 %v4038, %v4038
  %v4063 = vmul.f32 %v4039, %v4039
  %v4064 = vmul.f32 %v4040, %v4040
  %v4065 = vmul.f32 %v4041, %v4041
  %v4066 = vmul.f32 %v4042, %v4042
  %v4067 = vmul.f32 %v4043, %v4043
  %v4068 = vmul.f32 %v4044, %v4044
  %v4069 = vmul.f32 %v4045, %v4045
  %v4070 = vmul.f32 %v4046, %v4046
  %v4071 = vmul.f32 %v4047, %v4047
  %v4072 = vmul.f32 %v4048, %v4048
  %v4073 = vmul.f32 %v4049, %v4049
  %v4074 = vmul.f32 %v4050, %v4050
  %v4075 = vsel %vm3930, %v4051, 0.0
  %4076 = vadd.xlane.f32.xlu0 %v4075
  %v4077 = vpop.xlane.xlu0 %4076
  %v4078 = vsel %vm3930, %v4052, 0.0
  %4079 = vadd.xlane.f32.xlu0 %v4078
  %v4080 = vpop.xlane.xlu0 %4079
  %v4081 = vsel %vm3930, %v4053, 0.0
  %4082 = vadd.xlane.f32.xlu0 %v4081
  %v4083 = vpop.xlane.xlu0 %4082
  %v4084 = vsel %vm3930, %v4054, 0.0
  %4085 = vadd.xlane.f32.xlu0 %v4084
  %v4086 = vpop.xlane.xlu0 %4085
  %v4087 = vsel %vm3930, %v4055, 0.0
  %4088 = vadd.xlane.f32.xlu0 %v4087
  %v4089 = vpop.xlane.xlu0 %4088
  %v4090 = vsel %vm3930, %v4056, 0.0
  %4091 = vadd.xlane.f32.xlu0 %v4090
  %v4092 = vpop.xlane.xlu0 %4091
  %v4093 = vsel %vm3930, %v4057, 0.0
  %4094 = vadd.xlane.f32.xlu0 %v4093
  %v4095 = vpop.xlane.xlu0 %4094
  %v4096 = vsel %vm3930, %v4058, 0.0
  %4097 = vadd.xlane.f32.xlu0 %v4096
  %v4098 = vpop.xlane.xlu0 %4097
  %v4099 = vsel %vm3930, %v4059, 0.0
  %4100 = vadd.xlane.f32.xlu0 %v4099
  %v4101 = vpop.xlane.xlu0 %4100
  %v4102 = vsel %vm3930, %v4060, 0.0
  %4103 = vadd.xlane.f32.xlu0 %v4102
  %v4104 = vpop.xlane.xlu0 %4103
  %v4105 = vsel %vm3930, %v4061, 0.0
  %4106 = vadd.xlane.f32.xlu0 %v4105
  %v4107 = vpop.xlane.xlu0 %4106
  %v4108 = vsel %vm3930, %v4062, 0.0
  %4109 = vadd.xlane.f32.xlu0 %v4108
  %v4110 = vpop.xlane.xlu0 %4109
  %v4111 = vsel %vm3930, %v4063, 0.0
  %4112 = vadd.xlane.f32.xlu0 %v4111
  %v4113 = vpop.xlane.xlu0 %4112
  %v4114 = vsel %vm3930, %v4064, 0.0
  %4115 = vadd.xlane.f32.xlu0 %v4114
  %v4116 = vpop.xlane.xlu0 %4115
  %v4117 = vsel %vm3930, %v4065, 0.0
  %4118 = vadd.xlane.f32.xlu0 %v4117
  %v4119 = vpop.xlane.xlu0 %4118
  %v4120 = vsel %vm3930, %v4066, 0.0
  %4121 = vadd.xlane.f32.xlu0 %v4120
  %v4122 = vpop.xlane.xlu0 %4121
  %v4123 = vsel %vm3930, %v4067, 0.0
  %4124 = vadd.xlane.f32.xlu0 %v4123
  %v4125 = vpop.xlane.xlu0 %4124
  %v4126 = vsel %vm3930, %v4068, 0.0
  %4127 = vadd.xlane.f32.xlu0 %v4126
  %v4128 = vpop.xlane.xlu0 %4127
  %v4129 = vsel %vm3930, %v4069, 0.0
  %4130 = vadd.xlane.f32.xlu0 %v4129
  %v4131 = vpop.xlane.xlu0 %4130
  %v4132 = vsel %vm3930, %v4070, 0.0
  %4133 = vadd.xlane.f32.xlu0 %v4132
  %v4134 = vpop.xlane.xlu0 %4133
  %v4135 = vsel %vm3930, %v4071, 0.0
  %4136 = vadd.xlane.f32.xlu0 %v4135
  %v4137 = vpop.xlane.xlu0 %4136
  %v4138 = vsel %vm3930, %v4072, 0.0
  %4139 = vadd.xlane.f32.xlu0 %v4138
  %v4140 = vpop.xlane.xlu0 %4139
  %v4141 = vsel %vm3930, %v4073, 0.0
  %4142 = vadd.xlane.f32.xlu0 %v4141
  %v4143 = vpop.xlane.xlu0 %4142
  %v4144 = vsel %vm3930, %v4074, 0.0
  %4145 = vadd.xlane.f32.xlu0 %v4144
  %v4146 = vpop.xlane.xlu0 %4145
  %v4147 = vmul.f32 %v4077, 0.020408163
  %v4148 = vmul.f32 %v4080, 0.020408163
  %v4149 = vmul.f32 %v4083, 0.020408163
  %v4150 = vmul.f32 %v4086, 0.020408163
  %v4151 = vmul.f32 %v4089, 0.020408163
  %v4152 = vmul.f32 %v4092, 0.020408163
  %v4153 = vmul.f32 %v4095, 0.020408163
  %v4154 = vmul.f32 %v4098, 0.020408163
  %v4155 = vmul.f32 %v4101, 0.020408163
  %v4156 = vmul.f32 %v4104, 0.020408163
  %v4157 = vmul.f32 %v4107, 0.020408163
  %v4158 = vmul.f32 %v4110, 0.020408163
  %v4159 = vmul.f32 %v4113, 0.020408163
  %v4160 = vmul.f32 %v4116, 0.020408163
  %v4161 = vmul.f32 %v4119, 0.020408163
  %v4162 = vmul.f32 %v4122, 0.020408163
  %v4163 = vmul.f32 %v4125, 0.020408163
  %v4164 = vmul.f32 %v4128, 0.020408163
  %v4165 = vmul.f32 %v4131, 0.020408163
  %v4166 = vmul.f32 %v4134, 0.020408163
  %v4167 = vmul.f32 %v4137, 0.020408163
  %v4168 = vmul.f32 %v4140, 0.020408163
  %v4169 = vmul.f32 %v4143, 0.020408163
  %v4170 = vmul.f32 %v4146, 0.020408163
  %v4171 = vadd.f32 %v4147, 1e-05
  %v4172 = vadd.f32 %v4148, 1e-05
  %v4173 = vadd.f32 %v4149, 1e-05
  %v4174 = vadd.f32 %v4150, 1e-05
  %v4175 = vadd.f32 %v4151, 1e-05
  %v4176 = vadd.f32 %v4152, 1e-05
  %v4177 = vadd.f32 %v4153, 1e-05
  %v4178 = vadd.f32 %v4154, 1e-05
  %v4179 = vadd.f32 %v4155, 1e-05
  %v4180 = vadd.f32 %v4156, 1e-05
  %v4181 = vadd.f32 %v4157, 1e-05
  %v4182 = vadd.f32 %v4158, 1e-05
  %v4183 = vadd.f32 %v4159, 1e-05
  %v4184 = vadd.f32 %v4160, 1e-05
  %v4185 = vadd.f32 %v4161, 1e-05
  %v4186 = vadd.f32 %v4162, 1e-05
  %v4187 = vadd.f32 %v4163, 1e-05
  %v4188 = vadd.f32 %v4164, 1e-05
  %v4189 = vadd.f32 %v4165, 1e-05
  %v4190 = vadd.f32 %v4166, 1e-05
  %v4191 = vadd.f32 %v4167, 1e-05
  %v4192 = vadd.f32 %v4168, 1e-05
  %v4193 = vadd.f32 %v4169, 1e-05
  %v4194 = vadd.f32 %v4170, 1e-05
  %v4195 = vrsqrt.pop %v4171
  %v4196 = vrsqrt.pop %v4172
  %v4197 = vrsqrt.pop %v4173
  %v4198 = vrsqrt.pop %v4174
  %v4199 = vrsqrt.pop %v4175
  %v4200 = vrsqrt.pop %v4176
  %v4201 = vrsqrt.pop %v4177
  %v4202 = vrsqrt.pop %v4178
  %v4203 = vrsqrt.pop %v4179
  %v4204 = vrsqrt.pop %v4180
  %v4205 = vrsqrt.pop %v4181
  %v4206 = vrsqrt.pop %v4182
  %v4207 = vrsqrt.pop %v4183
  %v4208 = vrsqrt.pop %v4184
  %v4209 = vrsqrt.pop %v4185
  %v4210 = vrsqrt.pop %v4186
  %v4211 = vrsqrt.pop %v4187
  %v4212 = vrsqrt.pop %v4188
  %v4213 = vrsqrt.pop %v4189
  %v4214 = vrsqrt.pop %v4190
  %v4215 = vrsqrt.pop %v4191
  %v4216 = vrsqrt.pop %v4192
  %v4217 = vrsqrt.pop %v4193
  %v4218 = vrsqrt.pop %v4194
  %v4219 = vld [vmem:[%s3] sm:$0xff]
  %v4220 = vld [vmem:[%s3 + $0x8] sm:$0xff]
  %v4221 = vld [vmem:[%s3 + $0x10] sm:$0xff]
  %v4222 = vld [vmem:[%s3 + $0x18] sm:$0xff]
  %v4223 = vld [vmem:[%s3 + $0x20] sm:$0xff]
  %v4224 = vld [vmem:[%s3 + $0x28] sm:$0xff]
  %v4225 = vld [vmem:[%s3 + $0x30] sm:$0xff]
  %v4226 = vld [vmem:[%s3 + $0x38] sm:$0xff]
  %v4227 = vld [vmem:[%s3 + $0x40] sm:$0xff]
  %v4228 = vld [vmem:[%s3 + $0x48] sm:$0xff]
  %v4229 = vld [vmem:[%s3 + $0x50] sm:$0xff]
  %v4230 = vld [vmem:[%s3 + $0x58] sm:$0xff]
  %v4231 = vld [vmem:[%s3 + $0x60] sm:$0xff]
  %v4232 = vld [vmem:[%s3 + $0x68] sm:$0xff]
  %v4233 = vld [vmem:[%s3 + $0x70] sm:$0xff]
  %v4234 = vld [vmem:[%s3 + $0x78] sm:$0xff]
  %v4235 = vld [vmem:[%s3 + $0x80] sm:$0xff]
  %v4236 = vld [vmem:[%s3 + $0x88] sm:$0xff]
  %v4237 = vld [vmem:[%s3 + $0x90] sm:$0xff]
  %v4238 = vld [vmem:[%s3 + $0x98] sm:$0xff]
  %v4239 = vld [vmem:[%s3 + $0xa0] sm:$0xff]
  %v4240 = vld [vmem:[%s3 + $0xa8] sm:$0xff]
  %v4241 = vld [vmem:[%s3 + $0xb0] sm:$0xff]
  %v4242 = vld [vmem:[%s3 + $0xb8] sm:$0xff]
  %v4243 = vmul.f32 %v4219, %v4195
  %v4244 = vmul.f32 %v4220, %v4196
  %v4245 = vmul.f32 %v4221, %v4197
  %v4246 = vmul.f32 %v4222, %v4198
  %v4247 = vmul.f32 %v4223, %v4199
  %v4248 = vmul.f32 %v4224, %v4200
  %v4249 = vmul.f32 %v4225, %v4201
  %v4250 = vmul.f32 %v4226, %v4202
  %v4251 = vmul.f32 %v4227, %v4203
  %v4252 = vmul.f32 %v4228, %v4204
  %v4253 = vmul.f32 %v4229, %v4205
  %v4254 = vmul.f32 %v4230, %v4206
  %v4255 = vmul.f32 %v4231, %v4207
  %v4256 = vmul.f32 %v4232, %v4208
  %v4257 = vmul.f32 %v4233, %v4209
  %v4258 = vmul.f32 %v4234, %v4210
  %v4259 = vmul.f32 %v4235, %v4211
  %v4260 = vmul.f32 %v4236, %v4212
  %v4261 = vmul.f32 %v4237, %v4213
  %v4262 = vmul.f32 %v4238, %v4214
  %v4263 = vmul.f32 %v4239, %v4215
  %v4264 = vmul.f32 %v4240, %v4216
  %v4265 = vmul.f32 %v4241, %v4217
  %v4266 = vmul.f32 %v4242, %v4218
  %v4267 = vld [vmem:[%s4] sm:$0xff]
  %v4268 = vld [vmem:[%s4 + $0x8] sm:$0xff]
  %v4269 = vld [vmem:[%s4 + $0x10] sm:$0xff]
  %v4270 = vld [vmem:[%s4 + $0x18] sm:$0xff]
  %v4271 = vld [vmem:[%s4 + $0x20] sm:$0xff]
  %v4272 = vld [vmem:[%s4 + $0x28] sm:$0xff]
  %v4273 = vld [vmem:[%s4 + $0x30] sm:$0xff]
  %v4274 = vld [vmem:[%s4 + $0x38] sm:$0xff]
  %v4275 = vld [vmem:[%s4 + $0x40] sm:$0xff]
  %v4276 = vld [vmem:[%s4 + $0x48] sm:$0xff]
  %v4277 = vld [vmem:[%s4 + $0x50] sm:$0xff]
  %v4278 = vld [vmem:[%s4 + $0x58] sm:$0xff]
  %v4279 = vld [vmem:[%s4 + $0x60] sm:$0xff]
  %v4280 = vld [vmem:[%s4 + $0x68] sm:$0xff]
  %v4281 = vld [vmem:[%s4 + $0x70] sm:$0xff]
  %v4282 = vld [vmem:[%s4 + $0x78] sm:$0xff]
  %v4283 = vld [vmem:[%s4 + $0x80] sm:$0xff]
  %v4284 = vld [vmem:[%s4 + $0x88] sm:$0xff]
  %v4285 = vld [vmem:[%s4 + $0x90] sm:$0xff]
  %v4286 = vld [vmem:[%s4 + $0x98] sm:$0xff]
  %v4287 = vld [vmem:[%s4 + $0xa0] sm:$0xff]
  %v4288 = vld [vmem:[%s4 + $0xa8] sm:$0xff]
  %v4289 = vld [vmem:[%s4 + $0xb0] sm:$0xff]
  %v4290 = vld [vmem:[%s4 + $0xb8] sm:$0xff]
  %v4291 = vmul.f32 %v4003, %v4243
  %v4292 = vmul.f32 %v4004, %v4244
  %v4293 = vmul.f32 %v4005, %v4245
  %v4294 = vmul.f32 %v4006, %v4246
  %v4295 = vmul.f32 %v4007, %v4247
  %v4296 = vmul.f32 %v4008, %v4248
  %v4297 = vmul.f32 %v4009, %v4249
  %v4298 = vmul.f32 %v4010, %v4250
  %v4299 = vmul.f32 %v4011, %v4251
  %v4300 = vmul.f32 %v4012, %v4252
  %v4301 = vmul.f32 %v4013, %v4253
  %v4302 = vmul.f32 %v4014, %v4254
  %v4303 = vmul.f32 %v4015, %v4255
  %v4304 = vmul.f32 %v4016, %v4256
  %v4305 = vmul.f32 %v4017, %v4257
  %v4306 = vmul.f32 %v4018, %v4258
  %v4307 = vmul.f32 %v4019, %v4259
  %v4308 = vmul.f32 %v4020, %v4260
  %v4309 = vmul.f32 %v4021, %v4261
  %v4310 = vmul.f32 %v4022, %v4262
  %v4311 = vmul.f32 %v4023, %v4263
  %v4312 = vmul.f32 %v4024, %v4264
  %v4313 = vmul.f32 %v4025, %v4265
  %v4314 = vmul.f32 %v4026, %v4266
  %v4315 = vsub.f32 %v4267, %v4291
  %v4316 = vsub.f32 %v4268, %v4292
  %v4317 = vsub.f32 %v4269, %v4293
  %v4318 = vsub.f32 %v4270, %v4294
  %v4319 = vsub.f32 %v4271, %v4295
  %v4320 = vsub.f32 %v4272, %v4296
  %v4321 = vsub.f32 %v4273, %v4297
  %v4322 = vsub.f32 %v4274, %v4298
  %v4323 = vsub.f32 %v4275, %v4299
  %v4324 = vsub.f32 %v4276, %v4300
  %v4325 = vsub.f32 %v4277, %v4301
  %v4326 = vsub.f32 %v4278, %v4302
  %v4327 = vsub.f32 %v4279, %v4303
  %v4328 = vsub.f32 %v4280, %v4304
  %v4329 = vsub.f32 %v4281, %v4305
  %v4330 = vsub.f32 %v4282, %v4306
  %v4331 = vsub.f32 %v4283, %v4307
  %v4332 = vsub.f32 %v4284, %v4308
  %v4333 = vsub.f32 %v4285, %v4309
  %v4334 = vsub.f32 %v4286, %v4310
  %v4335 = vsub.f32 %v4287, %v4311
  %v4336 = vsub.f32 %v4288, %v4312
  %v4337 = vsub.f32 %v4289, %v4313
  %v4338 = vsub.f32 %v4290, %v4314
  %4340 = vset.pattern.permute.xlu0 0
  %4341 = vperm.xlu0 %4340, %v4243
  %v4342 = vpop.permute.xlu0 %4341
  %4345 = vset.pattern.permute.xlu0 0
  %4346 = vperm.xlu0 %4345, %v4244
  %v4347 = vpop.permute.xlu0 %4346
  %4350 = vset.pattern.permute.xlu0 0
  %4351 = vperm.xlu0 %4350, %v4245
  %v4352 = vpop.permute.xlu0 %4351
  %4355 = vset.pattern.permute.xlu0 0
  %4356 = vperm.xlu0 %4355, %v4246
  %v4357 = vpop.permute.xlu0 %4356
  %4360 = vset.pattern.permute.xlu0 0
  %4361 = vperm.xlu0 %4360, %v4247
  %v4362 = vpop.permute.xlu0 %4361
  %4365 = vset.pattern.permute.xlu0 0
  %4366 = vperm.xlu0 %4365, %v4248
  %v4367 = vpop.permute.xlu0 %4366
  %4370 = vset.pattern.permute.xlu0 0
  %4371 = vperm.xlu0 %4370, %v4249
  %v4372 = vpop.permute.xlu0 %4371
  %4375 = vset.pattern.permute.xlu0 0
  %4376 = vperm.xlu0 %4375, %v4250
  %v4377 = vpop.permute.xlu0 %4376
  %4380 = vset.pattern.permute.xlu0 0
  %4381 = vperm.xlu0 %4380, %v4251
  %v4382 = vpop.permute.xlu0 %4381
  %4385 = vset.pattern.permute.xlu0 0
  %4386 = vperm.xlu0 %4385, %v4252
  %v4387 = vpop.permute.xlu0 %4386
  %4390 = vset.pattern.permute.xlu0 0
  %4391 = vperm.xlu0 %4390, %v4253
  %v4392 = vpop.permute.xlu0 %4391
  %4395 = vset.pattern.permute.xlu0 0
  %4396 = vperm.xlu0 %4395, %v4254
  %v4397 = vpop.permute.xlu0 %4396
  %4400 = vset.pattern.permute.xlu0 0
  %4401 = vperm.xlu0 %4400, %v4255
  %v4402 = vpop.permute.xlu0 %4401
  %4405 = vset.pattern.permute.xlu0 0
  %4406 = vperm.xlu0 %4405, %v4256
  %v4407 = vpop.permute.xlu0 %4406
  %4410 = vset.pattern.permute.xlu0 0
  %4411 = vperm.xlu0 %4410, %v4257
  %v4412 = vpop.permute.xlu0 %4411
  %4415 = vset.pattern.permute.xlu0 0
  %4416 = vperm.xlu0 %4415, %v4258
  %v4417 = vpop.permute.xlu0 %4416
  %4420 = vset.pattern.permute.xlu0 0
  %4421 = vperm.xlu0 %4420, %v4259
  %v4422 = vpop.permute.xlu0 %4421
  %4425 = vset.pattern.permute.xlu0 0
  %4426 = vperm.xlu0 %4425, %v4260
  %v4427 = vpop.permute.xlu0 %4426
  %4430 = vset.pattern.permute.xlu0 0
  %4431 = vperm.xlu0 %4430, %v4261
  %v4432 = vpop.permute.xlu0 %4431
  %4435 = vset.pattern.permute.xlu0 0
  %4436 = vperm.xlu0 %4435, %v4262
  %v4437 = vpop.permute.xlu0 %4436
  %4440 = vset.pattern.permute.xlu0 0
  %4441 = vperm.xlu0 %4440, %v4263
  %v4442 = vpop.permute.xlu0 %4441
  %4445 = vset.pattern.permute.xlu0 0
  %4446 = vperm.xlu0 %4445, %v4264
  %v4447 = vpop.permute.xlu0 %4446
  %4450 = vset.pattern.permute.xlu0 0
  %4451 = vperm.xlu0 %4450, %v4265
  %v4452 = vpop.permute.xlu0 %4451
  %4455 = vset.pattern.permute.xlu0 0
  %4456 = vperm.xlu0 %4455, %v4266
  %v4457 = vpop.permute.xlu0 %4456
  %v4459 = vmul.f32 %v3836, %v4342
  %v4460 = vmul.f32 %v3839, %v4347
  %v4461 = vmul.f32 %v3844, %v4352
  %v4462 = vmul.f32 %v3847, %v4357
  %v4463 = vmul.f32 %v3852, %v4362
  %v4464 = vmul.f32 %v3855, %v4367
  %v4465 = vmul.f32 %v3860, %v4372
  %v4466 = vmul.f32 %v3863, %v4377
  %v4467 = vmul.f32 %v3868, %v4382
  %v4468 = vmul.f32 %v3871, %v4387
  %v4469 = vmul.f32 %v3876, %v4392
  %v4470 = vmul.f32 %v3879, %v4397
  %v4471 = vmul.f32 %v3884, %v4402
  %v4472 = vmul.f32 %v3887, %v4407
  %v4473 = vmul.f32 %v3892, %v4412
  %v4474 = vmul.f32 %v3895, %v4417
  %v4475 = vmul.f32 %v3900, %v4422
  %v4476 = vmul.f32 %v3903, %v4427
  %v4477 = vmul.f32 %v3908, %v4432
  %v4478 = vmul.f32 %v3911, %v4437
  %v4479 = vmul.f32 %v3916, %v4442
  %v4480 = vmul.f32 %v3919, %v4447
  %v4481 = vmul.f32 %v3924, %v4452
  %v4482 = vmul.f32 %v3927, %v4457
  %4484 = vset.pattern.permute.xlu0 0
  %4485 = vperm.xlu0 %4484, %v4315
  %v4486 = vpop.permute.xlu0 %4485
  %4489 = vset.pattern.permute.xlu0 0
  %4490 = vperm.xlu0 %4489, %v4316
  %v4491 = vpop.permute.xlu0 %4490
  %4494 = vset.pattern.permute.xlu0 0
  %4495 = vperm.xlu0 %4494, %v4317
  %v4496 = vpop.permute.xlu0 %4495
  %4499 = vset.pattern.permute.xlu0 0
  %4500 = vperm.xlu0 %4499, %v4318
  %v4501 = vpop.permute.xlu0 %4500
  %4504 = vset.pattern.permute.xlu0 0
  %4505 = vperm.xlu0 %4504, %v4319
  %v4506 = vpop.permute.xlu0 %4505
  %4509 = vset.pattern.permute.xlu0 0
  %4510 = vperm.xlu0 %4509, %v4320
  %v4511 = vpop.permute.xlu0 %4510
  %4514 = vset.pattern.permute.xlu0 0
  %4515 = vperm.xlu0 %4514, %v4321
  %v4516 = vpop.permute.xlu0 %4515
  %4519 = vset.pattern.permute.xlu0 0
  %4520 = vperm.xlu0 %4519, %v4322
  %v4521 = vpop.permute.xlu0 %4520
  %4524 = vset.pattern.permute.xlu0 0
  %4525 = vperm.xlu0 %4524, %v4323
  %v4526 = vpop.permute.xlu0 %4525
  %4529 = vset.pattern.permute.xlu0 0
  %4530 = vperm.xlu0 %4529, %v4324
  %v4531 = vpop.permute.xlu0 %4530
  %4534 = vset.pattern.permute.xlu0 0
  %4535 = vperm.xlu0 %4534, %v4325
  %v4536 = vpop.permute.xlu0 %4535
  %4539 = vset.pattern.permute.xlu0 0
  %4540 = vperm.xlu0 %4539, %v4326
  %v4541 = vpop.permute.xlu0 %4540
  %4544 = vset.pattern.permute.xlu0 0
  %4545 = vperm.xlu0 %4544, %v4327
  %v4546 = vpop.permute.xlu0 %4545
  %4549 = vset.pattern.permute.xlu0 0
  %4550 = vperm.xlu0 %4549, %v4328
  %v4551 = vpop.permute.xlu0 %4550
  %4554 = vset.pattern.permute.xlu0 0
  %4555 = vperm.xlu0 %4554, %v4329
  %v4556 = vpop.permute.xlu0 %4555
  %4559 = vset.pattern.permute.xlu0 0
  %4560 = vperm.xlu0 %4559, %v4330
  %v4561 = vpop.permute.xlu0 %4560
  %4564 = vset.pattern.permute.xlu0 0
  %4565 = vperm.xlu0 %4564, %v4331
  %v4566 = vpop.permute.xlu0 %4565
  %4569 = vset.pattern.permute.xlu0 0
  %4570 = vperm.xlu0 %4569, %v4332
  %v4571 = vpop.permute.xlu0 %4570
  %4574 = vset.pattern.permute.xlu0 0
  %4575 = vperm.xlu0 %4574, %v4333
  %v4576 = vpop.permute.xlu0 %4575
  %4579 = vset.pattern.permute.xlu0 0
  %4580 = vperm.xlu0 %4579, %v4334
  %v4581 = vpop.permute.xlu0 %4580
  %4584 = vset.pattern.permute.xlu0 0
  %4585 = vperm.xlu0 %4584, %v4335
  %v4586 = vpop.permute.xlu0 %4585
  %4589 = vset.pattern.permute.xlu0 0
  %4590 = vperm.xlu0 %4589, %v4336
  %v4591 = vpop.permute.xlu0 %4590
  %4594 = vset.pattern.permute.xlu0 0
  %4595 = vperm.xlu0 %4594, %v4337
  %v4596 = vpop.permute.xlu0 %4595
  %4599 = vset.pattern.permute.xlu0 0
  %4600 = vperm.xlu0 %4599, %v4338
  %v4601 = vpop.permute.xlu0 %4600
  %v4603 = vadd.f32 %v4459, %v4486
  %v4604 = vadd.f32 %v4460, %v4491
  %v4605 = vadd.f32 %v4461, %v4496
  %v4606 = vadd.f32 %v4462, %v4501
  %v4607 = vadd.f32 %v4463, %v4506
  %v4608 = vadd.f32 %v4464, %v4511
  %v4609 = vadd.f32 %v4465, %v4516
  %v4610 = vadd.f32 %v4466, %v4521
  %v4611 = vadd.f32 %v4467, %v4526
  %v4612 = vadd.f32 %v4468, %v4531
  %v4613 = vadd.f32 %v4469, %v4536
  %v4614 = vadd.f32 %v4470, %v4541
  %v4615 = vadd.f32 %v4471, %v4546
  %v4616 = vadd.f32 %v4472, %v4551
  %v4617 = vadd.f32 %v4473, %v4556
  %v4618 = vadd.f32 %v4474, %v4561
  %v4619 = vadd.f32 %v4475, %v4566
  %v4620 = vadd.f32 %v4476, %v4571
  %v4621 = vadd.f32 %v4477, %v4576
  %v4622 = vadd.f32 %v4478, %v4581
  %v4623 = vadd.f32 %v4479, %v4586
  %v4624 = vadd.f32 %v4480, %v4591
  %v4625 = vadd.f32 %v4481, %v4596
  %v4626 = vadd.f32 %v4482, %v4601
  %4627 = vst.msk [vmem:[%s5] sm:$0xff] %vm3930, %v4603
  %4628 = vst.msk [vmem:[%s5 + $0x8] sm:$0xff] %vm3930, %v4604
  %4629 = vst.msk [vmem:[%s5 + $0x10] sm:$0xff] %vm3930, %v4605
  %4630 = vst.msk [vmem:[%s5 + $0x18] sm:$0xff] %vm3930, %v4606
  %4631 = vst.msk [vmem:[%s5 + $0x20] sm:$0xff] %vm3930, %v4607
  %4632 = vst.msk [vmem:[%s5 + $0x28] sm:$0xff] %vm3930, %v4608
  %4633 = vst.msk [vmem:[%s5 + $0x30] sm:$0xff] %vm3930, %v4609
  %4634 = vst.msk [vmem:[%s5 + $0x38] sm:$0xff] %vm3930, %v4610
  %4635 = vst.msk [vmem:[%s5 + $0x40] sm:$0xff] %vm3930, %v4611
  %4636 = vst.msk [vmem:[%s5 + $0x48] sm:$0xff] %vm3930, %v4612
  %4637 = vst.msk [vmem:[%s5 + $0x50] sm:$0xff] %vm3930, %v4613
  %4638 = vst.msk [vmem:[%s5 + $0x58] sm:$0xff] %vm3930, %v4614
  %4639 = vst.msk [vmem:[%s5 + $0x60] sm:$0xff] %vm3930, %v4615
  %4640 = vst.msk [vmem:[%s5 + $0x68] sm:$0xff] %vm3930, %v4616
  %4641 = vst.msk [vmem:[%s5 + $0x70] sm:$0xff] %vm3930, %v4617
  %4642 = vst.msk [vmem:[%s5 + $0x78] sm:$0xff] %vm3930, %v4618
  %4643 = vst.msk [vmem:[%s5 + $0x80] sm:$0xff] %vm3930, %v4619
  %4644 = vst.msk [vmem:[%s5 + $0x88] sm:$0xff] %vm3930, %v4620
  %4645 = vst.msk [vmem:[%s5 + $0x90] sm:$0xff] %vm3930, %v4621
  %4646 = vst.msk [vmem:[%s5 + $0x98] sm:$0xff] %vm3930, %v4622
  %4647 = vst.msk [vmem:[%s5 + $0xa0] sm:$0xff] %vm3930, %v4623
  %4648 = vst.msk [vmem:[%s5 + $0xa8] sm:$0xff] %vm3930, %v4624
  %4649 = vst.msk [vmem:[%s5 + $0xb0] sm:$0xff] %vm3930, %v4625
  %4650 = vst.msk [vmem:[%s5 + $0xb8] sm:$0xff] %vm3930, %v4626
  // Predicated region
  $region22: #{fused_forward.1} parent=0 // pred_check
    _
  $region23: #{fused_forward.1} parent=0 // pred_check_branch
    %4652 = sbr.rel (0) target = $region25
  $region24: #{fused_forward.1} parent=0 // pred_region
    _
  $region25: #{fused_forward.1} parent=0 // pred_fallthru
    _
  // Predicated region
  $region26: #{fused_forward.1} parent=0 // pred_check
    _
  $region27: #{fused_forward.1} parent=0 // pred_check_branch
    %4654 = sbr.rel (0) target = $region29
  $region28: #{fused_forward.1} parent=0 // pred_region
    _
  $region29: #{fused_forward.1} parent=0 // pred_fallthru
    _

</llo_original>
